<compile_context>
chip_gen: v7x
topology: tpu7x:2x2x1
jax: 0.10.0
libtpu: 0.0.40
codegen_flags: <defaults>
</compile_context>

<pallas_src>
import jax
import jax.numpy as jnp
from jax.experimental import pallas as pl
from jax.experimental.pallas import tpu as pltpu

# ---- synthetic config (c.* from the original repo) -------------------------
GEN_SEM_DIM = 4
G_DIM = GEN_SEM_DIM * 16          # 64
Z_DIM = 8
COND_DIM = 8
IN_DIM = Z_DIM + COND_DIM         # 16
BN_EPS = 1e-5

MAX_LANE_TILE = 2048              # cap on the pixel (lane) tile


# ---------------------------- Pallas kernels --------------------------------
def _fc_glu_kernel(x_ref, w_ref, b_ref, o_ref):
    # Linear(no bias) + BN1d(folded) + GLU, value/gate stacked along lanes.
    # x: (B, IN_DIM) bf16; w: (IN_DIM, 2F) bf16; b: (1, 2F) f32; o: (B, F)
    acc = jnp.dot(x_ref[...], w_ref[...],
                  preferred_element_type=jnp.float32) + b_ref[...]
    half = acc.shape[1] // 2                       # 1024, multiple of 128
    o_ref[...] = (acc[:, :half] * jax.nn.sigmoid(acc[:, half:])).astype(o_ref.dtype)


def _conv_glu_kernel(p_ref, w_ref, b_ref, o_ref):
    # Sub-pixel (upsample + 3x3 conv) + BN2d(folded) + GLU as ONE stacked matmul.
    # p: (9*Cin, TN) bf16  low-res im2col patches (channels on sublanes, pixels on lanes)
    # w: (8*Cout, 9*Cin) bf16  rows = [4 phases x Cout value | 4 phases x Cout gate]
    # b: (8*Cout, 1) f32;  o: (4*Cout, TN)
    acc = jnp.dot(w_ref[...], p_ref[...],
                  preferred_element_type=jnp.float32) + b_ref[...]
    half = acc.shape[0] // 2                       # 4*Cout, multiple of 8
    o_ref[...] = (acc[:half] * jax.nn.sigmoid(acc[half:])).astype(o_ref.dtype)


# ------------------------------ wrappers -------------------------------------
def _round_up(x, m):
    return ((x + m - 1) // m) * m


def _pick_lane_tile(n):
    """Pixel(lane)-axis tile and padded extent.

    Tiles are multiples of 128 and as large as reasonable (single-TC v5e/v6e)
    while giving >=2 grid blocks once the problem is big enough (both v7x
    TensorCores get work). The padded extent is an exact multiple of the tile.
    """
    n128 = _round_up(n, 128)
    if n128 <= 256:
        tn = n128
    else:
        tn = min(MAX_LANE_TILE, _round_up(n128 // 2, 128))
    n_pad = _round_up(n128, tn)
    return tn, n_pad


def fc_glu(x, w, b):
    bsz = x.shape[0]
    f = w.shape[1] // 2
    return pl.pallas_call(
        _fc_glu_kernel,
        out_shape=jax.ShapeDtypeStruct((bsz, f), jnp.bfloat16),
        in_specs=[pl.BlockSpec(memory_space=pltpu.MemorySpace.VMEM)] * 3,
        out_specs=pl.BlockSpec(memory_space=pltpu.MemorySpace.VMEM),
    )(x, w, b)


def conv_glu_subpixel(patches, w, b, out_dtype):
    """One upsample-conv-BN-GLU stage as a single stacked matmul kernel.

    patches: (9*Cin, N) bf16 im2col of the LOW-RES activation (N = B*H*W).
    w:       (8*Cout, 9*Cin) bf16  (4 phases x value | 4 phases x gate).
    b:       (8*Cout, 1) f32.
    Returns  (4*Cout, N) out_dtype with rows ordered (phase = 2a+b, cout).
    """
    k, n = patches.shape
    rows_out = w.shape[0] // 2
    tn, n_pad = _pick_lane_tile(n)
    if n_pad != n:
        patches = jnp.pad(patches, ((0, 0), (0, n_pad - n)))
    out = pl.pallas_call(
        _conv_glu_kernel,
        out_shape=jax.ShapeDtypeStruct((rows_out, n_pad), out_dtype),
        grid=(n_pad // tn,),
        in_specs=[
            pl.BlockSpec((k, tn), lambda i: (0, i)),
            pl.BlockSpec(w.shape, lambda i: (0, 0)),
            pl.BlockSpec(b.shape, lambda i: (0, 0)),
        ],
        out_specs=pl.BlockSpec((rows_out, tn), lambda i: (0, i)),
        compiler_params=pltpu.CompilerParams(dimension_semantics=("parallel",)),
    )(patches, w, b)
    return out[:, :n] if n_pad != n else out


# ------------------------------ XLA glue --------------------------------------
def _im2col3x3(x):
    """(Cin, B, H, W) bf16 -> (9*Cin, B*H*W) bf16 zero-padded 3x3 patches.

    Taps concatenated along the channel (sublane / matmul-K) axis, tap-major.
    Runs on the LOW-RES map (4x smaller than the old upsampled im2col).
    """
    # TODO(synk): realize the taps in-kernel (pltpu.roll on a flattened padded
    #             map) and fuse all 5 stages into a single pallas_call; both
    #             need in-kernel pad/interleave and are left as XLA glue here.
    cin, b, h, w = x.shape
    pad = jnp.pad(x, ((0, 0), (0, 0), (1, 1), (1, 1)))
    taps = [pad[:, :, dy:dy + h, dx:dx + w]
            for dy in range(3) for dx in range(3)]
    return jnp.concatenate(taps, axis=0).reshape(9 * cin, b * h * w)


def _pixel_shuffle2(out, cout, b, h, w):
    """(4*Cout, B*H*W) with rows (phase=2a+b, cout) -> (Cout, B, 2H, 2W)."""
    o = out.reshape(2, 2, cout, b, h, w)
    return jnp.transpose(o, (2, 3, 4, 0, 5, 1)).reshape(cout, b, 2 * h, 2 * w)


# --------------------------- parameter setup ---------------------------------
def _bn_fold(key, n):
    # BatchNorm evaluated in inference mode (running stats folded to affine).
    kg, kb, km, kv = jax.random.split(key, 4)
    gamma = 1.0 + 0.1 * jax.random.normal(kg, (n,), jnp.float32)
    beta = 0.1 * jax.random.normal(kb, (n,), jnp.float32)
    mean = 0.1 * jax.random.normal(km, (n,), jnp.float32)
    var = jnp.abs(jax.random.normal(kv, (n,), jnp.float32)) + 0.5
    scale = gamma / jnp.sqrt(var + BN_EPS)
    bias = beta - mean * scale
    return scale, bias


def _subpixel_fold(w):
    """Fold nearest-2x-upsample into the 3x3 conv weights.

    w: (O, I, 3, 3) conv weight (BN scale already folded).
    Returns we[a, b, o, i, ry, rx]: effective 3x3 weights acting on the LOW-RES
    map for output phase (a, b) (output pixel (2i+a, 2j+b)); ry/rx are the
    low-res neighbor offsets {-1, 0, +1} shifted by +1.
    """
    def off(k, phase):
        return (-1 if k == 0 else 0) if phase == 0 else (1 if k == 2 else 0)

    o_dim, i_dim = w.shape[:2]
    we = jnp.zeros((2, 2, o_dim, i_dim, 3, 3), w.dtype)
    for a in range(2):
        for b in range(2):
            for ky in range(3):
                for kx in range(3):
                    we = we.at[a, b, :, :, off(ky, a) + 1, off(kx, b) + 1].add(
                        w[:, :, ky, kx])
    return we


def init_params(key):
    keys = jax.random.split(key, 12)
    params = {}

    # fc: nn.Linear(IN_DIM, 2048, bias=False) + BN1d + GLU.
    f2 = G_DIM * 4 * 4 * 2                                    # 2048
    w_fc = 0.05 * jax.random.normal(keys[0], (f2, IN_DIM), jnp.float32)
    s, bias = _bn_fold(keys[1], f2)
    params["fc_w"] = jnp.transpose(w_fc * s[:, None]).astype(jnp.bfloat16)  # (16, 2048)
    params["fc_b"] = bias[None, :]                                          # (1, 2048) f32

    chans = [G_DIM, G_DIM // 2, G_DIM // 4, G_DIM // 8, G_DIM // 16]
    for i in range(4):
        cin, cout = chans[i], chans[i + 1]
        c2 = 2 * cout
        # nn.Conv2d(cin, c2, 3, 1, 1, bias=False): weight (c2, cin, 3, 3)
        w = 0.05 * jax.random.normal(keys[2 + 2 * i], (c2, cin, 3, 3), jnp.float32)
        s, bias = _bn_fold(keys[3 + 2 * i], c2)
        we = _subpixel_fold(w * s[:, None, None, None])        # (2,2,c2,cin,3,3)
        # matmul column index = tap*Cin + cin  with tap = (ry+1)*3 + (rx+1),
        # matching the im2col tap-major row layout.
        wm = jnp.transpose(we, (0, 1, 2, 4, 5, 3)).reshape(4, c2, 9 * cin)
        w_val = wm[:, :cout, :].reshape(4 * cout, 9 * cin)     # GLU "value" half
        w_gate = wm[:, cout:, :].reshape(4 * cout, 9 * cin)    # GLU "gate" half
        params[f"up{i+1}_w"] = jnp.concatenate([w_val, w_gate],
                                               axis=0).astype(jnp.bfloat16)
        params[f"up{i+1}_b"] = jnp.concatenate(
            [jnp.tile(bias[:cout], 4), jnp.tile(bias[cout:], 4)])[:, None]
    return params


# ------------------------------ forward --------------------------------------
@jax.jit
def init_stage_g(params, z, text_cond_aug_sample):
    # torch.cat((text_cond_aug_sample, z), 1)
    x = jnp.concatenate([text_cond_aug_sample, z], axis=1).astype(jnp.bfloat16)
    bsz = x.shape[0]
    fc = fc_glu(x, params["fc_w"], params["fc_b"])             # (B, 1024) bf16
    # fc.view(-1, g_dim, 4, 4) -> channels-first / batch-second kernel layout
    h = jnp.transpose(fc.reshape(bsz, G_DIM, 4, 4), (1, 0, 2, 3))  # (64, B, 4, 4)
    for i in range(1, 5):
        _, b, hh, ww = h.shape
        patches = _im2col3x3(h)                                # (9*Cin, B*hh*ww)
        w = params[f"up{i}_w"]
        cout = w.shape[0] // 8
        out_dtype = jnp.float32 if i == 4 else jnp.bfloat16
        out = conv_glu_subpixel(patches, w, params[f"up{i}_b"], out_dtype)
        h = _pixel_shuffle2(out, cout, b, hh, ww)              # (Cout, B, 2hh, 2ww)
    return jnp.transpose(h, (1, 0, 2, 3))                      # NCHW: (B, G_DIM//16, 64, 64)


if __name__ == "__main__":
    key = jax.random.PRNGKey(0)
    kp, kz, kc = jax.random.split(key, 3)
    B = 2
    params = init_params(kp)
    z = jax.random.normal(kz, (B, Z_DIM), jnp.float32)
    text_cond_aug_sample = jax.random.normal(kc, (B, COND_DIM), jnp.float32)

    out = init_stage_g(params, z, text_cond_aug_sample)
    out = jax.block_until_ready(out)
    assert out.shape == (B, G_DIM // 16, 64, 64), out.shape
    assert out.dtype == jnp.float32, out.dtype
    assert bool(jnp.all(jnp.isfinite(out)))
    print("KERNEL_OK")
</pallas_src>

<mosaic_0001>
module attributes {stable_mosaic.version = 11 : i64} {
  func.func @_fc_glu_kernel(%arg0: memref<2x16xbf16, #tpu.memory_space<vmem>>, %arg1: memref<16x2048xbf16, #tpu.memory_space<vmem>>, %arg2: memref<1x2048xf32, #tpu.memory_space<vmem>>, %arg3: memref<2x1024xbf16, #tpu.memory_space<vmem>>) attributes {dimension_semantics = [], scalar_prefetch = 0 : i64, scratch_operands = 0 : i64, tpu.core_type = #tpu.core_type<tc>} {
    %c0 = arith.constant 0 : index
    %c0_0 = arith.constant 0 : index
    %0 = vector.load %arg0[%c0, %c0_0] : memref<2x16xbf16, #tpu.memory_space<vmem>>, vector<2x16xbf16>
    %c0_1 = arith.constant 0 : index
    %c0_2 = arith.constant 0 : index
    %1 = vector.load %arg1[%c0_1, %c0_2] : memref<16x2048xbf16, #tpu.memory_space<vmem>>, vector<16x2048xbf16>
    %cst = arith.constant dense<0.000000e+00> : vector<2x2048xf32>
    %2 = tpu.matmul %0, %1, %cst {dimension_numbers = #tpu.dot_dimension_numbers<[1], [0], [0], [1], [0, 0, 1, 1], [], []>} : vector<2x16xbf16>, vector<16x2048xbf16>, vector<2x2048xf32> -> vector<2x2048xf32>
    %c0_3 = arith.constant 0 : index
    %c0_4 = arith.constant 0 : index
    %3 = vector.load %arg2[%c0_3, %c0_4] : memref<1x2048xf32, #tpu.memory_space<vmem>>, vector<1x2048xf32>
    %4 = vector.broadcast %3 : vector<1x2048xf32> to vector<2x2048xf32>
    %5 = arith.addf %2, %4 : vector<2x2048xf32>
    %6 = vector.extract_strided_slice %5 {offsets = [0, 0], sizes = [2, 1024], strides = [1, 1]} : vector<2x2048xf32> to vector<2x1024xf32>
    %7 = vector.extract_strided_slice %5 {offsets = [0, 1024], sizes = [2, 1024], strides = [1, 1]} : vector<2x2048xf32> to vector<2x1024xf32>
    %8 = arith.negf %7 : vector<2x1024xf32>
    %9 = math.exp %8 : vector<2x1024xf32>
    %cst_5 = arith.constant 1.000000e+00 : f32
    %10 = vector.broadcast %cst_5 : f32 to vector<2x1024xf32>
    %11 = arith.addf %10, %9 : vector<2x1024xf32>
    %12 = arith.divf %10, %11 : vector<2x1024xf32>
    %13 = arith.mulf %6, %12 : vector<2x1024xf32>
    %14 = arith.truncf %13 : vector<2x1024xf32> to vector<2x1024xbf16>
    %c0_6 = arith.constant 0 : index
    %c0_7 = arith.constant 0 : index
    %15 = vector.load %arg3[%c0_6, %c0_7] : memref<2x1024xbf16, #tpu.memory_space<vmem>>, vector<2x1024xbf16>
    tpu.vector_store %arg3[%c0_6, %c0_7], %14 {strides = array<i32>} : memref<2x1024xbf16, #tpu.memory_space<vmem>>, vector<2x1024xbf16>,
    return
  }
}

module attributes {stable_mosaic.version = 11 : i64} {
  func.func @_conv_glu_kernel(%arg0: i32, %arg1: memref<576x128xbf16, #tpu.memory_space<vmem>>, %arg2: memref<256x576xbf16, #tpu.memory_space<vmem>>, %arg3: memref<256x1xf32, #tpu.memory_space<vmem>>, %arg4: memref<128x128xbf16, #tpu.memory_space<vmem>>) attributes {dimension_semantics = [#tpu.dimension_semantics<parallel>], iteration_bounds = array<i64: 1>, scalar_prefetch = 0 : i64, scratch_operands = 0 : i64, tpu.core_type = #tpu.core_type<tc>, window_params = [{transform_indices = @transform_0, window_bounds = array<i64: 576, 128>}, {pipeline_mode = #tpu.pipeline_mode<synchronous>, transform_indices = @transform_1, window_bounds = array<i64: 256, 576>}, {pipeline_mode = #tpu.pipeline_mode<synchronous>, transform_indices = @transform_2, window_bounds = array<i64: 256, 1>}, {transform_indices = @transform_3, window_bounds = array<i64: 128, 128>}]} {
    %c0 = arith.constant 0 : index
    %c0_0 = arith.constant 0 : index
    %0 = vector.load %arg2[%c0, %c0_0] : memref<256x576xbf16, #tpu.memory_space<vmem>>, vector<256x576xbf16>
    %c0_1 = arith.constant 0 : index
    %c0_2 = arith.constant 0 : index
    %1 = vector.load %arg1[%c0_1, %c0_2] : memref<576x128xbf16, #tpu.memory_space<vmem>>, vector<576x128xbf16>
    %cst = arith.constant dense<0.000000e+00> : vector<256x128xf32>
    %2 = tpu.matmul %0, %1, %cst {dimension_numbers = #tpu.dot_dimension_numbers<[1], [0], [0], [1], [0, 0, 1, 1], [], []>} : vector<256x576xbf16>, vector<576x128xbf16>, vector<256x128xf32> -> vector<256x128xf32>
    %c0_3 = arith.constant 0 : index
    %c0_4 = arith.constant 0 : index
    %3 = vector.load %arg3[%c0_3, %c0_4] : memref<256x1xf32, #tpu.memory_space<vmem>>, vector<256x1xf32>
    %4 = vector.broadcast %3 : vector<256x1xf32> to vector<256x128xf32>
    %5 = arith.addf %2, %4 : vector<256x128xf32>
    %6 = vector.extract_strided_slice %5 {offsets = [0, 0], sizes = [128, 128], strides = [1, 1]} : vector<256x128xf32> to vector<128x128xf32>
    %7 = vector.extract_strided_slice %5 {offsets = [128, 0], sizes = [128, 128], strides = [1, 1]} : vector<256x128xf32> to vector<128x128xf32>
    %8 = arith.negf %7 : vector<128x128xf32>
    %9 = math.exp %8 : vector<128x128xf32>
    %cst_5 = arith.constant 1.000000e+00 : f32
    %10 = vector.broadcast %cst_5 : f32 to vector<128x128xf32>
    %11 = arith.addf %10, %9 : vector<128x128xf32>
    %12 = arith.divf %10, %11 : vector<128x128xf32>
    %13 = arith.mulf %6, %12 : vector<128x128xf32>
    %14 = arith.truncf %13 : vector<128x128xf32> to vector<128x128xbf16>
    %c0_6 = arith.constant 0 : index
    %c0_7 = arith.constant 0 : index
    %15 = vector.load %arg4[%c0_6, %c0_7] : memref<128x128xbf16, #tpu.memory_space<vmem>>, vector<128x128xbf16>
    tpu.vector_store %arg4[%c0_6, %c0_7], %14 {strides = array<i32>} : memref<128x128xbf16, #tpu.memory_space<vmem>>, vector<128x128xbf16>,
    return
  }
  func.func @transform_0(%arg0: i32) -> (i32, i32) {
    %c0_i32 = arith.constant 0 : i32
    %c0_i32_0 = arith.constant 0 : i32
    return %c0_i32, %arg0 : i32, i32
  }
  func.func @transform_1(%arg0: i32) -> (i32, i32) {
    %c0_i32 = arith.constant 0 : i32
    %c0_i32_0 = arith.constant 0 : i32
    %c0_i32_1 = arith.constant 0 : i32
    return %c0_i32, %c0_i32_0 : i32, i32
  }
  func.func @transform_2(%arg0: i32) -> (i32, i32) {
    %c0_i32 = arith.constant 0 : i32
    %c0_i32_0 = arith.constant 0 : i32
    %c0_i32_1 = arith.constant 0 : i32
    return %c0_i32, %c0_i32_0 : i32, i32
  }
  func.func @transform_3(%arg0: i32) -> (i32, i32) {
    %c0_i32 = arith.constant 0 : i32
    %c0_i32_0 = arith.constant 0 : i32
    return %c0_i32, %arg0 : i32, i32
  }
}

module attributes {stable_mosaic.version = 11 : i64} {
  func.func @_conv_glu_kernel(%arg0: i32, %arg1: memref<288x128xbf16, #tpu.memory_space<vmem>>, %arg2: memref<128x288xbf16, #tpu.memory_space<vmem>>, %arg3: memref<128x1xf32, #tpu.memory_space<vmem>>, %arg4: memref<64x128xbf16, #tpu.memory_space<vmem>>) attributes {dimension_semantics = [#tpu.dimension_semantics<parallel>], iteration_bounds = array<i64: 1>, scalar_prefetch = 0 : i64, scratch_operands = 0 : i64, tpu.core_type = #tpu.core_type<tc>, window_params = [{transform_indices = @transform_0, window_bounds = array<i64: 288, 128>}, {pipeline_mode = #tpu.pipeline_mode<synchronous>, transform_indices = @transform_1, window_bounds = array<i64: 128, 288>}, {pipeline_mode = #tpu.pipeline_mode<synchronous>, transform_indices = @transform_2, window_bounds = array<i64: 128, 1>}, {transform_indices = @transform_3, window_bounds = array<i64: 64, 128>}]} {
    %c0 = arith.constant 0 : index
    %c0_0 = arith.constant 0 : index
    %0 = vector.load %arg2[%c0, %c0_0] : memref<128x288xbf16, #tpu.memory_space<vmem>>, vector<128x288xbf16>
    %c0_1 = arith.constant 0 : index
    %c0_2 = arith.constant 0 : index
    %1 = vector.load %arg1[%c0_1, %c0_2] : memref<288x128xbf16, #tpu.memory_space<vmem>>, vector<288x128xbf16>
    %cst = arith.constant dense<0.000000e+00> : vector<128x128xf32>
    %2 = tpu.matmul %0, %1, %cst {dimension_numbers = #tpu.dot_dimension_numbers<[1], [0], [0], [1], [0, 0, 1, 1], [], []>} : vector<128x288xbf16>, vector<288x128xbf16>, vector<128x128xf32> -> vector<128x128xf32>
    %c0_3 = arith.constant 0 : index
    %c0_4 = arith.constant 0 : index
    %3 = vector.load %arg3[%c0_3, %c0_4] : memref<128x1xf32, #tpu.memory_space<vmem>>, vector<128x1xf32>
    %4 = vector.broadcast %3 : vector<128x1xf32> to vector<128x128xf32>
    %5 = arith.addf %2, %4 : vector<128x128xf32>
    %6 = vector.extract_strided_slice %5 {offsets = [0, 0], sizes = [64, 128], strides = [1, 1]} : vector<128x128xf32> to vector<64x128xf32>
    %7 = vector.extract_strided_slice %5 {offsets = [64, 0], sizes = [64, 128], strides = [1, 1]} : vector<128x128xf32> to vector<64x128xf32>
    %8 = arith.negf %7 : vector<64x128xf32>
    %9 = math.exp %8 : vector<64x128xf32>
    %cst_5 = arith.constant 1.000000e+00 : f32
    %10 = vector.broadcast %cst_5 : f32 to vector<64x128xf32>
    %11 = arith.addf %10, %9 : vector<64x128xf32>
    %12 = arith.divf %10, %11 : vector<64x128xf32>
    %13 = arith.mulf %6, %12 : vector<64x128xf32>
    %14 = arith.truncf %13 : vector<64x128xf32> to vector<64x128xbf16>
    %c0_6 = arith.constant 0 : index
    %c0_7 = arith.constant 0 : index
    %15 = vector.load %arg4[%c0_6, %c0_7] : memref<64x128xbf16, #tpu.memory_space<vmem>>, vector<64x128xbf16>
    tpu.vector_store %arg4[%c0_6, %c0_7], %14 {strides = array<i32>} : memref<64x128xbf16, #tpu.memory_space<vmem>>, vector<64x128xbf16>,
    return
  }
  func.func @transform_0(%arg0: i32) -> (i32, i32) {
    %c0_i32 = arith.constant 0 : i32
    %c0_i32_0 = arith.constant 0 : i32
    return %c0_i32, %arg0 : i32, i32
  }
  func.func @transform_1(%arg0: i32) -> (i32, i32) {
    %c0_i32 = arith.constant 0 : i32
    %c0_i32_0 = arith.constant 0 : i32
    %c0_i32_1 = arith.constant 0 : i32
    return %c0_i32, %c0_i32_0 : i32, i32
  }
  func.func @transform_2(%arg0: i32) -> (i32, i32) {
    %c0_i32 = arith.constant 0 : i32
    %c0_i32_0 = arith.constant 0 : i32
    %c0_i32_1 = arith.constant 0 : i32
    return %c0_i32, %c0_i32_0 : i32, i32
  }
  func.func @transform_3(%arg0: i32) -> (i32, i32) {
    %c0_i32 = arith.constant 0 : i32
    %c0_i32_0 = arith.constant 0 : i32
    return %c0_i32, %arg0 : i32, i32
  }
}

module attributes {stable_mosaic.version = 11 : i64} {
  func.func @_conv_glu_kernel(%arg0: i32, %arg1: memref<144x256xbf16, #tpu.memory_space<vmem>>, %arg2: memref<64x144xbf16, #tpu.memory_space<vmem>>, %arg3: memref<64x1xf32, #tpu.memory_space<vmem>>, %arg4: memref<32x256xbf16, #tpu.memory_space<vmem>>) attributes {dimension_semantics = [#tpu.dimension_semantics<parallel>], iteration_bounds = array<i64: 2>, scalar_prefetch = 0 : i64, scratch_operands = 0 : i64, tpu.core_type = #tpu.core_type<tc>, window_params = [{transform_indices = @transform_0, window_bounds = array<i64: 144, 256>}, {pipeline_mode = #tpu.pipeline_mode<synchronous>, transform_indices = @transform_1, window_bounds = array<i64: 64, 144>}, {pipeline_mode = #tpu.pipeline_mode<synchronous>, transform_indices = @transform_2, window_bounds = array<i64: 64, 1>}, {transform_indices = @transform_3, window_bounds = array<i64: 32, 256>}]} {
    %c0 = arith.constant 0 : index
    %c0_0 = arith.constant 0 : index
    %0 = vector.load %arg2[%c0, %c0_0] : memref<64x144xbf16, #tpu.memory_space<vmem>>, vector<64x144xbf16>
    %c0_1 = arith.constant 0 : index
    %c0_2 = arith.constant 0 : index
    %1 = vector.load %arg1[%c0_1, %c0_2] : memref<144x256xbf16, #tpu.memory_space<vmem>>, vector<144x256xbf16>
    %cst = arith.constant dense<0.000000e+00> : vector<64x256xf32>
    %2 = tpu.matmul %0, %1, %cst {dimension_numbers = #tpu.dot_dimension_numbers<[1], [0], [0], [1], [0, 0, 1, 1], [], []>} : vector<64x144xbf16>, vector<144x256xbf16>, vector<64x256xf32> -> vector<64x256xf32>
    %c0_3 = arith.constant 0 : index
    %c0_4 = arith.constant 0 : index
    %3 = vector.load %arg3[%c0_3, %c0_4] : memref<64x1xf32, #tpu.memory_space<vmem>>, vector<64x1xf32>
    %4 = vector.broadcast %3 : vector<64x1xf32> to vector<64x256xf32>
    %5 = arith.addf %2, %4 : vector<64x256xf32>
    %6 = vector.extract_strided_slice %5 {offsets = [0, 0], sizes = [32, 256], strides = [1, 1]} : vector<64x256xf32> to vector<32x256xf32>
    %7 = vector.extract_strided_slice %5 {offsets = [32, 0], sizes = [32, 256], strides = [1, 1]} : vector<64x256xf32> to vector<32x256xf32>
    %8 = arith.negf %7 : vector<32x256xf32>
    %9 = math.exp %8 : vector<32x256xf32>
    %cst_5 = arith.constant 1.000000e+00 : f32
    %10 = vector.broadcast %cst_5 : f32 to vector<32x256xf32>
    %11 = arith.addf %10, %9 : vector<32x256xf32>
    %12 = arith.divf %10, %11 : vector<32x256xf32>
    %13 = arith.mulf %6, %12 : vector<32x256xf32>
    %14 = arith.truncf %13 : vector<32x256xf32> to vector<32x256xbf16>
    %c0_6 = arith.constant 0 : index
    %c0_7 = arith.constant 0 : index
    %15 = vector.load %arg4[%c0_6, %c0_7] : memref<32x256xbf16, #tpu.memory_space<vmem>>, vector<32x256xbf16>
    tpu.vector_store %arg4[%c0_6, %c0_7], %14 {strides = array<i32>} : memref<32x256xbf16, #tpu.memory_space<vmem>>, vector<32x256xbf16>,
    return
  }
  func.func @transform_0(%arg0: i32) -> (i32, i32) {
    %c0_i32 = arith.constant 0 : i32
    %c0_i32_0 = arith.constant 0 : i32
    return %c0_i32, %arg0 : i32, i32
  }
  func.func @transform_1(%arg0: i32) -> (i32, i32) {
    %c0_i32 = arith.constant 0 : i32
    %c0_i32_0 = arith.constant 0 : i32
    %c0_i32_1 = arith.constant 0 : i32
    return %c0_i32, %c0_i32_0 : i32, i32
  }
  func.func @transform_2(%arg0: i32) -> (i32, i32) {
    %c0_i32 = arith.constant 0 : i32
    %c0_i32_0 = arith.constant 0 : i32
    %c0_i32_1 = arith.constant 0 : i32
    return %c0_i32, %c0_i32_0 : i32, i32
  }
  func.func @transform_3(%arg0: i32) -> (i32, i32) {
    %c0_i32 = arith.constant 0 : i32
    %c0_i32_0 = arith.constant 0 : i32
    return %c0_i32, %arg0 : i32, i32
  }
}

module attributes {stable_mosaic.version = 11 : i64} {
  func.func @_conv_glu_kernel(%arg0: i32, %arg1: memref<72x1024xbf16, #tpu.memory_space<vmem>>, %arg2: memref<32x72xbf16, #tpu.memory_space<vmem>>, %arg3: memref<32x1xf32, #tpu.memory_space<vmem>>, %arg4: memref<16x1024xf32, #tpu.memory_space<vmem>>) attributes {dimension_semantics = [#tpu.dimension_semantics<parallel>], iteration_bounds = array<i64: 2>, scalar_prefetch = 0 : i64, scratch_operands = 0 : i64, tpu.core_type = #tpu.core_type<tc>, window_params = [{transform_indices = @transform_0, window_bounds = array<i64: 72, 1024>}, {pipeline_mode = #tpu.pipeline_mode<synchronous>, transform_indices = @transform_1, window_bounds = array<i64: 32, 72>}, {pipeline_mode = #tpu.pipeline_mode<synchronous>, transform_indices = @transform_2, window_bounds = array<i64: 32, 1>}, {transform_indices = @transform_3, window_bounds = array<i64: 16, 1024>}]} {
    %c0 = arith.constant 0 : index
    %c0_0 = arith.constant 0 : index
    %0 = vector.load %arg2[%c0, %c0_0] : memref<32x72xbf16, #tpu.memory_space<vmem>>, vector<32x72xbf16>
    %c0_1 = arith.constant 0 : index
    %c0_2 = arith.constant 0 : index
    %1 = vector.load %arg1[%c0_1, %c0_2] : memref<72x1024xbf16, #tpu.memory_space<vmem>>, vector<72x1024xbf16>
    %cst = arith.constant dense<0.000000e+00> : vector<32x1024xf32>
    %2 = tpu.matmul %0, %1, %cst {dimension_numbers = #tpu.dot_dimension_numbers<[1], [0], [0], [1], [0, 0, 1, 1], [], []>} : vector<32x72xbf16>, vector<72x1024xbf16>, vector<32x1024xf32> -> vector<32x1024xf32>
    %c0_3 = arith.constant 0 : index
    %c0_4 = arith.constant 0 : index
    %3 = vector.load %arg3[%c0_3, %c0_4] : memref<32x1xf32, #tpu.memory_space<vmem>>, vector<32x1xf32>
    %4 = vector.broadcast %3 : vector<32x1xf32> to vector<32x1024xf32>
    %5 = arith.addf %2, %4 : vector<32x1024xf32>
    %6 = vector.extract_strided_slice %5 {offsets = [0, 0], sizes = [16, 1024], strides = [1, 1]} : vector<32x1024xf32> to vector<16x1024xf32>
    %7 = vector.extract_strided_slice %5 {offsets = [16, 0], sizes = [16, 1024], strides = [1, 1]} : vector<32x1024xf32> to vector<16x1024xf32>
    %8 = arith.negf %7 : vector<16x1024xf32>
    %9 = math.exp %8 : vector<16x1024xf32>
    %cst_5 = arith.constant 1.000000e+00 : f32
    %10 = vector.broadcast %cst_5 : f32 to vector<16x1024xf32>
    %11 = arith.addf %10, %9 : vector<16x1024xf32>
    %12 = arith.divf %10, %11 : vector<16x1024xf32>
    %13 = arith.mulf %6, %12 : vector<16x1024xf32>
    %c0_6 = arith.constant 0 : index
    %c0_7 = arith.constant 0 : index
    %14 = vector.load %arg4[%c0_6, %c0_7] : memref<16x1024xf32, #tpu.memory_space<vmem>>, vector<16x1024xf32>
    tpu.vector_store %arg4[%c0_6, %c0_7], %13 {strides = array<i32>} : memref<16x1024xf32, #tpu.memory_space<vmem>>, vector<16x1024xf32>,
    return
  }
  func.func @transform_0(%arg0: i32) -> (i32, i32) {
    %c0_i32 = arith.constant 0 : i32
    %c0_i32_0 = arith.constant 0 : i32
    return %c0_i32, %arg0 : i32, i32
  }
  func.func @transform_1(%arg0: i32) -> (i32, i32) {
    %c0_i32 = arith.constant 0 : i32
    %c0_i32_0 = arith.constant 0 : i32
    %c0_i32_1 = arith.constant 0 : i32
    return %c0_i32, %c0_i32_0 : i32, i32
  }
  func.func @transform_2(%arg0: i32) -> (i32, i32) {
    %c0_i32 = arith.constant 0 : i32
    %c0_i32_0 = arith.constant 0 : i32
    %c0_i32_1 = arith.constant 0 : i32
    return %c0_i32, %c0_i32_0 : i32, i32
  }
  func.func @transform_3(%arg0: i32) -> (i32, i32) {
    %c0_i32 = arith.constant 0 : i32
    %c0_i32_0 = arith.constant 0 : i32
    return %c0_i32, %arg0 : i32, i32
  }
}

</mosaic_0001>

<llo_original>
// kernel: init_stage_g.5
$region0: #{init_stage_g.5}
  #allocation0 [shape = 'u32[]', space=smem, size = 0x4, offset = 0x4, fixed_abs, tag = 'smem constant byte address 0x4 - core index']
  #allocation1 [shape = 'u32[144,128]{1,0:T(1,128)}', space=vmem, size = 0x12000, scoped, tag = 'internal scratch']
  %s0 = inlined_call_operand.vmem [shape: bf16[2,16], index: 0, kind: input, shape index: {}]
  %s1 = inlined_call_operand.hbm [shape: bf16[16,2048], index: 1, kind: input, shape index: {}]
  %s2 = inlined_call_operand.hbm [shape: f32[1,2048], index: 2, kind: input, shape index: {}]
  %s3 = inlined_call_operand.vmem [shape: bf16[2,1024], index: 3, kind: output, shape index: {}]
  %s4 = sld [smem:[#allocation0]]
  $region30: #{init_stage_g.5} parent=0
    _
  %s6 = ssub.s32 1, %s4
  %s7 = scalar_select 0, %s6, %s4
  $region1: #{init_stage_g.5} parent=0
    #allocation2 [shape = 'u8[65536]{0}', space=vmem, size = 0x10000, scoped, tag = 'input window, operand 1, single buffered']
    #allocation3 [shape = 's32[1]{0}', space=sflag, size = 0x4, scoped, tag = 'scoped memory for init_stage_g.5']
    #allocation4 [shape = 'u8[8192]{0}', space=vmem, size = 0x2000, scoped, tag = 'input window, operand 2, single buffered']
    #allocation5 [shape = 's32[1]{0}', space=sflag, size = 0x4, scoped, tag = 'scoped memory for init_stage_g.5']
    %8 = vsyncpa [#allocation3], 0
    %9 = vsyncpa [#allocation5], 0
    // Predicated region
    $region2: #{init_stage_g.5} parent=1 // pred_check
      _
    $region3: #{init_stage_g.5} parent=1 // pred_check_branch
      %11 = sbr.rel (0) target = $region5
    $region4: #{init_stage_g.5} parent=1 // pred_region
      _
    $region5: #{init_stage_g.5} parent=1 // pred_fallthru
      _
    // Predicated region
    $region6: #{init_stage_g.5} parent=1 // pred_check
      _
    $region7: #{init_stage_g.5} parent=1 // pred_check_branch
      %13 = sbr.rel (0) target = $region9
    $region8: #{init_stage_g.5} parent=1 // pred_region
      %s15 = ssub.s32 2048, 2048
      %16 = vsyncadd [#allocation3], %s15
      %s17 = sshll.u32 [#allocation2], 4
      %s18 = int_to_ptr.vmem [resolvable:$true] %s17
      %23 = dma.hbm_to_vmem [thread:$0]  %s1, 2048, %s18, [#allocation3], 1024, 1024, 64
    $region9: #{init_stage_g.5} parent=1 // pred_fallthru
      _
    // Predicated region
    $region10: #{init_stage_g.5} parent=1 // pred_check
      _
    $region11: #{init_stage_g.5} parent=1 // pred_check_branch
      %25 = sbr.rel (0) target = $region13
    $region12: #{init_stage_g.5} parent=1 // pred_region
      %s27 = ssub.s32 256, 256
      %28 = vsyncadd [#allocation5], %s27
      %s30 = sshll.u32 [#allocation4], 4
      %s31 = int_to_ptr.vmem [resolvable:$true] %s30
      %33 = dma.hbm_to_vmem [thread:$0]  %s2, 256, %s31, [#allocation5]
    $region13: #{init_stage_g.5} parent=1 // pred_fallthru
      _
    // Predicated region
    $region14: #{init_stage_g.5} parent=1 // pred_check
      _
    $region15: #{init_stage_g.5} parent=1 // pred_check_branch
      %35 = sbr.rel (0) target = $region17
    $region16: #{init_stage_g.5} parent=1 // pred_region
      %36 = dma.done [#allocation3], 2048
    $region17: #{init_stage_g.5} parent=1 // pred_fallthru
      _
    // Predicated region
    $region18: #{init_stage_g.5} parent=1 // pred_check
      _
    $region19: #{init_stage_g.5} parent=1 // pred_check_branch
      %38 = sbr.rel (0) target = $region21
    $region20: #{init_stage_g.5} parent=1 // pred_region
      %39 = dma.done [#allocation5], 256
    $region21: #{init_stage_g.5} parent=1 // pred_fallthru
      _
    %v41 = vld [vmem:[%s0] sm:$0x1]
    %v42 = vld [vmem:[#allocation2] sm:$0xff]
    %v43 = vld [vmem:[#allocation2 + $0x8] sm:$0xff]
    %v44 = vld [vmem:[#allocation2 + $0x10] sm:$0xff]
    %v45 = vld [vmem:[#allocation2 + $0x18] sm:$0xff]
    %v46 = vld [vmem:[#allocation2 + $0x20] sm:$0xff]
    %v47 = vld [vmem:[#allocation2 + $0x28] sm:$0xff]
    %v48 = vld [vmem:[#allocation2 + $0x30] sm:$0xff]
    %v49 = vld [vmem:[#allocation2 + $0x38] sm:$0xff]
    %v50 = vld [vmem:[#allocation2 + $0x40] sm:$0xff]
    %v51 = vld [vmem:[#allocation2 + $0x48] sm:$0xff]
    %v52 = vld [vmem:[#allocation2 + $0x50] sm:$0xff]
    %v53 = vld [vmem:[#allocation2 + $0x58] sm:$0xff]
    %v54 = vld [vmem:[#allocation2 + $0x60] sm:$0xff]
    %v55 = vld [vmem:[#allocation2 + $0x68] sm:$0xff]
    %v56 = vld [vmem:[#allocation2 + $0x70] sm:$0xff]
    %v57 = vld [vmem:[#allocation2 + $0x78] sm:$0xff]
    %v58 = vld [vmem:[#allocation4] sm:$0xff]
    %v59 = vld [vmem:[#allocation4 + $0x8] sm:$0xff]
    %v62 = vlaneseq
    %v63 = vshrl.u32 %v62, 7
    %v64 = vsub.s32 0, %v63
    %v65 = vrot.slane %v58, %v64
    %v66 = vlaneseq
    %v67 = vshrl.u32 %v66, 7
    %v68 = vsub.s32 1, %v67
    %v69 = vrot.slane %v58, %v68
    %v70 = vlaneseq
    %v71 = vshrl.u32 %v70, 7
    %v72 = vsub.s32 2, %v71
    %v73 = vrot.slane %v58, %v72
    %v74 = vlaneseq
    %v75 = vshrl.u32 %v74, 7
    %v76 = vsub.s32 3, %v75
    %v77 = vrot.slane %v58, %v76
    %v78 = vlaneseq
    %v79 = vshrl.u32 %v78, 7
    %v80 = vsub.s32 4, %v79
    %v81 = vrot.slane %v58, %v80
    %v82 = vlaneseq
    %v83 = vshrl.u32 %v82, 7
    %v84 = vsub.s32 5, %v83
    %v85 = vrot.slane %v58, %v84
    %v86 = vlaneseq
    %v87 = vshrl.u32 %v86, 7
    %v88 = vsub.s32 6, %v87
    %v89 = vrot.slane %v58, %v88
    %v90 = vlaneseq
    %v91 = vshrl.u32 %v90, 7
    %v92 = vsub.s32 7, %v91
    %v93 = vrot.slane %v58, %v92
    %v94 = vlaneseq
    %v95 = vshrl.u32 %v94, 7
    %v96 = vsub.s32 0, %v95
    %v97 = vrot.slane %v59, %v96
    %v98 = vlaneseq
    %v99 = vshrl.u32 %v98, 7
    %v100 = vsub.s32 1, %v99
    %v101 = vrot.slane %v59, %v100
    %v102 = vlaneseq
    %v103 = vshrl.u32 %v102, 7
    %v104 = vsub.s32 2, %v103
    %v105 = vrot.slane %v59, %v104
    %v106 = vlaneseq
    %v107 = vshrl.u32 %v106, 7
    %v108 = vsub.s32 3, %v107
    %v109 = vrot.slane %v59, %v108
    %v110 = vlaneseq
    %v111 = vshrl.u32 %v110, 7
    %v112 = vsub.s32 4, %v111
    %v113 = vrot.slane %v59, %v112
    %v114 = vlaneseq
    %v115 = vshrl.u32 %v114, 7
    %v116 = vsub.s32 5, %v115
    %v117 = vrot.slane %v59, %v116
    %v118 = vlaneseq
    %v119 = vshrl.u32 %v118, 7
    %v120 = vsub.s32 6, %v119
    %v121 = vrot.slane %v59, %v120
    %v122 = vlaneseq
    %v123 = vshrl.u32 %v122, 7
    %v124 = vsub.s32 7, %v123
    %v125 = vrot.slane %v59, %v124
    %v158 = vunpack.c.l.b16 %v42
    %v159 = vunpack.c.h.b16 %v42
    %v160 = vunpack.c.l.b16 %v43
    %v161 = vunpack.c.h.b16 %v43
    %v162 = vunpack.c.l.b16 %v44
    %v163 = vunpack.c.h.b16 %v44
    %v164 = vunpack.c.l.b16 %v45
    %v165 = vunpack.c.h.b16 %v45
    %v166 = vunpack.c.l.b16 %v46
    %v167 = vunpack.c.h.b16 %v46
    %v168 = vunpack.c.l.b16 %v47
    %v169 = vunpack.c.h.b16 %v47
    %v170 = vunpack.c.l.b16 %v48
    %v171 = vunpack.c.h.b16 %v48
    %v172 = vunpack.c.l.b16 %v49
    %v173 = vunpack.c.h.b16 %v49
    %v174 = vunpack.c.l.b16 %v50
    %v175 = vunpack.c.h.b16 %v50
    %v176 = vunpack.c.l.b16 %v51
    %v177 = vunpack.c.h.b16 %v51
    %v178 = vunpack.c.l.b16 %v52
    %v179 = vunpack.c.h.b16 %v52
    %v180 = vunpack.c.l.b16 %v53
    %v181 = vunpack.c.h.b16 %v53
    %v182 = vunpack.c.l.b16 %v54
    %v183 = vunpack.c.h.b16 %v54
    %v184 = vunpack.c.l.b16 %v55
    %v185 = vunpack.c.h.b16 %v55
    %v186 = vunpack.c.l.b16 %v56
    %v187 = vunpack.c.h.b16 %v56
    %v188 = vunpack.c.l.b16 %v57
    %v189 = vunpack.c.h.b16 %v57
    %v190 = vpack.c.b16 %v174, %v158
    %v191 = vpack.c.b16 %v175, %v159
    %v192 = vpack.c.b16 %v176, %v160
    %v193 = vpack.c.b16 %v177, %v161
    %v194 = vpack.c.b16 %v178, %v162
    %v195 = vpack.c.b16 %v179, %v163
    %v196 = vpack.c.b16 %v180, %v164
    %v197 = vpack.c.b16 %v181, %v165
    %v198 = vpack.c.b16 %v182, %v166
    %v199 = vpack.c.b16 %v183, %v167
    %v200 = vpack.c.b16 %v184, %v168
    %v201 = vpack.c.b16 %v185, %v169
    %v202 = vpack.c.b16 %v186, %v170
    %v203 = vpack.c.b16 %v187, %v171
    %v204 = vpack.c.b16 %v188, %v172
    %v205 = vpack.c.b16 %v189, %v173
    %vm222 = vcmask 130048
    %v224 = vsel %vm222, %v41, 0
    %226 = vmatprep.subr.bf16.mxu0 %v191
    %227 = vmatpush1.bf16.msra.mxu0 %v190
    %228 = vmatprep.subr.bf16.mxu0 0
    %229 = vmatpush1.bf16.msra.mxu0 0
    %230 = vmatprep.subr.bf16.mxu0 0
    %231 = vmatpush1.bf16.msra.mxu0 0
    %232 = vmatprep.subr.bf16.mxu0 0
    %233 = vmatpush1.bf16.msra.mxu0 0
    %234 = vmatprep.subr.bf16.mxu0 0
    %235 = vmatpush1.bf16.msra.mxu0 0
    %236 = vmatprep.subr.bf16.mxu0 0
    %237 = vmatpush1.bf16.msra.mxu0 0
    %238 = vmatprep.subr.bf16.mxu0 0
    %239 = vmatpush1.bf16.msra.mxu0 0
    %240 = vmatprep.subr.bf16.mxu0 0
    %241 = vmatpush1.bf16.msra.mxu0 0
    %242 = vmatprep.subr.bf16.mxu0 0
    %243 = vmatpush1.bf16.msra.mxu0 0
    %244 = vmatprep.subr.bf16.mxu0 0
    %245 = vmatpush1.bf16.msra.mxu0 0
    %246 = vmatprep.subr.bf16.mxu0 0
    %247 = vmatpush1.bf16.msra.mxu0 0
    %248 = vmatprep.subr.bf16.mxu0 0
    %249 = vmatpush1.bf16.msra.mxu0 0
    %250 = vmatprep.subr.bf16.mxu0 0
    %251 = vmatpush1.bf16.msra.mxu0 0
    %252 = vmatprep.subr.bf16.mxu0 0
    %253 = vmatpush1.bf16.msra.mxu0 0
    %254 = vmatprep.subr.bf16.mxu0 0
    %255 = vmatpush1.bf16.msra.mxu0 0
    %256 = vmatprep.subr.bf16.mxu0 0
    %257 = vmatpush1.bf16.msra.mxu0 0
    %258 = vmatprep.mubr.bf16.mxu0 0
    %259 = vmatmul.mubr.bf16.gmra.mrb[0].mxu0 %v224
    %v260 = vpop.f32.mrb[0].mxu0
    %v261 = vadd.f32 %v65, %v260
    %v262 = vpop.f32.mrb[0].mxu0
    %v263 = vadd.f32 %v69, %v262
    %v264 = vpop.f32.mrb[0].mxu0
    %v265 = vpop.f32.mrb[0].mxu0
    %266 = vdwg.mxu0
    %267 = vmatprep.subr.bf16.mxu0 %v193
    %268 = vmatpush1.bf16.msra.mxu0 %v192
    %269 = vmatprep.subr.bf16.mxu0 0
    %270 = vmatpush1.bf16.msra.mxu0 0
    %271 = vmatprep.subr.bf16.mxu0 0
    %272 = vmatpush1.bf16.msra.mxu0 0
    %273 = vmatprep.subr.bf16.mxu0 0
    %274 = vmatpush1.bf16.msra.mxu0 0
    %275 = vmatprep.subr.bf16.mxu0 0
    %276 = vmatpush1.bf16.msra.mxu0 0
    %277 = vmatprep.subr.bf16.mxu0 0
    %278 = vmatpush1.bf16.msra.mxu0 0
    %279 = vmatprep.subr.bf16.mxu0 0
    %280 = vmatpush1.bf16.msra.mxu0 0
    %281 = vmatprep.subr.bf16.mxu0 0
    %282 = vmatpush1.bf16.msra.mxu0 0
    %283 = vmatprep.subr.bf16.mxu0 0
    %284 = vmatpush1.bf16.msra.mxu0 0
    %285 = vmatprep.subr.bf16.mxu0 0
    %286 = vmatpush1.bf16.msra.mxu0 0
    %287 = vmatprep.subr.bf16.mxu0 0
    %288 = vmatpush1.bf16.msra.mxu0 0
    %289 = vmatprep.subr.bf16.mxu0 0
    %290 = vmatpush1.bf16.msra.mxu0 0
    %291 = vmatprep.subr.bf16.mxu0 0
    %292 = vmatpush1.bf16.msra.mxu0 0
    %293 = vmatprep.subr.bf16.mxu0 0
    %294 = vmatpush1.bf16.msra.mxu0 0
    %295 = vmatprep.subr.bf16.mxu0 0
    %296 = vmatpush1.bf16.msra.mxu0 0
    %297 = vmatprep.subr.bf16.mxu0 0
    %298 = vmatpush1.bf16.msra.mxu0 0
    %299 = vmatprep.mubr.bf16.mxu0 0
    %300 = vmatmul.mubr.bf16.gmra.mrb[0].mxu0 %v224
    %v301 = vpop.f32.mrb[0].mxu0
    %v302 = vadd.f32 %v73, %v301
    %v303 = vpop.f32.mrb[0].mxu0
    %v304 = vadd.f32 %v77, %v303
    %v305 = vpop.f32.mrb[0].mxu0
    %v306 = vpop.f32.mrb[0].mxu0
    %307 = vdwg.mxu0
    %308 = vmatprep.subr.bf16.mxu0 %v195
    %309 = vmatpush1.bf16.msra.mxu0 %v194
    %310 = vmatprep.subr.bf16.mxu0 0
    %311 = vmatpush1.bf16.msra.mxu0 0
    %312 = vmatprep.subr.bf16.mxu0 0
    %313 = vmatpush1.bf16.msra.mxu0 0
    %314 = vmatprep.subr.bf16.mxu0 0
    %315 = vmatpush1.bf16.msra.mxu0 0
    %316 = vmatprep.subr.bf16.mxu0 0
    %317 = vmatpush1.bf16.msra.mxu0 0
    %318 = vmatprep.subr.bf16.mxu0 0
    %319 = vmatpush1.bf16.msra.mxu0 0
    %320 = vmatprep.subr.bf16.mxu0 0
    %321 = vmatpush1.bf16.msra.mxu0 0
    %322 = vmatprep.subr.bf16.mxu0 0
    %323 = vmatpush1.bf16.msra.mxu0 0
    %324 = vmatprep.subr.bf16.mxu0 0
    %325 = vmatpush1.bf16.msra.mxu0 0
    %326 = vmatprep.subr.bf16.mxu0 0
    %327 = vmatpush1.bf16.msra.mxu0 0
    %328 = vmatprep.subr.bf16.mxu0 0
    %329 = vmatpush1.bf16.msra.mxu0 0
    %330 = vmatprep.subr.bf16.mxu0 0
    %331 = vmatpush1.bf16.msra.mxu0 0
    %332 = vmatprep.subr.bf16.mxu0 0
    %333 = vmatpush1.bf16.msra.mxu0 0
    %334 = vmatprep.subr.bf16.mxu0 0
    %335 = vmatpush1.bf16.msra.mxu0 0
    %336 = vmatprep.subr.bf16.mxu0 0
    %337 = vmatpush1.bf16.msra.mxu0 0
    %338 = vmatprep.subr.bf16.mxu0 0
    %339 = vmatpush1.bf16.msra.mxu0 0
    %340 = vmatprep.mubr.bf16.mxu0 0
    %341 = vmatmul.mubr.bf16.gmra.mrb[0].mxu0 %v224
    %v342 = vpop.f32.mrb[0].mxu0
    %v343 = vadd.f32 %v81, %v342
    %v344 = vpop.f32.mrb[0].mxu0
    %v345 = vadd.f32 %v85, %v344
    %v346 = vpop.f32.mrb[0].mxu0
    %v347 = vpop.f32.mrb[0].mxu0
    %348 = vdwg.mxu0
    %349 = vmatprep.subr.bf16.mxu0 %v197
    %350 = vmatpush1.bf16.msra.mxu0 %v196
    %351 = vmatprep.subr.bf16.mxu0 0
    %352 = vmatpush1.bf16.msra.mxu0 0
    %353 = vmatprep.subr.bf16.mxu0 0
    %354 = vmatpush1.bf16.msra.mxu0 0
    %355 = vmatprep.subr.bf16.mxu0 0
    %356 = vmatpush1.bf16.msra.mxu0 0
    %357 = vmatprep.subr.bf16.mxu0 0
    %358 = vmatpush1.bf16.msra.mxu0 0
    %359 = vmatprep.subr.bf16.mxu0 0
    %360 = vmatpush1.bf16.msra.mxu0 0
    %361 = vmatprep.subr.bf16.mxu0 0
    %362 = vmatpush1.bf16.msra.mxu0 0
    %363 = vmatprep.subr.bf16.mxu0 0
    %364 = vmatpush1.bf16.msra.mxu0 0
    %365 = vmatprep.subr.bf16.mxu0 0
    %366 = vmatpush1.bf16.msra.mxu0 0
    %367 = vmatprep.subr.bf16.mxu0 0
    %368 = vmatpush1.bf16.msra.mxu0 0
    %369 = vmatprep.subr.bf16.mxu0 0
    %370 = vmatpush1.bf16.msra.mxu0 0
    %371 = vmatprep.subr.bf16.mxu0 0
    %372 = vmatpush1.bf16.msra.mxu0 0
    %373 = vmatprep.subr.bf16.mxu0 0
    %374 = vmatpush1.bf16.msra.mxu0 0
    %375 = vmatprep.subr.bf16.mxu0 0
    %376 = vmatpush1.bf16.msra.mxu0 0
    %377 = vmatprep.subr.bf16.mxu0 0
    %378 = vmatpush1.bf16.msra.mxu0 0
    %379 = vmatprep.subr.bf16.mxu0 0
    %380 = vmatpush1.bf16.msra.mxu0 0
    %381 = vmatprep.mubr.bf16.mxu0 0
    %382 = vmatmul.mubr.bf16.gmra.mrb[0].mxu0 %v224
    %v383 = vpop.f32.mrb[0].mxu0
    %v384 = vadd.f32 %v89, %v383
    %v385 = vpop.f32.mrb[0].mxu0
    %v386 = vadd.f32 %v93, %v385
    %v387 = vpop.f32.mrb[0].mxu0
    %v388 = vpop.f32.mrb[0].mxu0
    %389 = vdwg.mxu0
    %390 = vmatprep.subr.bf16.mxu0 %v199
    %391 = vmatpush1.bf16.msra.mxu0 %v198
    %392 = vmatprep.subr.bf16.mxu0 0
    %393 = vmatpush1.bf16.msra.mxu0 0
    %394 = vmatprep.subr.bf16.mxu0 0
    %395 = vmatpush1.bf16.msra.mxu0 0
    %396 = vmatprep.subr.bf16.mxu0 0
    %397 = vmatpush1.bf16.msra.mxu0 0
    %398 = vmatprep.subr.bf16.mxu0 0
    %399 = vmatpush1.bf16.msra.mxu0 0
    %400 = vmatprep.subr.bf16.mxu0 0
    %401 = vmatpush1.bf16.msra.mxu0 0
    %402 = vmatprep.subr.bf16.mxu0 0
    %403 = vmatpush1.bf16.msra.mxu0 0
    %404 = vmatprep.subr.bf16.mxu0 0
    %405 = vmatpush1.bf16.msra.mxu0 0
    %406 = vmatprep.subr.bf16.mxu0 0
    %407 = vmatpush1.bf16.msra.mxu0 0
    %408 = vmatprep.subr.bf16.mxu0 0
    %409 = vmatpush1.bf16.msra.mxu0 0
    %410 = vmatprep.subr.bf16.mxu0 0
    %411 = vmatpush1.bf16.msra.mxu0 0
    %412 = vmatprep.subr.bf16.mxu0 0
    %413 = vmatpush1.bf16.msra.mxu0 0
    %414 = vmatprep.subr.bf16.mxu0 0
    %415 = vmatpush1.bf16.msra.mxu0 0
    %416 = vmatprep.subr.bf16.mxu0 0
    %417 = vmatpush1.bf16.msra.mxu0 0
    %418 = vmatprep.subr.bf16.mxu0 0
    %419 = vmatpush1.bf16.msra.mxu0 0
    %420 = vmatprep.subr.bf16.mxu0 0
    %421 = vmatpush1.bf16.msra.mxu0 0
    %422 = vmatprep.mubr.bf16.mxu0 0
    %423 = vmatmul.mubr.bf16.gmra.mrb[0].mxu0 %v224
    %v424 = vpop.f32.mrb[0].mxu0
    %v425 = vadd.f32 %v97, %v424
    %v426 = vpop.f32.mrb[0].mxu0
    %v427 = vadd.f32 %v101, %v426
    %v428 = vpop.f32.mrb[0].mxu0
    %v429 = vpop.f32.mrb[0].mxu0
    %430 = vdwg.mxu0
    %431 = vmatprep.subr.bf16.mxu0 %v201
    %432 = vmatpush1.bf16.msra.mxu0 %v200
    %433 = vmatprep.subr.bf16.mxu0 0
    %434 = vmatpush1.bf16.msra.mxu0 0
    %435 = vmatprep.subr.bf16.mxu0 0
    %436 = vmatpush1.bf16.msra.mxu0 0
    %437 = vmatprep.subr.bf16.mxu0 0
    %438 = vmatpush1.bf16.msra.mxu0 0
    %439 = vmatprep.subr.bf16.mxu0 0
    %440 = vmatpush1.bf16.msra.mxu0 0
    %441 = vmatprep.subr.bf16.mxu0 0
    %442 = vmatpush1.bf16.msra.mxu0 0
    %443 = vmatprep.subr.bf16.mxu0 0
    %444 = vmatpush1.bf16.msra.mxu0 0
    %445 = vmatprep.subr.bf16.mxu0 0
    %446 = vmatpush1.bf16.msra.mxu0 0
    %447 = vmatprep.subr.bf16.mxu0 0
    %448 = vmatpush1.bf16.msra.mxu0 0
    %449 = vmatprep.subr.bf16.mxu0 0
    %450 = vmatpush1.bf16.msra.mxu0 0
    %451 = vmatprep.subr.bf16.mxu0 0
    %452 = vmatpush1.bf16.msra.mxu0 0
    %453 = vmatprep.subr.bf16.mxu0 0
    %454 = vmatpush1.bf16.msra.mxu0 0
    %455 = vmatprep.subr.bf16.mxu0 0
    %456 = vmatpush1.bf16.msra.mxu0 0
    %457 = vmatprep.subr.bf16.mxu0 0
    %458 = vmatpush1.bf16.msra.mxu0 0
    %459 = vmatprep.subr.bf16.mxu0 0
    %460 = vmatpush1.bf16.msra.mxu0 0
    %461 = vmatprep.subr.bf16.mxu0 0
    %462 = vmatpush1.bf16.msra.mxu0 0
    %463 = vmatprep.mubr.bf16.mxu0 0
    %464 = vmatmul.mubr.bf16.gmra.mrb[0].mxu0 %v224
    %v465 = vpop.f32.mrb[0].mxu0
    %v466 = vadd.f32 %v105, %v465
    %v467 = vpop.f32.mrb[0].mxu0
    %v468 = vadd.f32 %v109, %v467
    %v469 = vpop.f32.mrb[0].mxu0
    %v470 = vpop.f32.mrb[0].mxu0
    %471 = vdwg.mxu0
    %472 = vmatprep.subr.bf16.mxu0 %v203
    %473 = vmatpush1.bf16.msra.mxu0 %v202
    %474 = vmatprep.subr.bf16.mxu0 0
    %475 = vmatpush1.bf16.msra.mxu0 0
    %476 = vmatprep.subr.bf16.mxu0 0
    %477 = vmatpush1.bf16.msra.mxu0 0
    %478 = vmatprep.subr.bf16.mxu0 0
    %479 = vmatpush1.bf16.msra.mxu0 0
    %480 = vmatprep.subr.bf16.mxu0 0
    %481 = vmatpush1.bf16.msra.mxu0 0
    %482 = vmatprep.subr.bf16.mxu0 0
    %483 = vmatpush1.bf16.msra.mxu0 0
    %484 = vmatprep.subr.bf16.mxu0 0
    %485 = vmatpush1.bf16.msra.mxu0 0
    %486 = vmatprep.subr.bf16.mxu0 0
    %487 = vmatpush1.bf16.msra.mxu0 0
    %488 = vmatprep.subr.bf16.mxu0 0
    %489 = vmatpush1.bf16.msra.mxu0 0
    %490 = vmatprep.subr.bf16.mxu0 0
    %491 = vmatpush1.bf16.msra.mxu0 0
    %492 = vmatprep.subr.bf16.mxu0 0
    %493 = vmatpush1.bf16.msra.mxu0 0
    %494 = vmatprep.subr.bf16.mxu0 0
    %495 = vmatpush1.bf16.msra.mxu0 0
    %496 = vmatprep.subr.bf16.mxu0 0
    %497 = vmatpush1.bf16.msra.mxu0 0
    %498 = vmatprep.subr.bf16.mxu0 0
    %499 = vmatpush1.bf16.msra.mxu0 0
    %500 = vmatprep.subr.bf16.mxu0 0
    %501 = vmatpush1.bf16.msra.mxu0 0
    %502 = vmatprep.subr.bf16.mxu0 0
    %503 = vmatpush1.bf16.msra.mxu0 0
    %504 = vmatprep.mubr.bf16.mxu0 0
    %505 = vmatmul.mubr.bf16.gmra.mrb[0].mxu0 %v224
    %v506 = vpop.f32.mrb[0].mxu0
    %v507 = vadd.f32 %v113, %v506
    %v508 = vpop.f32.mrb[0].mxu0
    %v509 = vadd.f32 %v117, %v508
    %v510 = vpop.f32.mrb[0].mxu0
    %v511 = vpop.f32.mrb[0].mxu0
    %512 = vdwg.mxu0
    %513 = vmatprep.subr.bf16.mxu0 %v205
    %514 = vmatpush1.bf16.msra.mxu0 %v204
    %515 = vmatprep.subr.bf16.mxu0 0
    %516 = vmatpush1.bf16.msra.mxu0 0
    %517 = vmatprep.subr.bf16.mxu0 0
    %518 = vmatpush1.bf16.msra.mxu0 0
    %519 = vmatprep.subr.bf16.mxu0 0
    %520 = vmatpush1.bf16.msra.mxu0 0
    %521 = vmatprep.subr.bf16.mxu0 0
    %522 = vmatpush1.bf16.msra.mxu0 0
    %523 = vmatprep.subr.bf16.mxu0 0
    %524 = vmatpush1.bf16.msra.mxu0 0
    %525 = vmatprep.subr.bf16.mxu0 0
    %526 = vmatpush1.bf16.msra.mxu0 0
    %527 = vmatprep.subr.bf16.mxu0 0
    %528 = vmatpush1.bf16.msra.mxu0 0
    %529 = vmatprep.subr.bf16.mxu0 0
    %530 = vmatpush1.bf16.msra.mxu0 0
    %531 = vmatprep.subr.bf16.mxu0 0
    %532 = vmatpush1.bf16.msra.mxu0 0
    %533 = vmatprep.subr.bf16.mxu0 0
    %534 = vmatpush1.bf16.msra.mxu0 0
    %535 = vmatprep.subr.bf16.mxu0 0
    %536 = vmatpush1.bf16.msra.mxu0 0
    %537 = vmatprep.subr.bf16.mxu0 0
    %538 = vmatpush1.bf16.msra.mxu0 0
    %539 = vmatprep.subr.bf16.mxu0 0
    %540 = vmatpush1.bf16.msra.mxu0 0
    %541 = vmatprep.subr.bf16.mxu0 0
    %542 = vmatpush1.bf16.msra.mxu0 0
    %543 = vmatprep.subr.bf16.mxu0 0
    %544 = vmatpush1.bf16.msra.mxu0 0
    %545 = vmatprep.mubr.bf16.mxu0 0
    %546 = vmatmul.mubr.bf16.gmra.mrb[0].mxu0 %v224
    %v547 = vpop.f32.mrb[0].mxu0
    %v548 = vadd.f32 %v121, %v547
    %v549 = vpop.f32.mrb[0].mxu0
    %v550 = vadd.f32 %v125, %v549
    %v551 = vpop.f32.mrb[0].mxu0
    %v552 = vpop.f32.mrb[0].mxu0
    %553 = vdwg.mxu0
    %v554 = vxor.u32 %v425, 2147483648
    %v555 = vxor.u32 %v427, 2147483648
    %v556 = vxor.u32 %v466, 2147483648
    %v557 = vxor.u32 %v468, 2147483648
    %v558 = vxor.u32 %v507, 2147483648
    %v559 = vxor.u32 %v509, 2147483648
    %v560 = vxor.u32 %v548, 2147483648
    %v561 = vxor.u32 %v550, 2147483648
    %v562 = vmul.f32 %v554, 1.442695
    %v563 = vpow.pop %v562
    %v564 = vmul.f32 %v555, 1.442695
    %v565 = vpow.pop %v564
    %v566 = vmul.f32 %v556, 1.442695
    %v567 = vpow.pop %v566
    %v568 = vmul.f32 %v557, 1.442695
    %v569 = vpow.pop %v568
    %v570 = vmul.f32 %v558, 1.442695
    %v571 = vpow.pop %v570
    %v572 = vmul.f32 %v559, 1.442695
    %v573 = vpow.pop %v572
    %v574 = vmul.f32 %v560, 1.442695
    %v575 = vpow.pop %v574
    %v576 = vmul.f32 %v561, 1.442695
    %v577 = vpow.pop %v576
    %v578 = vadd.f32 %v563, 1.0
    %v579 = vadd.f32 %v565, 1.0
    %v580 = vadd.f32 %v567, 1.0
    %v581 = vadd.f32 %v569, 1.0
    %v582 = vadd.f32 %v571, 1.0
    %v583 = vadd.f32 %v573, 1.0
    %v584 = vadd.f32 %v575, 1.0
    %v585 = vadd.f32 %v577, 1.0
    %v586 = vrcp.pop %v578
    %v587 = vmul.f32 1.0, %v586
    %v588 = vrcp.pop %v579
    %v589 = vmul.f32 1.0, %v588
    %v590 = vrcp.pop %v580
    %v591 = vmul.f32 1.0, %v590
    %v592 = vrcp.pop %v581
    %v593 = vmul.f32 1.0, %v592
    %v594 = vrcp.pop %v582
    %v595 = vmul.f32 1.0, %v594
    %v596 = vrcp.pop %v583
    %v597 = vmul.f32 1.0, %v596
    %v598 = vrcp.pop %v584
    %v599 = vmul.f32 1.0, %v598
    %v600 = vrcp.pop %v585
    %v601 = vmul.f32 1.0, %v600
    %v602 = vmul.f32 %v261, %v587
    %v603 = vmul.f32 %v263, %v589
    %v604 = vmul.f32 %v302, %v591
    %v605 = vmul.f32 %v304, %v593
    %v606 = vmul.f32 %v343, %v595
    %v607 = vmul.f32 %v345, %v597
    %v608 = vmul.f32 %v384, %v599
    %v609 = vmul.f32 %v386, %v601
    %v610 = vpack.c.bf16 %v602, %v602
    %v611 = vpack.c.bf16 %v603, %v603
    %v612 = vpack.c.bf16 %v604, %v604
    %v613 = vpack.c.bf16 %v605, %v605
    %v614 = vpack.c.bf16 %v606, %v606
    %v615 = vpack.c.bf16 %v607, %v607
    %v616 = vpack.c.bf16 %v608, %v608
    %v617 = vpack.c.bf16 %v609, %v609
    %v626 = vcombine.low %v610, %v611
    %v627 = vcombine.low %v612, %v613
    %v628 = vcombine.low %v614, %v615
    %v629 = vcombine.low %v616, %v617
    %v631 = vunpack.c.l.s4 1966171168
    %v632 = vunpack.c.0.s8 %v631
    %v633 = vlaneseq
    %v634 = vshrl.u32 %v633, 7
    %v635 = vsub.s32 %v632, %v634
    %v636 = vrot.slane %v626, %v635
    %v638 = vunpack.c.l.s4 1966171168
    %v639 = vunpack.c.0.s8 %v638
    %v640 = vlaneseq
    %v641 = vshrl.u32 %v640, 7
    %v642 = vsub.s32 %v639, %v641
    %v643 = vrot.slane %v627, %v642
    %v645 = vunpack.c.l.s4 1966171168
    %v646 = vunpack.c.0.s8 %v645
    %v647 = vlaneseq
    %v648 = vshrl.u32 %v647, 7
    %v649 = vsub.s32 %v646, %v648
    %v650 = vrot.slane %v628, %v649
    %v652 = vunpack.c.l.s4 1966171168
    %v653 = vunpack.c.0.s8 %v652
    %v654 = vlaneseq
    %v655 = vshrl.u32 %v654, 7
    %v656 = vsub.s32 %v653, %v655
    %v657 = vrot.slane %v629, %v656
    %v658 = vcombine.low %v636, %v643
    %v659 = vcombine.low %v650, %v657
    %v661 = vunpack.c.l.s4 1966171168
    %v662 = vunpack.c.0.s8 %v661
    %v663 = vlaneseq
    %v664 = vshrl.u32 %v663, 7
    %v665 = vsub.s32 %v662, %v664
    %v666 = vrot.slane %v658, %v665
    %v668 = vunpack.c.l.s4 1966171168
    %v669 = vunpack.c.0.s8 %v668
    %v670 = vlaneseq
    %v671 = vshrl.u32 %v670, 7
    %v672 = vsub.s32 %v669, %v671
    %v673 = vrot.slane %v659, %v672
    %v674 = vcombine.low %v666, %v673
    %676 = vst [vmem:[%s3] sm:$0xff] %v674
    // Predicated region
    $region22: #{init_stage_g.5} parent=1 // pred_check
      _
    $region23: #{init_stage_g.5} parent=1 // pred_check_branch
      %678 = sbr.rel (0) target = $region25
    $region24: #{init_stage_g.5} parent=1 // pred_region
      _
    $region25: #{init_stage_g.5} parent=1 // pred_fallthru
      _
    // Predicated region
    $region26: #{init_stage_g.5} parent=1 // pred_check
      _
    $region27: #{init_stage_g.5} parent=1 // pred_check_branch
      %680 = sbr.rel (0) target = $region29
    $region28: #{init_stage_g.5} parent=1 // pred_region
      _
    $region29: #{init_stage_g.5} parent=1 // pred_fallthru
      _
    %681 = vsyncpa [#allocation3], 1
    %682 = vsyncpa [#allocation5], 1

// kernel: init_stage_g.6
$region0: #{init_stage_g.6}
  #allocation0 [shape = 'u32[]', space=smem, size = 0x4, offset = 0x4, fixed_abs, tag = 'smem constant byte address 0x4 - core index']
  #allocation1 [shape = 'u32[144,128]{1,0:T(1,128)}', space=vmem, size = 0x12000, scoped, tag = 'internal scratch']
  %s0 = inlined_call_operand.vmem [shape: bf16[576,128], index: 0, kind: input, shape index: {}]
  %s1 = inlined_call_operand.vmem [shape: bf16[256,576], index: 1, kind: input, shape index: {}]
  %s2 = inlined_call_operand.vmem [shape: f32[256,1], index: 2, kind: input, shape index: {}]
  %s3 = inlined_call_operand.vmem [shape: bf16[128,128], index: 3, kind: output, shape index: {}]
  %s4 = sld [smem:[#allocation0]]
  $region22: #{init_stage_g.6} parent=0
    _
  %s6 = ssub.s32 1, %s4
  %s7 = scalar_select 0, %s6, %s4
  // Predicated region
  $region2: #{init_stage_g.6} parent=0 // pred_check
    _
  $region3: #{init_stage_g.6} parent=0 // pred_check_branch
    %9 = sbr.rel (0) target = $region5
  $region4: #{init_stage_g.6} parent=0 // pred_region
    _
  $region5: #{init_stage_g.6} parent=0 // pred_fallthru
    _
  // Predicated region
  $region6: #{init_stage_g.6} parent=0 // pred_check
    _
  $region7: #{init_stage_g.6} parent=0 // pred_check_branch
    %11 = sbr.rel (0) target = $region9
  $region8: #{init_stage_g.6} parent=0 // pred_region
    _
  $region9: #{init_stage_g.6} parent=0 // pred_fallthru
    _
  // Predicated region
  $region10: #{init_stage_g.6} parent=0 // pred_check
    _
  $region11: #{init_stage_g.6} parent=0 // pred_check_branch
    %13 = sbr.rel (0) target = $region13
  $region12: #{init_stage_g.6} parent=0 // pred_region
    _
  $region13: #{init_stage_g.6} parent=0 // pred_fallthru
    _
  %v15 = vld [vmem:[%s1] sm:$0xff]
  %v16 = vld [vmem:[%s1 + $0x8] sm:$0xff]
  %v17 = vld [vmem:[%s1 + $0x10] sm:$0xf]
  %v18 = vld [vmem:[%s1 + $0x14] sm:$0xff]
  %v19 = vld [vmem:[%s1 + $0x1c] sm:$0xff]
  %v20 = vld [vmem:[%s1 + $0x24] sm:$0xf]
  %v21 = vld [vmem:[%s1 + $0x28] sm:$0xff]
  %v22 = vld [vmem:[%s1 + $0x30] sm:$0xff]
  %v23 = vld [vmem:[%s1 + $0x38] sm:$0xf]
  %v24 = vld [vmem:[%s1 + $0x3c] sm:$0xff]
  %v25 = vld [vmem:[%s1 + $0x44] sm:$0xff]
  %v26 = vld [vmem:[%s1 + $0x4c] sm:$0xf]
  %v27 = vld [vmem:[%s1 + $0x50] sm:$0xff]
  %v28 = vld [vmem:[%s1 + $0x58] sm:$0xff]
  %v29 = vld [vmem:[%s1 + $0x60] sm:$0xf]
  %v30 = vld [vmem:[%s1 + $0x64] sm:$0xff]
  %v31 = vld [vmem:[%s1 + $0x6c] sm:$0xff]
  %v32 = vld [vmem:[%s1 + $0x74] sm:$0xf]
  %v33 = vld [vmem:[%s1 + $0x78] sm:$0xff]
  %v34 = vld [vmem:[%s1 + $0x80] sm:$0xff]
  %v35 = vld [vmem:[%s1 + $0x88] sm:$0xf]
  %v36 = vld [vmem:[%s1 + $0x8c] sm:$0xff]
  %v37 = vld [vmem:[%s1 + $0x94] sm:$0xff]
  %v38 = vld [vmem:[%s1 + $0x9c] sm:$0xf]
  %v39 = vld [vmem:[%s1 + $0xa0] sm:$0xff]
  %v40 = vld [vmem:[%s1 + $0xa8] sm:$0xff]
  %v41 = vld [vmem:[%s1 + $0xb0] sm:$0xf]
  %v42 = vld [vmem:[%s1 + $0xb4] sm:$0xff]
  %v43 = vld [vmem:[%s1 + $0xbc] sm:$0xff]
  %v44 = vld [vmem:[%s1 + $0xc4] sm:$0xf]
  %v45 = vld [vmem:[%s1 + $0xc8] sm:$0xff]
  %v46 = vld [vmem:[%s1 + $0xd0] sm:$0xff]
  %v47 = vld [vmem:[%s1 + $0xd8] sm:$0xf]
  %v48 = vld [vmem:[%s1 + $0xdc] sm:$0xff]
  %v49 = vld [vmem:[%s1 + $0xe4] sm:$0xff]
  %v50 = vld [vmem:[%s1 + $0xec] sm:$0xf]
  %v51 = vld [vmem:[%s1 + $0xf0] sm:$0xff]
  %v52 = vld [vmem:[%s1 + $0xf8] sm:$0xff]
  %v53 = vld [vmem:[%s1 + $0x100] sm:$0xf]
  %v54 = vld [vmem:[%s1 + $0x104] sm:$0xff]
  %v55 = vld [vmem:[%s1 + $0x10c] sm:$0xff]
  %v56 = vld [vmem:[%s1 + $0x114] sm:$0xf]
  %v57 = vld [vmem:[%s1 + $0x118] sm:$0xff]
  %v58 = vld [vmem:[%s1 + $0x120] sm:$0xff]
  %v59 = vld [vmem:[%s1 + $0x128] sm:$0xf]
  %v60 = vld [vmem:[%s1 + $0x12c] sm:$0xff]
  %v61 = vld [vmem:[%s1 + $0x134] sm:$0xff]
  %v62 = vld [vmem:[%s1 + $0x13c] sm:$0xf]
  %v63 = vld [vmem:[%s1 + $0x140] sm:$0xff]
  %v64 = vld [vmem:[%s1 + $0x148] sm:$0xff]
  %v65 = vld [vmem:[%s1 + $0x150] sm:$0xf]
  %v66 = vld [vmem:[%s1 + $0x154] sm:$0xff]
  %v67 = vld [vmem:[%s1 + $0x15c] sm:$0xff]
  %v68 = vld [vmem:[%s1 + $0x164] sm:$0xf]
  %v69 = vld [vmem:[%s1 + $0x168] sm:$0xff]
  %v70 = vld [vmem:[%s1 + $0x170] sm:$0xff]
  %v71 = vld [vmem:[%s1 + $0x178] sm:$0xf]
  %v72 = vld [vmem:[%s1 + $0x17c] sm:$0xff]
  %v73 = vld [vmem:[%s1 + $0x184] sm:$0xff]
  %v74 = vld [vmem:[%s1 + $0x18c] sm:$0xf]
  %v75 = vld [vmem:[%s1 + $0x190] sm:$0xff]
  %v76 = vld [vmem:[%s1 + $0x198] sm:$0xff]
  %v77 = vld [vmem:[%s1 + $0x1a0] sm:$0xf]
  %v78 = vld [vmem:[%s1 + $0x1a4] sm:$0xff]
  %v79 = vld [vmem:[%s1 + $0x1ac] sm:$0xff]
  %v80 = vld [vmem:[%s1 + $0x1b4] sm:$0xf]
  %v81 = vld [vmem:[%s1 + $0x1b8] sm:$0xff]
  %v82 = vld [vmem:[%s1 + $0x1c0] sm:$0xff]
  %v83 = vld [vmem:[%s1 + $0x1c8] sm:$0xf]
  %v84 = vld [vmem:[%s1 + $0x1cc] sm:$0xff]
  %v85 = vld [vmem:[%s1 + $0x1d4] sm:$0xff]
  %v86 = vld [vmem:[%s1 + $0x1dc] sm:$0xf]
  %v87 = vld [vmem:[%s1 + $0x1e0] sm:$0xff]
  %v88 = vld [vmem:[%s1 + $0x1e8] sm:$0xff]
  %v89 = vld [vmem:[%s1 + $0x1f0] sm:$0xf]
  %v90 = vld [vmem:[%s1 + $0x1f4] sm:$0xff]
  %v91 = vld [vmem:[%s1 + $0x1fc] sm:$0xff]
  %v92 = vld [vmem:[%s1 + $0x204] sm:$0xf]
  %v93 = vld [vmem:[%s1 + $0x208] sm:$0xff]
  %v94 = vld [vmem:[%s1 + $0x210] sm:$0xff]
  %v95 = vld [vmem:[%s1 + $0x218] sm:$0xf]
  %v96 = vld [vmem:[%s1 + $0x21c] sm:$0xff]
  %v97 = vld [vmem:[%s1 + $0x224] sm:$0xff]
  %v98 = vld [vmem:[%s1 + $0x22c] sm:$0xf]
  %v99 = vld [vmem:[%s1 + $0x230] sm:$0xff]
  %v100 = vld [vmem:[%s1 + $0x238] sm:$0xff]
  %v101 = vld [vmem:[%s1 + $0x240] sm:$0xf]
  %v102 = vld [vmem:[%s1 + $0x244] sm:$0xff]
  %v103 = vld [vmem:[%s1 + $0x24c] sm:$0xff]
  %v104 = vld [vmem:[%s1 + $0x254] sm:$0xf]
  %v105 = vld [vmem:[%s1 + $0x258] sm:$0xff]
  %v106 = vld [vmem:[%s1 + $0x260] sm:$0xff]
  %v107 = vld [vmem:[%s1 + $0x268] sm:$0xf]
  %v108 = vld [vmem:[%s1 + $0x26c] sm:$0xff]
  %v109 = vld [vmem:[%s1 + $0x274] sm:$0xff]
  %v110 = vld [vmem:[%s1 + $0x27c] sm:$0xf]
  %v111 = vld [vmem:[%s0] sm:$0xf]
  %v112 = vld [vmem:[%s0 + $0x4] sm:$0xf]
  %v113 = vld [vmem:[%s0 + $0x8] sm:$0xf]
  %v114 = vld [vmem:[%s0 + $0xc] sm:$0xf]
  %v115 = vld [vmem:[%s0 + $0x10] sm:$0xf]
  %v116 = vld [vmem:[%s0 + $0x14] sm:$0xf]
  %v117 = vld [vmem:[%s0 + $0x18] sm:$0xf]
  %v118 = vld [vmem:[%s0 + $0x1c] sm:$0xf]
  %v119 = vld [vmem:[%s0 + $0x20] sm:$0xf]
  %v120 = vld [vmem:[%s0 + $0x24] sm:$0xf]
  %v121 = vld [vmem:[%s0 + $0x28] sm:$0xf]
  %v122 = vld [vmem:[%s0 + $0x2c] sm:$0xf]
  %v123 = vld [vmem:[%s0 + $0x30] sm:$0xf]
  %v124 = vld [vmem:[%s0 + $0x34] sm:$0xf]
  %v125 = vld [vmem:[%s0 + $0x38] sm:$0xf]
  %v126 = vld [vmem:[%s0 + $0x3c] sm:$0xf]
  %v127 = vld [vmem:[%s0 + $0x40] sm:$0xf]
  %v128 = vld [vmem:[%s0 + $0x44] sm:$0xf]
  %v129 = vld [vmem:[%s0 + $0x48] sm:$0xf]
  %v130 = vld [vmem:[%s0 + $0x4c] sm:$0xf]
  %v131 = vld [vmem:[%s0 + $0x50] sm:$0xf]
  %v132 = vld [vmem:[%s0 + $0x54] sm:$0xf]
  %v133 = vld [vmem:[%s0 + $0x58] sm:$0xf]
  %v134 = vld [vmem:[%s0 + $0x5c] sm:$0xf]
  %v135 = vld [vmem:[%s0 + $0x60] sm:$0xf]
  %v136 = vld [vmem:[%s0 + $0x64] sm:$0xf]
  %v137 = vld [vmem:[%s0 + $0x68] sm:$0xf]
  %v138 = vld [vmem:[%s0 + $0x6c] sm:$0xf]
  %v139 = vld [vmem:[%s0 + $0x70] sm:$0xf]
  %v140 = vld [vmem:[%s0 + $0x74] sm:$0xf]
  %v141 = vld [vmem:[%s0 + $0x78] sm:$0xf]
  %v142 = vld [vmem:[%s0 + $0x7c] sm:$0xf]
  %v143 = vld [vmem:[%s0 + $0x80] sm:$0xf]
  %v144 = vld [vmem:[%s0 + $0x84] sm:$0xf]
  %v145 = vld [vmem:[%s0 + $0x88] sm:$0xf]
  %v146 = vld [vmem:[%s0 + $0x8c] sm:$0xf]
  %v147 = vld [vmem:[%s0 + $0x90] sm:$0xf]
  %v148 = vld [vmem:[%s0 + $0x94] sm:$0xf]
  %v149 = vld [vmem:[%s0 + $0x98] sm:$0xf]
  %v150 = vld [vmem:[%s0 + $0x9c] sm:$0xf]
  %v151 = vld [vmem:[%s0 + $0xa0] sm:$0xf]
  %v152 = vld [vmem:[%s0 + $0xa4] sm:$0xf]
  %v153 = vld [vmem:[%s0 + $0xa8] sm:$0xf]
  %v154 = vld [vmem:[%s0 + $0xac] sm:$0xf]
  %v155 = vld [vmem:[%s0 + $0xb0] sm:$0xf]
  %v156 = vld [vmem:[%s0 + $0xb4] sm:$0xf]
  %v157 = vld [vmem:[%s0 + $0xb8] sm:$0xf]
  %v158 = vld [vmem:[%s0 + $0xbc] sm:$0xf]
  %v159 = vld [vmem:[%s0 + $0xc0] sm:$0xf]
  %v160 = vld [vmem:[%s0 + $0xc4] sm:$0xf]
  %v161 = vld [vmem:[%s0 + $0xc8] sm:$0xf]
  %v162 = vld [vmem:[%s0 + $0xcc] sm:$0xf]
  %v163 = vld [vmem:[%s0 + $0xd0] sm:$0xf]
  %v164 = vld [vmem:[%s0 + $0xd4] sm:$0xf]
  %v165 = vld [vmem:[%s0 + $0xd8] sm:$0xf]
  %v166 = vld [vmem:[%s0 + $0xdc] sm:$0xf]
  %v167 = vld [vmem:[%s0 + $0xe0] sm:$0xf]
  %v168 = vld [vmem:[%s0 + $0xe4] sm:$0xf]
  %v169 = vld [vmem:[%s0 + $0xe8] sm:$0xf]
  %v170 = vld [vmem:[%s0 + $0xec] sm:$0xf]
  %v171 = vld [vmem:[%s0 + $0xf0] sm:$0xf]
  %v172 = vld [vmem:[%s0 + $0xf4] sm:$0xf]
  %v173 = vld [vmem:[%s0 + $0xf8] sm:$0xf]
  %v174 = vld [vmem:[%s0 + $0xfc] sm:$0xf]
  %v175 = vld [vmem:[%s0 + $0x100] sm:$0xf]
  %v176 = vld [vmem:[%s0 + $0x104] sm:$0xf]
  %v177 = vld [vmem:[%s0 + $0x108] sm:$0xf]
  %v178 = vld [vmem:[%s0 + $0x10c] sm:$0xf]
  %v179 = vld [vmem:[%s0 + $0x110] sm:$0xf]
  %v180 = vld [vmem:[%s0 + $0x114] sm:$0xf]
  %v181 = vld [vmem:[%s0 + $0x118] sm:$0xf]
  %v182 = vld [vmem:[%s0 + $0x11c] sm:$0xf]
  %v183 = vld [vmem:[%s2] sm:$0xff]
  %v184 = vld [vmem:[%s2 + $0x8] sm:$0xff]
  %v185 = vld [vmem:[%s2 + $0x10] sm:$0xff]
  %v186 = vld [vmem:[%s2 + $0x18] sm:$0xff]
  %v187 = vld [vmem:[%s2 + $0x20] sm:$0xff]
  %v188 = vld [vmem:[%s2 + $0x28] sm:$0xff]
  %v189 = vld [vmem:[%s2 + $0x30] sm:$0xff]
  %v190 = vld [vmem:[%s2 + $0x38] sm:$0xff]
  %v191 = vld [vmem:[%s2 + $0x40] sm:$0xff]
  %v192 = vld [vmem:[%s2 + $0x48] sm:$0xff]
  %v193 = vld [vmem:[%s2 + $0x50] sm:$0xff]
  %v194 = vld [vmem:[%s2 + $0x58] sm:$0xff]
  %v195 = vld [vmem:[%s2 + $0x60] sm:$0xff]
  %v196 = vld [vmem:[%s2 + $0x68] sm:$0xff]
  %v197 = vld [vmem:[%s2 + $0x70] sm:$0xff]
  %v198 = vld [vmem:[%s2 + $0x78] sm:$0xff]
  %v199 = vld [vmem:[%s2 + $0x80] sm:$0xff]
  %v200 = vld [vmem:[%s2 + $0x88] sm:$0xff]
  %v201 = vld [vmem:[%s2 + $0x90] sm:$0xff]
  %v202 = vld [vmem:[%s2 + $0x98] sm:$0xff]
  %v203 = vld [vmem:[%s2 + $0xa0] sm:$0xff]
  %v204 = vld [vmem:[%s2 + $0xa8] sm:$0xff]
  %v205 = vld [vmem:[%s2 + $0xb0] sm:$0xff]
  %v206 = vld [vmem:[%s2 + $0xb8] sm:$0xff]
  %v207 = vld [vmem:[%s2 + $0xc0] sm:$0xff]
  %v208 = vld [vmem:[%s2 + $0xc8] sm:$0xff]
  %v209 = vld [vmem:[%s2 + $0xd0] sm:$0xff]
  %v210 = vld [vmem:[%s2 + $0xd8] sm:$0xff]
  %v211 = vld [vmem:[%s2 + $0xe0] sm:$0xff]
  %v212 = vld [vmem:[%s2 + $0xe8] sm:$0xff]
  %v213 = vld [vmem:[%s2 + $0xf0] sm:$0xff]
  %v214 = vld [vmem:[%s2 + $0xf8] sm:$0xff]
  %216 = vset.pattern.permute.xlu0 0
  %217 = vperm.xlu0 %216, %v183
  %v218 = vpop.permute.xlu0 %217
  %221 = vset.pattern.permute.xlu0 0
  %222 = vperm.xlu0 %221, %v184
  %v223 = vpop.permute.xlu0 %222
  %226 = vset.pattern.permute.xlu0 0
  %227 = vperm.xlu0 %226, %v185
  %v228 = vpop.permute.xlu0 %227
  %231 = vset.pattern.permute.xlu0 0
  %232 = vperm.xlu0 %231, %v186
  %v233 = vpop.permute.xlu0 %232
  %236 = vset.pattern.permute.xlu0 0
  %237 = vperm.xlu0 %236, %v187
  %v238 = vpop.permute.xlu0 %237
  %241 = vset.pattern.permute.xlu0 0
  %242 = vperm.xlu0 %241, %v188
  %v243 = vpop.permute.xlu0 %242
  %246 = vset.pattern.permute.xlu0 0
  %247 = vperm.xlu0 %246, %v189
  %v248 = vpop.permute.xlu0 %247
  %251 = vset.pattern.permute.xlu0 0
  %252 = vperm.xlu0 %251, %v190
  %v253 = vpop.permute.xlu0 %252
  %256 = vset.pattern.permute.xlu0 0
  %257 = vperm.xlu0 %256, %v191
  %v258 = vpop.permute.xlu0 %257
  %261 = vset.pattern.permute.xlu0 0
  %262 = vperm.xlu0 %261, %v192
  %v263 = vpop.permute.xlu0 %262
  %266 = vset.pattern.permute.xlu0 0
  %267 = vperm.xlu0 %266, %v193
  %v268 = vpop.permute.xlu0 %267
  %271 = vset.pattern.permute.xlu0 0
  %272 = vperm.xlu0 %271, %v194
  %v273 = vpop.permute.xlu0 %272
  %276 = vset.pattern.permute.xlu0 0
  %277 = vperm.xlu0 %276, %v195
  %v278 = vpop.permute.xlu0 %277
  %281 = vset.pattern.permute.xlu0 0
  %282 = vperm.xlu0 %281, %v196
  %v283 = vpop.permute.xlu0 %282
  %286 = vset.pattern.permute.xlu0 0
  %287 = vperm.xlu0 %286, %v197
  %v288 = vpop.permute.xlu0 %287
  %291 = vset.pattern.permute.xlu0 0
  %292 = vperm.xlu0 %291, %v198
  %v293 = vpop.permute.xlu0 %292
  %296 = vset.pattern.permute.xlu0 0
  %297 = vperm.xlu0 %296, %v199
  %v298 = vpop.permute.xlu0 %297
  %301 = vset.pattern.permute.xlu0 0
  %302 = vperm.xlu0 %301, %v200
  %v303 = vpop.permute.xlu0 %302
  %306 = vset.pattern.permute.xlu0 0
  %307 = vperm.xlu0 %306, %v201
  %v308 = vpop.permute.xlu0 %307
  %311 = vset.pattern.permute.xlu0 0
  %312 = vperm.xlu0 %311, %v202
  %v313 = vpop.permute.xlu0 %312
  %316 = vset.pattern.permute.xlu0 0
  %317 = vperm.xlu0 %316, %v203
  %v318 = vpop.permute.xlu0 %317
  %321 = vset.pattern.permute.xlu0 0
  %322 = vperm.xlu0 %321, %v204
  %v323 = vpop.permute.xlu0 %322
  %326 = vset.pattern.permute.xlu0 0
  %327 = vperm.xlu0 %326, %v205
  %v328 = vpop.permute.xlu0 %327
  %331 = vset.pattern.permute.xlu0 0
  %332 = vperm.xlu0 %331, %v206
  %v333 = vpop.permute.xlu0 %332
  %336 = vset.pattern.permute.xlu0 0
  %337 = vperm.xlu0 %336, %v207
  %v338 = vpop.permute.xlu0 %337
  %341 = vset.pattern.permute.xlu0 0
  %342 = vperm.xlu0 %341, %v208
  %v343 = vpop.permute.xlu0 %342
  %346 = vset.pattern.permute.xlu0 0
  %347 = vperm.xlu0 %346, %v209
  %v348 = vpop.permute.xlu0 %347
  %351 = vset.pattern.permute.xlu0 0
  %352 = vperm.xlu0 %351, %v210
  %v353 = vpop.permute.xlu0 %352
  %356 = vset.pattern.permute.xlu0 0
  %357 = vperm.xlu0 %356, %v211
  %v358 = vpop.permute.xlu0 %357
  %361 = vset.pattern.permute.xlu0 0
  %362 = vperm.xlu0 %361, %v212
  %v363 = vpop.permute.xlu0 %362
  %366 = vset.pattern.permute.xlu0 0
  %367 = vperm.xlu0 %366, %v213
  %v368 = vpop.permute.xlu0 %367
  %371 = vset.pattern.permute.xlu0 0
  %372 = vperm.xlu0 %371, %v214
  %v373 = vpop.permute.xlu0 %372
  %v471 = vunpack.c.l.b16 %v15
  %v472 = vunpack.c.h.b16 %v15
  %v473 = vunpack.c.l.b16 %v16
  %v474 = vunpack.c.h.b16 %v16
  %v475 = vunpack.c.l.b16 %v17
  %v476 = vunpack.c.l.b16 %v18
  %v477 = vunpack.c.h.b16 %v18
  %v478 = vunpack.c.l.b16 %v19
  %v479 = vunpack.c.h.b16 %v19
  %v480 = vunpack.c.l.b16 %v20
  %v481 = vunpack.c.l.b16 %v21
  %v482 = vunpack.c.h.b16 %v21
  %v483 = vunpack.c.l.b16 %v22
  %v484 = vunpack.c.h.b16 %v22
  %v485 = vunpack.c.l.b16 %v23
  %v486 = vunpack.c.l.b16 %v24
  %v487 = vunpack.c.h.b16 %v24
  %v488 = vunpack.c.l.b16 %v25
  %v489 = vunpack.c.h.b16 %v25
  %v490 = vunpack.c.l.b16 %v26
  %v491 = vunpack.c.l.b16 %v27
  %v492 = vunpack.c.h.b16 %v27
  %v493 = vunpack.c.l.b16 %v28
  %v494 = vunpack.c.h.b16 %v28
  %v495 = vunpack.c.l.b16 %v29
  %v496 = vunpack.c.l.b16 %v30
  %v497 = vunpack.c.h.b16 %v30
  %v498 = vunpack.c.l.b16 %v31
  %v499 = vunpack.c.h.b16 %v31
  %v500 = vunpack.c.l.b16 %v32
  %v501 = vunpack.c.l.b16 %v33
  %v502 = vunpack.c.h.b16 %v33
  %v503 = vunpack.c.l.b16 %v34
  %v504 = vunpack.c.h.b16 %v34
  %v505 = vunpack.c.l.b16 %v35
  %v506 = vunpack.c.l.b16 %v36
  %v507 = vunpack.c.h.b16 %v36
  %v508 = vunpack.c.l.b16 %v37
  %v509 = vunpack.c.h.b16 %v37
  %v510 = vunpack.c.l.b16 %v38
  %v511 = vunpack.c.l.b16 %v39
  %v512 = vunpack.c.h.b16 %v39
  %v513 = vunpack.c.l.b16 %v40
  %v514 = vunpack.c.h.b16 %v40
  %v515 = vunpack.c.l.b16 %v41
  %v516 = vunpack.c.l.b16 %v42
  %v517 = vunpack.c.h.b16 %v42
  %v518 = vunpack.c.l.b16 %v43
  %v519 = vunpack.c.h.b16 %v43
  %v520 = vunpack.c.l.b16 %v44
  %v521 = vunpack.c.l.b16 %v45
  %v522 = vunpack.c.h.b16 %v45
  %v523 = vunpack.c.l.b16 %v46
  %v524 = vunpack.c.h.b16 %v46
  %v525 = vunpack.c.l.b16 %v47
  %v526 = vunpack.c.l.b16 %v48
  %v527 = vunpack.c.h.b16 %v48
  %v528 = vunpack.c.l.b16 %v49
  %v529 = vunpack.c.h.b16 %v49
  %v530 = vunpack.c.l.b16 %v50
  %v531 = vunpack.c.l.b16 %v51
  %v532 = vunpack.c.h.b16 %v51
  %v533 = vunpack.c.l.b16 %v52
  %v534 = vunpack.c.h.b16 %v52
  %v535 = vunpack.c.l.b16 %v53
  %v536 = vunpack.c.l.b16 %v54
  %v537 = vunpack.c.h.b16 %v54
  %v538 = vunpack.c.l.b16 %v55
  %v539 = vunpack.c.h.b16 %v55
  %v540 = vunpack.c.l.b16 %v56
  %v541 = vunpack.c.l.b16 %v57
  %v542 = vunpack.c.h.b16 %v57
  %v543 = vunpack.c.l.b16 %v58
  %v544 = vunpack.c.h.b16 %v58
  %v545 = vunpack.c.l.b16 %v59
  %v546 = vunpack.c.l.b16 %v60
  %v547 = vunpack.c.h.b16 %v60
  %v548 = vunpack.c.l.b16 %v61
  %v549 = vunpack.c.h.b16 %v61
  %v550 = vunpack.c.l.b16 %v62
  %v551 = vunpack.c.l.b16 %v63
  %v552 = vunpack.c.h.b16 %v63
  %v553 = vunpack.c.l.b16 %v64
  %v554 = vunpack.c.h.b16 %v64
  %v555 = vunpack.c.l.b16 %v65
  %v556 = vunpack.c.l.b16 %v66
  %v557 = vunpack.c.h.b16 %v66
  %v558 = vunpack.c.l.b16 %v67
  %v559 = vunpack.c.h.b16 %v67
  %v560 = vunpack.c.l.b16 %v68
  %v561 = vunpack.c.l.b16 %v69
  %v562 = vunpack.c.h.b16 %v69
  %v563 = vunpack.c.l.b16 %v70
  %v564 = vunpack.c.h.b16 %v70
  %v565 = vunpack.c.l.b16 %v71
  %v566 = vunpack.c.l.b16 %v72
  %v567 = vunpack.c.h.b16 %v72
  %v568 = vunpack.c.l.b16 %v73
  %v569 = vunpack.c.h.b16 %v73
  %v570 = vunpack.c.l.b16 %v74
  %v571 = vunpack.c.l.b16 %v75
  %v572 = vunpack.c.h.b16 %v75
  %v573 = vunpack.c.l.b16 %v76
  %v574 = vunpack.c.h.b16 %v76
  %v575 = vunpack.c.l.b16 %v77
  %v576 = vunpack.c.l.b16 %v78
  %v577 = vunpack.c.h.b16 %v78
  %v578 = vunpack.c.l.b16 %v79
  %v579 = vunpack.c.h.b16 %v79
  %v580 = vunpack.c.l.b16 %v80
  %v581 = vunpack.c.l.b16 %v81
  %v582 = vunpack.c.h.b16 %v81
  %v583 = vunpack.c.l.b16 %v82
  %v584 = vunpack.c.h.b16 %v82
  %v585 = vunpack.c.l.b16 %v83
  %v586 = vunpack.c.l.b16 %v84
  %v587 = vunpack.c.h.b16 %v84
  %v588 = vunpack.c.l.b16 %v85
  %v589 = vunpack.c.h.b16 %v85
  %v590 = vunpack.c.l.b16 %v86
  %v591 = vunpack.c.l.b16 %v87
  %v592 = vunpack.c.h.b16 %v87
  %v593 = vunpack.c.l.b16 %v88
  %v594 = vunpack.c.h.b16 %v88
  %v595 = vunpack.c.l.b16 %v89
  %v596 = vunpack.c.l.b16 %v90
  %v597 = vunpack.c.h.b16 %v90
  %v598 = vunpack.c.l.b16 %v91
  %v599 = vunpack.c.h.b16 %v91
  %v600 = vunpack.c.l.b16 %v92
  %v601 = vunpack.c.l.b16 %v93
  %v602 = vunpack.c.h.b16 %v93
  %v603 = vunpack.c.l.b16 %v94
  %v604 = vunpack.c.h.b16 %v94
  %v605 = vunpack.c.l.b16 %v95
  %v606 = vunpack.c.l.b16 %v96
  %v607 = vunpack.c.h.b16 %v96
  %v608 = vunpack.c.l.b16 %v97
  %v609 = vunpack.c.h.b16 %v97
  %v610 = vunpack.c.l.b16 %v98
  %v611 = vunpack.c.l.b16 %v99
  %v612 = vunpack.c.h.b16 %v99
  %v613 = vunpack.c.l.b16 %v100
  %v614 = vunpack.c.h.b16 %v100
  %v615 = vunpack.c.l.b16 %v101
  %v616 = vunpack.c.l.b16 %v102
  %v617 = vunpack.c.h.b16 %v102
  %v618 = vunpack.c.l.b16 %v103
  %v619 = vunpack.c.h.b16 %v103
  %v620 = vunpack.c.l.b16 %v104
  %v621 = vunpack.c.l.b16 %v105
  %v622 = vunpack.c.h.b16 %v105
  %v623 = vunpack.c.l.b16 %v106
  %v624 = vunpack.c.h.b16 %v106
  %v625 = vunpack.c.l.b16 %v107
  %v626 = vunpack.c.l.b16 %v108
  %v627 = vunpack.c.h.b16 %v108
  %v628 = vunpack.c.l.b16 %v109
  %v629 = vunpack.c.h.b16 %v109
  %v630 = vunpack.c.l.b16 %v110
  %v631 = vpack.c.b16 %v476, %v471
  %v632 = vpack.c.b16 %v477, %v472
  %v633 = vpack.c.b16 %v478, %v473
  %v634 = vpack.c.b16 %v479, %v474
  %v635 = vpack.c.b16 %v480, %v475
  %v636 = vpack.c.b16 %v486, %v481
  %v637 = vpack.c.b16 %v487, %v482
  %v638 = vpack.c.b16 %v488, %v483
  %v639 = vpack.c.b16 %v489, %v484
  %v640 = vpack.c.b16 %v490, %v485
  %v641 = vpack.c.b16 %v496, %v491
  %v642 = vpack.c.b16 %v497, %v492
  %v643 = vpack.c.b16 %v498, %v493
  %v644 = vpack.c.b16 %v499, %v494
  %v645 = vpack.c.b16 %v500, %v495
  %v646 = vpack.c.b16 %v506, %v501
  %v647 = vpack.c.b16 %v507, %v502
  %v648 = vpack.c.b16 %v508, %v503
  %v649 = vpack.c.b16 %v509, %v504
  %v650 = vpack.c.b16 %v510, %v505
  %v651 = vpack.c.b16 %v516, %v511
  %v652 = vpack.c.b16 %v517, %v512
  %v653 = vpack.c.b16 %v518, %v513
  %v654 = vpack.c.b16 %v519, %v514
  %v655 = vpack.c.b16 %v520, %v515
  %v656 = vpack.c.b16 %v526, %v521
  %v657 = vpack.c.b16 %v527, %v522
  %v658 = vpack.c.b16 %v528, %v523
  %v659 = vpack.c.b16 %v529, %v524
  %v660 = vpack.c.b16 %v530, %v525
  %v661 = vpack.c.b16 %v536, %v531
  %v662 = vpack.c.b16 %v537, %v532
  %v663 = vpack.c.b16 %v538, %v533
  %v664 = vpack.c.b16 %v539, %v534
  %v665 = vpack.c.b16 %v540, %v535
  %v666 = vpack.c.b16 %v546, %v541
  %v667 = vpack.c.b16 %v547, %v542
  %v668 = vpack.c.b16 %v548, %v543
  %v669 = vpack.c.b16 %v549, %v544
  %v670 = vpack.c.b16 %v550, %v545
  %v671 = vpack.c.b16 %v556, %v551
  %v672 = vpack.c.b16 %v557, %v552
  %v673 = vpack.c.b16 %v558, %v553
  %v674 = vpack.c.b16 %v559, %v554
  %v675 = vpack.c.b16 %v560, %v555
  %v676 = vpack.c.b16 %v566, %v561
  %v677 = vpack.c.b16 %v567, %v562
  %v678 = vpack.c.b16 %v568, %v563
  %v679 = vpack.c.b16 %v569, %v564
  %v680 = vpack.c.b16 %v570, %v565
  %v681 = vpack.c.b16 %v576, %v571
  %v682 = vpack.c.b16 %v577, %v572
  %v683 = vpack.c.b16 %v578, %v573
  %v684 = vpack.c.b16 %v579, %v574
  %v685 = vpack.c.b16 %v580, %v575
  %v686 = vpack.c.b16 %v586, %v581
  %v687 = vpack.c.b16 %v587, %v582
  %v688 = vpack.c.b16 %v588, %v583
  %v689 = vpack.c.b16 %v589, %v584
  %v690 = vpack.c.b16 %v590, %v585
  %v691 = vpack.c.b16 %v596, %v591
  %v692 = vpack.c.b16 %v597, %v592
  %v693 = vpack.c.b16 %v598, %v593
  %v694 = vpack.c.b16 %v599, %v594
  %v695 = vpack.c.b16 %v600, %v595
  %v696 = vpack.c.b16 %v606, %v601
  %v697 = vpack.c.b16 %v607, %v602
  %v698 = vpack.c.b16 %v608, %v603
  %v699 = vpack.c.b16 %v609, %v604
  %v700 = vpack.c.b16 %v610, %v605
  %v701 = vpack.c.b16 %v616, %v611
  %v702 = vpack.c.b16 %v617, %v612
  %v703 = vpack.c.b16 %v618, %v613
  %v704 = vpack.c.b16 %v619, %v614
  %v705 = vpack.c.b16 %v620, %v615
  %v706 = vpack.c.b16 %v626, %v621
  %v707 = vpack.c.b16 %v627, %v622
  %v708 = vpack.c.b16 %v628, %v623
  %v709 = vpack.c.b16 %v629, %v624
  %v710 = vpack.c.b16 %v630, %v625
  %v847 = vunpack.c.l.b16 %v111
  %v848 = vunpack.c.l.b16 %v112
  %v849 = vunpack.c.l.b16 %v113
  %v850 = vunpack.c.l.b16 %v114
  %v851 = vunpack.c.l.b16 %v115
  %v852 = vunpack.c.l.b16 %v116
  %v853 = vunpack.c.l.b16 %v117
  %v854 = vunpack.c.l.b16 %v118
  %v855 = vunpack.c.l.b16 %v119
  %v856 = vunpack.c.l.b16 %v120
  %v857 = vunpack.c.l.b16 %v121
  %v858 = vunpack.c.l.b16 %v122
  %v859 = vunpack.c.l.b16 %v123
  %v860 = vunpack.c.l.b16 %v124
  %v861 = vunpack.c.l.b16 %v125
  %v862 = vunpack.c.l.b16 %v126
  %v863 = vunpack.c.l.b16 %v127
  %v864 = vunpack.c.l.b16 %v128
  %v865 = vunpack.c.l.b16 %v129
  %v866 = vunpack.c.l.b16 %v130
  %v867 = vunpack.c.l.b16 %v131
  %v868 = vunpack.c.l.b16 %v132
  %v869 = vunpack.c.l.b16 %v133
  %v870 = vunpack.c.l.b16 %v134
  %v871 = vunpack.c.l.b16 %v135
  %v872 = vunpack.c.l.b16 %v136
  %v873 = vunpack.c.l.b16 %v137
  %v874 = vunpack.c.l.b16 %v138
  %v875 = vunpack.c.l.b16 %v139
  %v876 = vunpack.c.l.b16 %v140
  %v877 = vunpack.c.l.b16 %v141
  %v878 = vunpack.c.l.b16 %v142
  %v879 = vunpack.c.l.b16 %v143
  %v880 = vunpack.c.l.b16 %v144
  %v881 = vunpack.c.l.b16 %v145
  %v882 = vunpack.c.l.b16 %v146
  %v883 = vunpack.c.l.b16 %v147
  %v884 = vunpack.c.l.b16 %v148
  %v885 = vunpack.c.l.b16 %v149
  %v886 = vunpack.c.l.b16 %v150
  %v887 = vunpack.c.l.b16 %v151
  %v888 = vunpack.c.l.b16 %v152
  %v889 = vunpack.c.l.b16 %v153
  %v890 = vunpack.c.l.b16 %v154
  %v891 = vunpack.c.l.b16 %v155
  %v892 = vunpack.c.l.b16 %v156
  %v893 = vunpack.c.l.b16 %v157
  %v894 = vunpack.c.l.b16 %v158
  %v895 = vunpack.c.l.b16 %v159
  %v896 = vunpack.c.l.b16 %v160
  %v897 = vunpack.c.l.b16 %v161
  %v898 = vunpack.c.l.b16 %v162
  %v899 = vunpack.c.l.b16 %v163
  %v900 = vunpack.c.l.b16 %v164
  %v901 = vunpack.c.l.b16 %v165
  %v902 = vunpack.c.l.b16 %v166
  %v903 = vunpack.c.l.b16 %v167
  %v904 = vunpack.c.l.b16 %v168
  %v905 = vunpack.c.l.b16 %v169
  %v906 = vunpack.c.l.b16 %v170
  %v907 = vunpack.c.l.b16 %v171
  %v908 = vunpack.c.l.b16 %v172
  %v909 = vunpack.c.l.b16 %v173
  %v910 = vunpack.c.l.b16 %v174
  %v911 = vunpack.c.l.b16 %v175
  %v912 = vunpack.c.l.b16 %v176
  %v913 = vunpack.c.l.b16 %v177
  %v914 = vunpack.c.l.b16 %v178
  %v915 = vunpack.c.l.b16 %v179
  %v916 = vunpack.c.l.b16 %v180
  %v917 = vunpack.c.l.b16 %v181
  %v918 = vunpack.c.l.b16 %v182
  %v919 = vpack.c.b16 %v848, %v847
  %v920 = vpack.c.b16 %v850, %v849
  %v921 = vpack.c.b16 %v852, %v851
  %v922 = vpack.c.b16 %v854, %v853
  %v923 = vpack.c.b16 %v856, %v855
  %v924 = vpack.c.b16 %v858, %v857
  %v925 = vpack.c.b16 %v860, %v859
  %v926 = vpack.c.b16 %v862, %v861
  %v927 = vpack.c.b16 %v864, %v863
  %v928 = vpack.c.b16 %v866, %v865
  %v929 = vpack.c.b16 %v868, %v867
  %v930 = vpack.c.b16 %v870, %v869
  %v931 = vpack.c.b16 %v872, %v871
  %v932 = vpack.c.b16 %v874, %v873
  %v933 = vpack.c.b16 %v876, %v875
  %v934 = vpack.c.b16 %v878, %v877
  %v935 = vpack.c.b16 %v880, %v879
  %v936 = vpack.c.b16 %v882, %v881
  %v937 = vpack.c.b16 %v884, %v883
  %v938 = vpack.c.b16 %v886, %v885
  %v939 = vpack.c.b16 %v888, %v887
  %v940 = vpack.c.b16 %v890, %v889
  %v941 = vpack.c.b16 %v892, %v891
  %v942 = vpack.c.b16 %v894, %v893
  %v943 = vpack.c.b16 %v896, %v895
  %v944 = vpack.c.b16 %v898, %v897
  %v945 = vpack.c.b16 %v900, %v899
  %v946 = vpack.c.b16 %v902, %v901
  %v947 = vpack.c.b16 %v904, %v903
  %v948 = vpack.c.b16 %v906, %v905
  %v949 = vpack.c.b16 %v908, %v907
  %v950 = vpack.c.b16 %v910, %v909
  %v951 = vpack.c.b16 %v912, %v911
  %v952 = vpack.c.b16 %v914, %v913
  %v953 = vpack.c.b16 %v916, %v915
  %v954 = vpack.c.b16 %v918, %v917
  %vm991 = vcmask 523264
  %v993 = vsel %vm991, %v635, 0
  %v996 = vsel %vm991, %v640, 0
  %v999 = vsel %vm991, %v645, 0
  %v1002 = vsel %vm991, %v650, 0
  %v1005 = vsel %vm991, %v655, 0
  %v1008 = vsel %vm991, %v660, 0
  %v1011 = vsel %vm991, %v665, 0
  %v1014 = vsel %vm991, %v670, 0
  %v1017 = vsel %vm991, %v675, 0
  %v1020 = vsel %vm991, %v680, 0
  %v1023 = vsel %vm991, %v685, 0
  %v1026 = vsel %vm991, %v690, 0
  %v1029 = vsel %vm991, %v695, 0
  %v1032 = vsel %vm991, %v700, 0
  %v1035 = vsel %vm991, %v705, 0
  %v1038 = vsel %vm991, %v710, 0
  %1040 = vmatprep.subr.bf16.mxu0 0
  %1041 = vmatpush1.bf16.msra.mxu0 %v919
  %1042 = vmatprep.subr.bf16.mxu0 0
  %1043 = vmatpush1.bf16.msra.mxu0 %v920
  %1044 = vmatprep.subr.bf16.mxu0 0
  %1045 = vmatpush1.bf16.msra.mxu0 %v921
  %1046 = vmatprep.subr.bf16.mxu0 0
  %1047 = vmatpush1.bf16.msra.mxu0 %v922
  %1048 = vmatprep.subr.bf16.mxu0 0
  %1049 = vmatpush1.bf16.msra.mxu0 %v923
  %1050 = vmatprep.subr.bf16.mxu0 0
  %1051 = vmatpush1.bf16.msra.mxu0 %v924
  %1052 = vmatprep.subr.bf16.mxu0 0
  %1053 = vmatpush1.bf16.msra.mxu0 %v925
  %1054 = vmatprep.subr.bf16.mxu0 0
  %1055 = vmatpush1.bf16.msra.mxu0 %v926
  %1056 = vmatprep.subr.bf16.mxu0 0
  %1057 = vmatpush1.bf16.msra.mxu0 %v927
  %1058 = vmatprep.subr.bf16.mxu0 0
  %1059 = vmatpush1.bf16.msra.mxu0 %v928
  %1060 = vmatprep.subr.bf16.mxu0 0
  %1061 = vmatpush1.bf16.msra.mxu0 %v929
  %1062 = vmatprep.subr.bf16.mxu0 0
  %1063 = vmatpush1.bf16.msra.mxu0 %v930
  %1064 = vmatprep.subr.bf16.mxu0 0
  %1065 = vmatpush1.bf16.msra.mxu0 %v931
  %1066 = vmatprep.subr.bf16.mxu0 0
  %1067 = vmatpush1.bf16.msra.mxu0 %v932
  %1068 = vmatprep.subr.bf16.mxu0 0
  %1069 = vmatpush1.bf16.msra.mxu0 %v933
  %1070 = vmatprep.subr.bf16.mxu0 0
  %1071 = vmatpush1.bf16.msra.mxu0 %v934
  %1072 = vmatprep.mubr.bf16.mxu0 %v632
  %1073 = vmatmul.mubr.bf16.gmra.mrb[0].mxu0 %v631
  %v1074 = vpop.f32.mrb[0].mxu0
  %v1075 = vadd.f32 %v218, %v1074
  %v1076 = vpop.f32.mrb[0].mxu0
  %v1077 = vpop.f32.mrb[0].mxu0
  %v1078 = vadd.f32 %v223, %v1077
  %v1079 = vpop.f32.mrb[0].mxu0
  %1080 = vmatprep.mubr.bf16.mxu0 %v637
  %1081 = vmatmul.mubr.bf16.gmra.mrb[0].mxu0 %v636
  %v1082 = vpop.f32.mrb[0].mxu0
  %v1083 = vadd.f32 %v228, %v1082
  %v1084 = vpop.f32.mrb[0].mxu0
  %v1085 = vpop.f32.mrb[0].mxu0
  %v1086 = vadd.f32 %v233, %v1085
  %v1087 = vpop.f32.mrb[0].mxu0
  %1088 = vmatprep.mubr.bf16.mxu0 %v642
  %1089 = vmatmul.mubr.bf16.gmra.mrb[0].mxu0 %v641
  %v1090 = vpop.f32.mrb[0].mxu0
  %v1091 = vadd.f32 %v238, %v1090
  %v1092 = vpop.f32.mrb[0].mxu0
  %v1093 = vpop.f32.mrb[0].mxu0
  %v1094 = vadd.f32 %v243, %v1093
  %v1095 = vpop.f32.mrb[0].mxu0
  %1096 = vmatprep.mubr.bf16.mxu0 %v647
  %1097 = vmatmul.mubr.bf16.gmra.mrb[0].mxu0 %v646
  %v1098 = vpop.f32.mrb[0].mxu0
  %v1099 = vadd.f32 %v248, %v1098
  %v1100 = vpop.f32.mrb[0].mxu0
  %v1101 = vpop.f32.mrb[0].mxu0
  %v1102 = vadd.f32 %v253, %v1101
  %v1103 = vpop.f32.mrb[0].mxu0
  %1104 = vmatprep.mubr.bf16.mxu0 %v652
  %1105 = vmatmul.mubr.bf16.gmra.mrb[0].mxu0 %v651
  %v1106 = vpop.f32.mrb[0].mxu0
  %v1107 = vadd.f32 %v258, %v1106
  %v1108 = vpop.f32.mrb[0].mxu0
  %v1109 = vpop.f32.mrb[0].mxu0
  %v1110 = vadd.f32 %v263, %v1109
  %v1111 = vpop.f32.mrb[0].mxu0
  %1112 = vmatprep.mubr.bf16.mxu0 %v657
  %1113 = vmatmul.mubr.bf16.gmra.mrb[0].mxu0 %v656
  %v1114 = vpop.f32.mrb[0].mxu0
  %v1115 = vadd.f32 %v268, %v1114
  %v1116 = vpop.f32.mrb[0].mxu0
  %v1117 = vpop.f32.mrb[0].mxu0
  %v1118 = vadd.f32 %v273, %v1117
  %v1119 = vpop.f32.mrb[0].mxu0
  %1120 = vmatprep.mubr.bf16.mxu0 %v662
  %1121 = vmatmul.mubr.bf16.gmra.mrb[0].mxu0 %v661
  %v1122 = vpop.f32.mrb[0].mxu0
  %v1123 = vadd.f32 %v278, %v1122
  %v1124 = vpop.f32.mrb[0].mxu0
  %v1125 = vpop.f32.mrb[0].mxu0
  %v1126 = vadd.f32 %v283, %v1125
  %v1127 = vpop.f32.mrb[0].mxu0
  %1128 = vmatprep.mubr.bf16.mxu0 %v667
  %1129 = vmatmul.mubr.bf16.gmra.mrb[0].mxu0 %v666
  %v1130 = vpop.f32.mrb[0].mxu0
  %v1131 = vadd.f32 %v288, %v1130
  %v1132 = vpop.f32.mrb[0].mxu0
  %v1133 = vpop.f32.mrb[0].mxu0
  %v1134 = vadd.f32 %v293, %v1133
  %v1135 = vpop.f32.mrb[0].mxu0
  %1136 = vmatprep.mubr.bf16.mxu0 %v672
  %1137 = vmatmul.mubr.bf16.gmra.mrb[0].mxu0 %v671
  %v1138 = vpop.f32.mrb[0].mxu0
  %v1139 = vadd.f32 %v298, %v1138
  %v1140 = vpop.f32.mrb[0].mxu0
  %v1141 = vpop.f32.mrb[0].mxu0
  %v1142 = vadd.f32 %v303, %v1141
  %v1143 = vpop.f32.mrb[0].mxu0
  %1144 = vmatprep.mubr.bf16.mxu0 %v677
  %1145 = vmatmul.mubr.bf16.gmra.mrb[0].mxu0 %v676
  %v1146 = vpop.f32.mrb[0].mxu0
  %v1147 = vadd.f32 %v308, %v1146
  %v1148 = vpop.f32.mrb[0].mxu0
  %v1149 = vpop.f32.mrb[0].mxu0
  %v1150 = vadd.f32 %v313, %v1149
  %v1151 = vpop.f32.mrb[0].mxu0
  %1152 = vmatprep.mubr.bf16.mxu0 %v682
  %1153 = vmatmul.mubr.bf16.gmra.mrb[0].mxu0 %v681
  %v1154 = vpop.f32.mrb[0].mxu0
  %v1155 = vadd.f32 %v318, %v1154
  %v1156 = vpop.f32.mrb[0].mxu0
  %v1157 = vpop.f32.mrb[0].mxu0
  %v1158 = vadd.f32 %v323, %v1157
  %v1159 = vpop.f32.mrb[0].mxu0
  %1160 = vmatprep.mubr.bf16.mxu0 %v687
  %1161 = vmatmul.mubr.bf16.gmra.mrb[0].mxu0 %v686
  %v1162 = vpop.f32.mrb[0].mxu0
  %v1163 = vadd.f32 %v328, %v1162
  %v1164 = vpop.f32.mrb[0].mxu0
  %v1165 = vpop.f32.mrb[0].mxu0
  %v1166 = vadd.f32 %v333, %v1165
  %v1167 = vpop.f32.mrb[0].mxu0
  %1168 = vmatprep.mubr.bf16.mxu0 %v692
  %1169 = vmatmul.mubr.bf16.gmra.mrb[0].mxu0 %v691
  %v1170 = vpop.f32.mrb[0].mxu0
  %v1171 = vadd.f32 %v338, %v1170
  %v1172 = vpop.f32.mrb[0].mxu0
  %v1173 = vpop.f32.mrb[0].mxu0
  %v1174 = vadd.f32 %v343, %v1173
  %v1175 = vpop.f32.mrb[0].mxu0
  %1176 = vmatprep.mubr.bf16.mxu0 %v697
  %1177 = vmatmul.mubr.bf16.gmra.mrb[0].mxu0 %v696
  %v1178 = vpop.f32.mrb[0].mxu0
  %v1179 = vadd.f32 %v348, %v1178
  %v1180 = vpop.f32.mrb[0].mxu0
  %v1181 = vpop.f32.mrb[0].mxu0
  %v1182 = vadd.f32 %v353, %v1181
  %v1183 = vpop.f32.mrb[0].mxu0
  %1184 = vmatprep.mubr.bf16.mxu0 %v702
  %1185 = vmatmul.mubr.bf16.gmra.mrb[0].mxu0 %v701
  %v1186 = vpop.f32.mrb[0].mxu0
  %v1187 = vadd.f32 %v358, %v1186
  %v1188 = vpop.f32.mrb[0].mxu0
  %v1189 = vpop.f32.mrb[0].mxu0
  %v1190 = vadd.f32 %v363, %v1189
  %v1191 = vpop.f32.mrb[0].mxu0
  %1192 = vmatprep.mubr.bf16.mxu0 %v707
  %1193 = vmatmul.mubr.bf16.gmra.mrb[0].mxu0 %v706
  %v1194 = vpop.f32.mrb[0].mxu0
  %v1195 = vadd.f32 %v368, %v1194
  %v1196 = vpop.f32.mrb[0].mxu0
  %v1197 = vpop.f32.mrb[0].mxu0
  %v1198 = vadd.f32 %v373, %v1197
  %v1199 = vpop.f32.mrb[0].mxu0
  %1200 = vdwg.mxu0
  %1201 = vmatprep.subr.bf16.mxu0 0
  %1202 = vmatpush1.bf16.msra.mxu0 %v935
  %1203 = vmatprep.subr.bf16.mxu0 0
  %1204 = vmatpush1.bf16.msra.mxu0 %v936
  %1205 = vmatprep.subr.bf16.mxu0 0
  %1206 = vmatpush1.bf16.msra.mxu0 %v937
  %1207 = vmatprep.subr.bf16.mxu0 0
  %1208 = vmatpush1.bf16.msra.mxu0 %v938
  %1209 = vmatprep.subr.bf16.mxu0 0
  %1210 = vmatpush1.bf16.msra.mxu0 %v939
  %1211 = vmatprep.subr.bf16.mxu0 0
  %1212 = vmatpush1.bf16.msra.mxu0 %v940
  %1213 = vmatprep.subr.bf16.mxu0 0
  %1214 = vmatpush1.bf16.msra.mxu0 %v941
  %1215 = vmatprep.subr.bf16.mxu0 0
  %1216 = vmatpush1.bf16.msra.mxu0 %v942
  %1217 = vmatprep.subr.bf16.mxu0 0
  %1218 = vmatpush1.bf16.msra.mxu0 %v943
  %1219 = vmatprep.subr.bf16.mxu0 0
  %1220 = vmatpush1.bf16.msra.mxu0 %v944
  %1221 = vmatprep.subr.bf16.mxu0 0
  %1222 = vmatpush1.bf16.msra.mxu0 %v945
  %1223 = vmatprep.subr.bf16.mxu0 0
  %1224 = vmatpush1.bf16.msra.mxu0 %v946
  %1225 = vmatprep.subr.bf16.mxu0 0
  %1226 = vmatpush1.bf16.msra.mxu0 %v947
  %1227 = vmatprep.subr.bf16.mxu0 0
  %1228 = vmatpush1.bf16.msra.mxu0 %v948
  %1229 = vmatprep.subr.bf16.mxu0 0
  %1230 = vmatpush1.bf16.msra.mxu0 %v949
  %1231 = vmatprep.subr.bf16.mxu0 0
  %1232 = vmatpush1.bf16.msra.mxu0 %v950
  %1233 = vmatprep.mubr.bf16.mxu0 %v634
  %1234 = vmatmul.mubr.bf16.gmra.mrb[0].mxu0 %v633
  %v1235 = vpop.f32.mrb[0].mxu0
  %v1236 = vadd.f32 %v1075, %v1235
  %v1237 = vpop.f32.mrb[0].mxu0
  %v1238 = vpop.f32.mrb[0].mxu0
  %v1239 = vadd.f32 %v1078, %v1238
  %v1240 = vpop.f32.mrb[0].mxu0
  %1241 = vmatprep.mubr.bf16.mxu0 %v639
  %1242 = vmatmul.mubr.bf16.gmra.mrb[0].mxu0 %v638
  %v1243 = vpop.f32.mrb[0].mxu0
  %v1244 = vadd.f32 %v1083, %v1243
  %v1245 = vpop.f32.mrb[0].mxu0
  %v1246 = vpop.f32.mrb[0].mxu0
  %v1247 = vadd.f32 %v1086, %v1246
  %v1248 = vpop.f32.mrb[0].mxu0
  %1249 = vmatprep.mubr.bf16.mxu0 %v644
  %1250 = vmatmul.mubr.bf16.gmra.mrb[0].mxu0 %v643
  %v1251 = vpop.f32.mrb[0].mxu0
  %v1252 = vadd.f32 %v1091, %v1251
  %v1253 = vpop.f32.mrb[0].mxu0
  %v1254 = vpop.f32.mrb[0].mxu0
  %v1255 = vadd.f32 %v1094, %v1254
  %v1256 = vpop.f32.mrb[0].mxu0
  %1257 = vmatprep.mubr.bf16.mxu0 %v649
  %1258 = vmatmul.mubr.bf16.gmra.mrb[0].mxu0 %v648
  %v1259 = vpop.f32.mrb[0].mxu0
  %v1260 = vadd.f32 %v1099, %v1259
  %v1261 = vpop.f32.mrb[0].mxu0
  %v1262 = vpop.f32.mrb[0].mxu0
  %v1263 = vadd.f32 %v1102, %v1262
  %v1264 = vpop.f32.mrb[0].mxu0
  %1265 = vmatprep.mubr.bf16.mxu0 %v654
  %1266 = vmatmul.mubr.bf16.gmra.mrb[0].mxu0 %v653
  %v1267 = vpop.f32.mrb[0].mxu0
  %v1268 = vadd.f32 %v1107, %v1267
  %v1269 = vpop.f32.mrb[0].mxu0
  %v1270 = vpop.f32.mrb[0].mxu0
  %v1271 = vadd.f32 %v1110, %v1270
  %v1272 = vpop.f32.mrb[0].mxu0
  %1273 = vmatprep.mubr.bf16.mxu0 %v659
  %1274 = vmatmul.mubr.bf16.gmra.mrb[0].mxu0 %v658
  %v1275 = vpop.f32.mrb[0].mxu0
  %v1276 = vadd.f32 %v1115, %v1275
  %v1277 = vpop.f32.mrb[0].mxu0
  %v1278 = vpop.f32.mrb[0].mxu0
  %v1279 = vadd.f32 %v1118, %v1278
  %v1280 = vpop.f32.mrb[0].mxu0
  %1281 = vmatprep.mubr.bf16.mxu0 %v664
  %1282 = vmatmul.mubr.bf16.gmra.mrb[0].mxu0 %v663
  %v1283 = vpop.f32.mrb[0].mxu0
  %v1284 = vadd.f32 %v1123, %v1283
  %v1285 = vpop.f32.mrb[0].mxu0
  %v1286 = vpop.f32.mrb[0].mxu0
  %v1287 = vadd.f32 %v1126, %v1286
  %v1288 = vpop.f32.mrb[0].mxu0
  %1289 = vmatprep.mubr.bf16.mxu0 %v669
  %1290 = vmatmul.mubr.bf16.gmra.mrb[0].mxu0 %v668
  %v1291 = vpop.f32.mrb[0].mxu0
  %v1292 = vadd.f32 %v1131, %v1291
  %v1293 = vpop.f32.mrb[0].mxu0
  %v1294 = vpop.f32.mrb[0].mxu0
  %v1295 = vadd.f32 %v1134, %v1294
  %v1296 = vpop.f32.mrb[0].mxu0
  %1297 = vmatprep.mubr.bf16.mxu0 %v674
  %1298 = vmatmul.mubr.bf16.gmra.mrb[0].mxu0 %v673
  %v1299 = vpop.f32.mrb[0].mxu0
  %v1300 = vadd.f32 %v1139, %v1299
  %v1301 = vpop.f32.mrb[0].mxu0
  %v1302 = vpop.f32.mrb[0].mxu0
  %v1303 = vadd.f32 %v1142, %v1302
  %v1304 = vpop.f32.mrb[0].mxu0
  %1305 = vmatprep.mubr.bf16.mxu0 %v679
  %1306 = vmatmul.mubr.bf16.gmra.mrb[0].mxu0 %v678
  %v1307 = vpop.f32.mrb[0].mxu0
  %v1308 = vadd.f32 %v1147, %v1307
  %v1309 = vpop.f32.mrb[0].mxu0
  %v1310 = vpop.f32.mrb[0].mxu0
  %v1311 = vadd.f32 %v1150, %v1310
  %v1312 = vpop.f32.mrb[0].mxu0
  %1313 = vmatprep.mubr.bf16.mxu0 %v684
  %1314 = vmatmul.mubr.bf16.gmra.mrb[0].mxu0 %v683
  %v1315 = vpop.f32.mrb[0].mxu0
  %v1316 = vadd.f32 %v1155, %v1315
  %v1317 = vpop.f32.mrb[0].mxu0
  %v1318 = vpop.f32.mrb[0].mxu0
  %v1319 = vadd.f32 %v1158, %v1318
  %v1320 = vpop.f32.mrb[0].mxu0
  %1321 = vmatprep.mubr.bf16.mxu0 %v689
  %1322 = vmatmul.mubr.bf16.gmra.mrb[0].mxu0 %v688
  %v1323 = vpop.f32.mrb[0].mxu0
  %v1324 = vadd.f32 %v1163, %v1323
  %v1325 = vpop.f32.mrb[0].mxu0
  %v1326 = vpop.f32.mrb[0].mxu0
  %v1327 = vadd.f32 %v1166, %v1326
  %v1328 = vpop.f32.mrb[0].mxu0
  %1329 = vmatprep.mubr.bf16.mxu0 %v694
  %1330 = vmatmul.mubr.bf16.gmra.mrb[0].mxu0 %v693
  %v1331 = vpop.f32.mrb[0].mxu0
  %v1332 = vadd.f32 %v1171, %v1331
  %v1333 = vpop.f32.mrb[0].mxu0
  %v1334 = vpop.f32.mrb[0].mxu0
  %v1335 = vadd.f32 %v1174, %v1334
  %v1336 = vpop.f32.mrb[0].mxu0
  %1337 = vmatprep.mubr.bf16.mxu0 %v699
  %1338 = vmatmul.mubr.bf16.gmra.mrb[0].mxu0 %v698
  %v1339 = vpop.f32.mrb[0].mxu0
  %v1340 = vadd.f32 %v1179, %v1339
  %v1341 = vpop.f32.mrb[0].mxu0
  %v1342 = vpop.f32.mrb[0].mxu0
  %v1343 = vadd.f32 %v1182, %v1342
  %v1344 = vpop.f32.mrb[0].mxu0
  %1345 = vmatprep.mubr.bf16.mxu0 %v704
  %1346 = vmatmul.mubr.bf16.gmra.mrb[0].mxu0 %v703
  %v1347 = vpop.f32.mrb[0].mxu0
  %v1348 = vadd.f32 %v1187, %v1347
  %v1349 = vpop.f32.mrb[0].mxu0
  %v1350 = vpop.f32.mrb[0].mxu0
  %v1351 = vadd.f32 %v1190, %v1350
  %v1352 = vpop.f32.mrb[0].mxu0
  %1353 = vmatprep.mubr.bf16.mxu0 %v709
  %1354 = vmatmul.mubr.bf16.gmra.mrb[0].mxu0 %v708
  %v1355 = vpop.f32.mrb[0].mxu0
  %v1356 = vadd.f32 %v1195, %v1355
  %v1357 = vpop.f32.mrb[0].mxu0
  %v1358 = vpop.f32.mrb[0].mxu0
  %v1359 = vadd.f32 %v1198, %v1358
  %v1360 = vpop.f32.mrb[0].mxu0
  %1361 = vdwg.mxu0
  %1362 = vmatprep.subr.bf16.mxu0 0
  %1363 = vmatpush1.bf16.msra.mxu0 %v951
  %1364 = vmatprep.subr.bf16.mxu0 0
  %1365 = vmatpush1.bf16.msra.mxu0 %v952
  %1366 = vmatprep.subr.bf16.mxu0 0
  %1367 = vmatpush1.bf16.msra.mxu0 %v953
  %1368 = vmatprep.subr.bf16.mxu0 0
  %1369 = vmatpush1.bf16.msra.mxu0 %v954
  %1370 = vmatprep.subr.bf16.mxu0 0
  %1371 = vmatpush1.bf16.msra.mxu0 0
  %1372 = vmatprep.subr.bf16.mxu0 0
  %1373 = vmatpush1.bf16.msra.mxu0 0
  %1374 = vmatprep.subr.bf16.mxu0 0
  %1375 = vmatpush1.bf16.msra.mxu0 0
  %1376 = vmatprep.subr.bf16.mxu0 0
  %1377 = vmatpush1.bf16.msra.mxu0 0
  %1378 = vmatprep.subr.bf16.mxu0 0
  %1379 = vmatpush1.bf16.msra.mxu0 0
  %1380 = vmatprep.subr.bf16.mxu0 0
  %1381 = vmatpush1.bf16.msra.mxu0 0
  %1382 = vmatprep.subr.bf16.mxu0 0
  %1383 = vmatpush1.bf16.msra.mxu0 0
  %1384 = vmatprep.subr.bf16.mxu0 0
  %1385 = vmatpush1.bf16.msra.mxu0 0
  %1386 = vmatprep.subr.bf16.mxu0 0
  %1387 = vmatpush1.bf16.msra.mxu0 0
  %1388 = vmatprep.subr.bf16.mxu0 0
  %1389 = vmatpush1.bf16.msra.mxu0 0
  %1390 = vmatprep.subr.bf16.mxu0 0
  %1391 = vmatpush1.bf16.msra.mxu0 0
  %1392 = vmatprep.subr.bf16.mxu0 0
  %1393 = vmatpush1.bf16.msra.mxu0 0
  %1394 = vmatprep.mubr.bf16.mxu0 0
  %1395 = vmatmul.mubr.bf16.gmra.mrb[0].mxu0 %v993
  %v1396 = vpop.f32.mrb[0].mxu0
  %v1397 = vadd.f32 %v1236, %v1396
  %v1398 = vpop.f32.mrb[0].mxu0
  %v1399 = vpop.f32.mrb[0].mxu0
  %v1400 = vadd.f32 %v1239, %v1399
  %v1401 = vpop.f32.mrb[0].mxu0
  %1402 = vmatprep.mubr.bf16.mxu0 0
  %1403 = vmatmul.mubr.bf16.gmra.mrb[0].mxu0 %v996
  %v1404 = vpop.f32.mrb[0].mxu0
  %v1405 = vadd.f32 %v1244, %v1404
  %v1406 = vpop.f32.mrb[0].mxu0
  %v1407 = vpop.f32.mrb[0].mxu0
  %v1408 = vadd.f32 %v1247, %v1407
  %v1409 = vpop.f32.mrb[0].mxu0
  %1410 = vmatprep.mubr.bf16.mxu0 0
  %1411 = vmatmul.mubr.bf16.gmra.mrb[0].mxu0 %v999
  %v1412 = vpop.f32.mrb[0].mxu0
  %v1413 = vadd.f32 %v1252, %v1412
  %v1414 = vpop.f32.mrb[0].mxu0
  %v1415 = vpop.f32.mrb[0].mxu0
  %v1416 = vadd.f32 %v1255, %v1415
  %v1417 = vpop.f32.mrb[0].mxu0
  %1418 = vmatprep.mubr.bf16.mxu0 0
  %1419 = vmatmul.mubr.bf16.gmra.mrb[0].mxu0 %v1002
  %v1420 = vpop.f32.mrb[0].mxu0
  %v1421 = vadd.f32 %v1260, %v1420
  %v1422 = vpop.f32.mrb[0].mxu0
  %v1423 = vpop.f32.mrb[0].mxu0
  %v1424 = vadd.f32 %v1263, %v1423
  %v1425 = vpop.f32.mrb[0].mxu0
  %1426 = vmatprep.mubr.bf16.mxu0 0
  %1427 = vmatmul.mubr.bf16.gmra.mrb[0].mxu0 %v1005
  %v1428 = vpop.f32.mrb[0].mxu0
  %v1429 = vadd.f32 %v1268, %v1428
  %v1430 = vpop.f32.mrb[0].mxu0
  %v1431 = vpop.f32.mrb[0].mxu0
  %v1432 = vadd.f32 %v1271, %v1431
  %v1433 = vpop.f32.mrb[0].mxu0
  %1434 = vmatprep.mubr.bf16.mxu0 0
  %1435 = vmatmul.mubr.bf16.gmra.mrb[0].mxu0 %v1008
  %v1436 = vpop.f32.mrb[0].mxu0
  %v1437 = vadd.f32 %v1276, %v1436
  %v1438 = vpop.f32.mrb[0].mxu0
  %v1439 = vpop.f32.mrb[0].mxu0
  %v1440 = vadd.f32 %v1279, %v1439
  %v1441 = vpop.f32.mrb[0].mxu0
  %1442 = vmatprep.mubr.bf16.mxu0 0
  %1443 = vmatmul.mubr.bf16.gmra.mrb[0].mxu0 %v1011
  %v1444 = vpop.f32.mrb[0].mxu0
  %v1445 = vadd.f32 %v1284, %v1444
  %v1446 = vpop.f32.mrb[0].mxu0
  %v1447 = vpop.f32.mrb[0].mxu0
  %v1448 = vadd.f32 %v1287, %v1447
  %v1449 = vpop.f32.mrb[0].mxu0
  %1450 = vmatprep.mubr.bf16.mxu0 0
  %1451 = vmatmul.mubr.bf16.gmra.mrb[0].mxu0 %v1014
  %v1452 = vpop.f32.mrb[0].mxu0
  %v1453 = vadd.f32 %v1292, %v1452
  %v1454 = vpop.f32.mrb[0].mxu0
  %v1455 = vpop.f32.mrb[0].mxu0
  %v1456 = vadd.f32 %v1295, %v1455
  %v1457 = vpop.f32.mrb[0].mxu0
  %1458 = vmatprep.mubr.bf16.mxu0 0
  %1459 = vmatmul.mubr.bf16.gmra.mrb[0].mxu0 %v1017
  %v1460 = vpop.f32.mrb[0].mxu0
  %v1461 = vadd.f32 %v1300, %v1460
  %v1462 = vpop.f32.mrb[0].mxu0
  %v1463 = vpop.f32.mrb[0].mxu0
  %v1464 = vadd.f32 %v1303, %v1463
  %v1465 = vpop.f32.mrb[0].mxu0
  %1466 = vmatprep.mubr.bf16.mxu0 0
  %1467 = vmatmul.mubr.bf16.gmra.mrb[0].mxu0 %v1020
  %v1468 = vpop.f32.mrb[0].mxu0
  %v1469 = vadd.f32 %v1308, %v1468
  %v1470 = vpop.f32.mrb[0].mxu0
  %v1471 = vpop.f32.mrb[0].mxu0
  %v1472 = vadd.f32 %v1311, %v1471
  %v1473 = vpop.f32.mrb[0].mxu0
  %1474 = vmatprep.mubr.bf16.mxu0 0
  %1475 = vmatmul.mubr.bf16.gmra.mrb[0].mxu0 %v1023
  %v1476 = vpop.f32.mrb[0].mxu0
  %v1477 = vadd.f32 %v1316, %v1476
  %v1478 = vpop.f32.mrb[0].mxu0
  %v1479 = vpop.f32.mrb[0].mxu0
  %v1480 = vadd.f32 %v1319, %v1479
  %v1481 = vpop.f32.mrb[0].mxu0
  %1482 = vmatprep.mubr.bf16.mxu0 0
  %1483 = vmatmul.mubr.bf16.gmra.mrb[0].mxu0 %v1026
  %v1484 = vpop.f32.mrb[0].mxu0
  %v1485 = vadd.f32 %v1324, %v1484
  %v1486 = vpop.f32.mrb[0].mxu0
  %v1487 = vpop.f32.mrb[0].mxu0
  %v1488 = vadd.f32 %v1327, %v1487
  %v1489 = vpop.f32.mrb[0].mxu0
  %1490 = vmatprep.mubr.bf16.mxu0 0
  %1491 = vmatmul.mubr.bf16.gmra.mrb[0].mxu0 %v1029
  %v1492 = vpop.f32.mrb[0].mxu0
  %v1493 = vadd.f32 %v1332, %v1492
  %v1494 = vpop.f32.mrb[0].mxu0
  %v1495 = vpop.f32.mrb[0].mxu0
  %v1496 = vadd.f32 %v1335, %v1495
  %v1497 = vpop.f32.mrb[0].mxu0
  %1498 = vmatprep.mubr.bf16.mxu0 0
  %1499 = vmatmul.mubr.bf16.gmra.mrb[0].mxu0 %v1032
  %v1500 = vpop.f32.mrb[0].mxu0
  %v1501 = vadd.f32 %v1340, %v1500
  %v1502 = vpop.f32.mrb[0].mxu0
  %v1503 = vpop.f32.mrb[0].mxu0
  %v1504 = vadd.f32 %v1343, %v1503
  %v1505 = vpop.f32.mrb[0].mxu0
  %1506 = vmatprep.mubr.bf16.mxu0 0
  %1507 = vmatmul.mubr.bf16.gmra.mrb[0].mxu0 %v1035
  %v1508 = vpop.f32.mrb[0].mxu0
  %v1509 = vadd.f32 %v1348, %v1508
  %v1510 = vpop.f32.mrb[0].mxu0
  %v1511 = vpop.f32.mrb[0].mxu0
  %v1512 = vadd.f32 %v1351, %v1511
  %v1513 = vpop.f32.mrb[0].mxu0
  %1514 = vmatprep.mubr.bf16.mxu0 0
  %1515 = vmatmul.mubr.bf16.gmra.mrb[0].mxu0 %v1038
  %v1516 = vpop.f32.mrb[0].mxu0
  %v1517 = vadd.f32 %v1356, %v1516
  %v1518 = vpop.f32.mrb[0].mxu0
  %v1519 = vpop.f32.mrb[0].mxu0
  %v1520 = vadd.f32 %v1359, %v1519
  %v1521 = vpop.f32.mrb[0].mxu0
  %1522 = vdwg.mxu0
  %v1523 = vxor.u32 %v1461, 2147483648
  %v1524 = vxor.u32 %v1464, 2147483648
  %v1525 = vxor.u32 %v1469, 2147483648
  %v1526 = vxor.u32 %v1472, 2147483648
  %v1527 = vxor.u32 %v1477, 2147483648
  %v1528 = vxor.u32 %v1480, 2147483648
  %v1529 = vxor.u32 %v1485, 2147483648
  %v1530 = vxor.u32 %v1488, 2147483648
  %v1531 = vxor.u32 %v1493, 2147483648
  %v1532 = vxor.u32 %v1496, 2147483648
  %v1533 = vxor.u32 %v1501, 2147483648
  %v1534 = vxor.u32 %v1504, 2147483648
  %v1535 = vxor.u32 %v1509, 2147483648
  %v1536 = vxor.u32 %v1512, 2147483648
  %v1537 = vxor.u32 %v1517, 2147483648
  %v1538 = vxor.u32 %v1520, 2147483648
  %v1539 = vmul.f32 %v1523, 1.442695
  %v1540 = vpow.pop %v1539
  %v1541 = vmul.f32 %v1524, 1.442695
  %v1542 = vpow.pop %v1541
  %v1543 = vmul.f32 %v1525, 1.442695
  %v1544 = vpow.pop %v1543
  %v1545 = vmul.f32 %v1526, 1.442695
  %v1546 = vpow.pop %v1545
  %v1547 = vmul.f32 %v1527, 1.442695
  %v1548 = vpow.pop %v1547
  %v1549 = vmul.f32 %v1528, 1.442695
  %v1550 = vpow.pop %v1549
  %v1551 = vmul.f32 %v1529, 1.442695
  %v1552 = vpow.pop %v1551
  %v1553 = vmul.f32 %v1530, 1.442695
  %v1554 = vpow.pop %v1553
  %v1555 = vmul.f32 %v1531, 1.442695
  %v1556 = vpow.pop %v1555
  %v1557 = vmul.f32 %v1532, 1.442695
  %v1558 = vpow.pop %v1557
  %v1559 = vmul.f32 %v1533, 1.442695
  %v1560 = vpow.pop %v1559
  %v1561 = vmul.f32 %v1534, 1.442695
  %v1562 = vpow.pop %v1561
  %v1563 = vmul.f32 %v1535, 1.442695
  %v1564 = vpow.pop %v1563
  %v1565 = vmul.f32 %v1536, 1.442695
  %v1566 = vpow.pop %v1565
  %v1567 = vmul.f32 %v1537, 1.442695
  %v1568 = vpow.pop %v1567
  %v1569 = vmul.f32 %v1538, 1.442695
  %v1570 = vpow.pop %v1569
  %v1571 = vadd.f32 %v1540, 1.0
  %v1572 = vadd.f32 %v1542, 1.0
  %v1573 = vadd.f32 %v1544, 1.0
  %v1574 = vadd.f32 %v1546, 1.0
  %v1575 = vadd.f32 %v1548, 1.0
  %v1576 = vadd.f32 %v1550, 1.0
  %v1577 = vadd.f32 %v1552, 1.0
  %v1578 = vadd.f32 %v1554, 1.0
  %v1579 = vadd.f32 %v1556, 1.0
  %v1580 = vadd.f32 %v1558, 1.0
  %v1581 = vadd.f32 %v1560, 1.0
  %v1582 = vadd.f32 %v1562, 1.0
  %v1583 = vadd.f32 %v1564, 1.0
  %v1584 = vadd.f32 %v1566, 1.0
  %v1585 = vadd.f32 %v1568, 1.0
  %v1586 = vadd.f32 %v1570, 1.0
  %v1587 = vrcp.pop %v1571
  %v1588 = vmul.f32 1.0, %v1587
  %v1589 = vrcp.pop %v1572
  %v1590 = vmul.f32 1.0, %v1589
  %v1591 = vrcp.pop %v1573
  %v1592 = vmul.f32 1.0, %v1591
  %v1593 = vrcp.pop %v1574
  %v1594 = vmul.f32 1.0, %v1593
  %v1595 = vrcp.pop %v1575
  %v1596 = vmul.f32 1.0, %v1595
  %v1597 = vrcp.pop %v1576
  %v1598 = vmul.f32 1.0, %v1597
  %v1599 = vrcp.pop %v1577
  %v1600 = vmul.f32 1.0, %v1599
  %v1601 = vrcp.pop %v1578
  %v1602 = vmul.f32 1.0, %v1601
  %v1603 = vrcp.pop %v1579
  %v1604 = vmul.f32 1.0, %v1603
  %v1605 = vrcp.pop %v1580
  %v1606 = vmul.f32 1.0, %v1605
  %v1607 = vrcp.pop %v1581
  %v1608 = vmul.f32 1.0, %v1607
  %v1609 = vrcp.pop %v1582
  %v1610 = vmul.f32 1.0, %v1609
  %v1611 = vrcp.pop %v1583
  %v1612 = vmul.f32 1.0, %v1611
  %v1613 = vrcp.pop %v1584
  %v1614 = vmul.f32 1.0, %v1613
  %v1615 = vrcp.pop %v1585
  %v1616 = vmul.f32 1.0, %v1615
  %v1617 = vrcp.pop %v1586
  %v1618 = vmul.f32 1.0, %v1617
  %v1619 = vmul.f32 %v1397, %v1588
  %v1620 = vmul.f32 %v1400, %v1590
  %v1621 = vmul.f32 %v1405, %v1592
  %v1622 = vmul.f32 %v1408, %v1594
  %v1623 = vmul.f32 %v1413, %v1596
  %v1624 = vmul.f32 %v1416, %v1598
  %v1625 = vmul.f32 %v1421, %v1600
  %v1626 = vmul.f32 %v1424, %v1602
  %v1627 = vmul.f32 %v1429, %v1604
  %v1628 = vmul.f32 %v1432, %v1606
  %v1629 = vmul.f32 %v1437, %v1608
  %v1630 = vmul.f32 %v1440, %v1610
  %v1631 = vmul.f32 %v1445, %v1612
  %v1632 = vmul.f32 %v1448, %v1614
  %v1633 = vmul.f32 %v1453, %v1616
  %v1634 = vmul.f32 %v1456, %v1618
  %v1635 = vpack.c.bf16 %v1620, %v1619
  %v1636 = vpack.c.bf16 %v1622, %v1621
  %v1637 = vpack.c.bf16 %v1624, %v1623
  %v1638 = vpack.c.bf16 %v1626, %v1625
  %v1639 = vpack.c.bf16 %v1628, %v1627
  %v1640 = vpack.c.bf16 %v1630, %v1629
  %v1641 = vpack.c.bf16 %v1632, %v1631
  %v1642 = vpack.c.bf16 %v1634, %v1633
  %v1651 = vunpack.c.l.b16 %v1635
  %v1652 = vunpack.c.h.b16 %v1635
  %v1653 = vunpack.c.l.b16 %v1636
  %v1654 = vunpack.c.h.b16 %v1636
  %v1655 = vunpack.c.l.b16 %v1637
  %v1656 = vunpack.c.h.b16 %v1637
  %v1657 = vunpack.c.l.b16 %v1638
  %v1658 = vunpack.c.h.b16 %v1638
  %v1659 = vunpack.c.l.b16 %v1639
  %v1660 = vunpack.c.h.b16 %v1639
  %v1661 = vunpack.c.l.b16 %v1640
  %v1662 = vunpack.c.h.b16 %v1640
  %v1663 = vunpack.c.l.b16 %v1641
  %v1664 = vunpack.c.h.b16 %v1641
  %v1665 = vunpack.c.l.b16 %v1642
  %v1666 = vunpack.c.h.b16 %v1642
  %v1667 = vpack.c.b16 %v1651, %v1651
  %v1668 = vpack.c.b16 %v1652, %v1652
  %v1669 = vpack.c.b16 %v1653, %v1653
  %v1670 = vpack.c.b16 %v1654, %v1654
  %v1671 = vpack.c.b16 %v1655, %v1655
  %v1672 = vpack.c.b16 %v1656, %v1656
  %v1673 = vpack.c.b16 %v1657, %v1657
  %v1674 = vpack.c.b16 %v1658, %v1658
  %v1675 = vpack.c.b16 %v1659, %v1659
  %v1676 = vpack.c.b16 %v1660, %v1660
  %v1677 = vpack.c.b16 %v1661, %v1661
  %v1678 = vpack.c.b16 %v1662, %v1662
  %v1679 = vpack.c.b16 %v1663, %v1663
  %v1680 = vpack.c.b16 %v1664, %v1664
  %v1681 = vpack.c.b16 %v1665, %v1665
  %v1682 = vpack.c.b16 %v1666, %v1666
  %1699 = vst [vmem:[%s3] sm:$0xf] %v1667
  %1700 = vst [vmem:[%s3 + $0x4] sm:$0xf] %v1668
  %1701 = vst [vmem:[%s3 + $0x8] sm:$0xf] %v1669
  %1702 = vst [vmem:[%s3 + $0xc] sm:$0xf] %v1670
  %1703 = vst [vmem:[%s3 + $0x10] sm:$0xf] %v1671
  %1704 = vst [vmem:[%s3 + $0x14] sm:$0xf] %v1672
  %1705 = vst [vmem:[%s3 + $0x18] sm:$0xf] %v1673
  %1706 = vst [vmem:[%s3 + $0x1c] sm:$0xf] %v1674
  %1707 = vst [vmem:[%s3 + $0x20] sm:$0xf] %v1675
  %1708 = vst [vmem:[%s3 + $0x24] sm:$0xf] %v1676
  %1709 = vst [vmem:[%s3 + $0x28] sm:$0xf] %v1677
  %1710 = vst [vmem:[%s3 + $0x2c] sm:$0xf] %v1678
  %1711 = vst [vmem:[%s3 + $0x30] sm:$0xf] %v1679
  %1712 = vst [vmem:[%s3 + $0x34] sm:$0xf] %v1680
  %1713 = vst [vmem:[%s3 + $0x38] sm:$0xf] %v1681
  %1714 = vst [vmem:[%s3 + $0x3c] sm:$0xf] %v1682
  // Predicated region
  $region14: #{init_stage_g.6} parent=0 // pred_check
    _
  $region15: #{init_stage_g.6} parent=0 // pred_check_branch
    %1716 = sbr.rel (0) target = $region17
  $region16: #{init_stage_g.6} parent=0 // pred_region
    _
  $region17: #{init_stage_g.6} parent=0 // pred_fallthru
    _
  // Predicated region
  $region18: #{init_stage_g.6} parent=0 // pred_check
    _
  $region19: #{init_stage_g.6} parent=0 // pred_check_branch
    %1718 = sbr.rel (0) target = $region21
  $region20: #{init_stage_g.6} parent=0 // pred_region
    _
  $region21: #{init_stage_g.6} parent=0 // pred_fallthru
    _

// kernel: init_stage_g.7
$region0: #{init_stage_g.7}
  #allocation0 [shape = 'u32[]', space=smem, size = 0x4, offset = 0x4, fixed_abs, tag = 'smem constant byte address 0x4 - core index']
  #allocation1 [shape = 'u32[144,128]{1,0:T(1,128)}', space=vmem, size = 0x12000, scoped, tag = 'internal scratch']
  %s0 = inlined_call_operand.vmem [shape: bf16[288,128], index: 0, kind: input, shape index: {}]
  %s1 = inlined_call_operand.vmem [shape: bf16[128,288], index: 1, kind: input, shape index: {}]
  %s2 = inlined_call_operand.vmem [shape: f32[128,1], index: 2, kind: input, shape index: {}]
  %s3 = inlined_call_operand.vmem [shape: bf16[64,128], index: 3, kind: output, shape index: {}]
  %s4 = sld [smem:[#allocation0]]
  $region22: #{init_stage_g.7} parent=0
    _
  %s6 = ssub.s32 1, %s4
  %s7 = scalar_select 0, %s6, %s4
  // Predicated region
  $region2: #{init_stage_g.7} parent=0 // pred_check
    _
  $region3: #{init_stage_g.7} parent=0 // pred_check_branch
    %9 = sbr.rel (0) target = $region5
  $region4: #{init_stage_g.7} parent=0 // pred_region
    _
  $region5: #{init_stage_g.7} parent=0 // pred_fallthru
    _
  // Predicated region
  $region6: #{init_stage_g.7} parent=0 // pred_check
    _
  $region7: #{init_stage_g.7} parent=0 // pred_check_branch
    %11 = sbr.rel (0) target = $region9
  $region8: #{init_stage_g.7} parent=0 // pred_region
    _
  $region9: #{init_stage_g.7} parent=0 // pred_fallthru
    _
  // Predicated region
  $region10: #{init_stage_g.7} parent=0 // pred_check
    _
  $region11: #{init_stage_g.7} parent=0 // pred_check_branch
    %13 = sbr.rel (0) target = $region13
  $region12: #{init_stage_g.7} parent=0 // pred_region
    _
  $region13: #{init_stage_g.7} parent=0 // pred_fallthru
    _
  %v15 = vld [vmem:[%s1] sm:$0xff]
  %v16 = vld [vmem:[%s1 + $0x8] sm:$0xf]
  %v17 = vld [vmem:[%s1 + $0xc] sm:$0xff]
  %v18 = vld [vmem:[%s1 + $0x14] sm:$0xf]
  %v19 = vld [vmem:[%s1 + $0x18] sm:$0xff]
  %v20 = vld [vmem:[%s1 + $0x20] sm:$0xf]
  %v21 = vld [vmem:[%s1 + $0x24] sm:$0xff]
  %v22 = vld [vmem:[%s1 + $0x2c] sm:$0xf]
  %v23 = vld [vmem:[%s1 + $0x30] sm:$0xff]
  %v24 = vld [vmem:[%s1 + $0x38] sm:$0xf]
  %v25 = vld [vmem:[%s1 + $0x3c] sm:$0xff]
  %v26 = vld [vmem:[%s1 + $0x44] sm:$0xf]
  %v27 = vld [vmem:[%s1 + $0x48] sm:$0xff]
  %v28 = vld [vmem:[%s1 + $0x50] sm:$0xf]
  %v29 = vld [vmem:[%s1 + $0x54] sm:$0xff]
  %v30 = vld [vmem:[%s1 + $0x5c] sm:$0xf]
  %v31 = vld [vmem:[%s1 + $0x60] sm:$0xff]
  %v32 = vld [vmem:[%s1 + $0x68] sm:$0xf]
  %v33 = vld [vmem:[%s1 + $0x6c] sm:$0xff]
  %v34 = vld [vmem:[%s1 + $0x74] sm:$0xf]
  %v35 = vld [vmem:[%s1 + $0x78] sm:$0xff]
  %v36 = vld [vmem:[%s1 + $0x80] sm:$0xf]
  %v37 = vld [vmem:[%s1 + $0x84] sm:$0xff]
  %v38 = vld [vmem:[%s1 + $0x8c] sm:$0xf]
  %v39 = vld [vmem:[%s1 + $0x90] sm:$0xff]
  %v40 = vld [vmem:[%s1 + $0x98] sm:$0xf]
  %v41 = vld [vmem:[%s1 + $0x9c] sm:$0xff]
  %v42 = vld [vmem:[%s1 + $0xa4] sm:$0xf]
  %v43 = vld [vmem:[%s1 + $0xa8] sm:$0xff]
  %v44 = vld [vmem:[%s1 + $0xb0] sm:$0xf]
  %v45 = vld [vmem:[%s1 + $0xb4] sm:$0xff]
  %v46 = vld [vmem:[%s1 + $0xbc] sm:$0xf]
  %v47 = vld [vmem:[%s0] sm:$0xf]
  %v48 = vld [vmem:[%s0 + $0x4] sm:$0xf]
  %v49 = vld [vmem:[%s0 + $0x8] sm:$0xf]
  %v50 = vld [vmem:[%s0 + $0xc] sm:$0xf]
  %v51 = vld [vmem:[%s0 + $0x10] sm:$0xf]
  %v52 = vld [vmem:[%s0 + $0x14] sm:$0xf]
  %v53 = vld [vmem:[%s0 + $0x18] sm:$0xf]
  %v54 = vld [vmem:[%s0 + $0x1c] sm:$0xf]
  %v55 = vld [vmem:[%s0 + $0x20] sm:$0xf]
  %v56 = vld [vmem:[%s0 + $0x24] sm:$0xf]
  %v57 = vld [vmem:[%s0 + $0x28] sm:$0xf]
  %v58 = vld [vmem:[%s0 + $0x2c] sm:$0xf]
  %v59 = vld [vmem:[%s0 + $0x30] sm:$0xf]
  %v60 = vld [vmem:[%s0 + $0x34] sm:$0xf]
  %v61 = vld [vmem:[%s0 + $0x38] sm:$0xf]
  %v62 = vld [vmem:[%s0 + $0x3c] sm:$0xf]
  %v63 = vld [vmem:[%s0 + $0x40] sm:$0xf]
  %v64 = vld [vmem:[%s0 + $0x44] sm:$0xf]
  %v65 = vld [vmem:[%s0 + $0x48] sm:$0xf]
  %v66 = vld [vmem:[%s0 + $0x4c] sm:$0xf]
  %v67 = vld [vmem:[%s0 + $0x50] sm:$0xf]
  %v68 = vld [vmem:[%s0 + $0x54] sm:$0xf]
  %v69 = vld [vmem:[%s0 + $0x58] sm:$0xf]
  %v70 = vld [vmem:[%s0 + $0x5c] sm:$0xf]
  %v71 = vld [vmem:[%s0 + $0x60] sm:$0xf]
  %v72 = vld [vmem:[%s0 + $0x64] sm:$0xf]
  %v73 = vld [vmem:[%s0 + $0x68] sm:$0xf]
  %v74 = vld [vmem:[%s0 + $0x6c] sm:$0xf]
  %v75 = vld [vmem:[%s0 + $0x70] sm:$0xf]
  %v76 = vld [vmem:[%s0 + $0x74] sm:$0xf]
  %v77 = vld [vmem:[%s0 + $0x78] sm:$0xf]
  %v78 = vld [vmem:[%s0 + $0x7c] sm:$0xf]
  %v79 = vld [vmem:[%s0 + $0x80] sm:$0xf]
  %v80 = vld [vmem:[%s0 + $0x84] sm:$0xf]
  %v81 = vld [vmem:[%s0 + $0x88] sm:$0xf]
  %v82 = vld [vmem:[%s0 + $0x8c] sm:$0xf]
  %v83 = vld [vmem:[%s2] sm:$0xff]
  %v84 = vld [vmem:[%s2 + $0x8] sm:$0xff]
  %v85 = vld [vmem:[%s2 + $0x10] sm:$0xff]
  %v86 = vld [vmem:[%s2 + $0x18] sm:$0xff]
  %v87 = vld [vmem:[%s2 + $0x20] sm:$0xff]
  %v88 = vld [vmem:[%s2 + $0x28] sm:$0xff]
  %v89 = vld [vmem:[%s2 + $0x30] sm:$0xff]
  %v90 = vld [vmem:[%s2 + $0x38] sm:$0xff]
  %v91 = vld [vmem:[%s2 + $0x40] sm:$0xff]
  %v92 = vld [vmem:[%s2 + $0x48] sm:$0xff]
  %v93 = vld [vmem:[%s2 + $0x50] sm:$0xff]
  %v94 = vld [vmem:[%s2 + $0x58] sm:$0xff]
  %v95 = vld [vmem:[%s2 + $0x60] sm:$0xff]
  %v96 = vld [vmem:[%s2 + $0x68] sm:$0xff]
  %v97 = vld [vmem:[%s2 + $0x70] sm:$0xff]
  %v98 = vld [vmem:[%s2 + $0x78] sm:$0xff]
  %100 = vset.pattern.permute.xlu0 0
  %101 = vperm.xlu0 %100, %v83
  %v102 = vpop.permute.xlu0 %101
  %105 = vset.pattern.permute.xlu0 0
  %106 = vperm.xlu0 %105, %v84
  %v107 = vpop.permute.xlu0 %106
  %110 = vset.pattern.permute.xlu0 0
  %111 = vperm.xlu0 %110, %v85
  %v112 = vpop.permute.xlu0 %111
  %115 = vset.pattern.permute.xlu0 0
  %116 = vperm.xlu0 %115, %v86
  %v117 = vpop.permute.xlu0 %116
  %120 = vset.pattern.permute.xlu0 0
  %121 = vperm.xlu0 %120, %v87
  %v122 = vpop.permute.xlu0 %121
  %125 = vset.pattern.permute.xlu0 0
  %126 = vperm.xlu0 %125, %v88
  %v127 = vpop.permute.xlu0 %126
  %130 = vset.pattern.permute.xlu0 0
  %131 = vperm.xlu0 %130, %v89
  %v132 = vpop.permute.xlu0 %131
  %135 = vset.pattern.permute.xlu0 0
  %136 = vperm.xlu0 %135, %v90
  %v137 = vpop.permute.xlu0 %136
  %140 = vset.pattern.permute.xlu0 0
  %141 = vperm.xlu0 %140, %v91
  %v142 = vpop.permute.xlu0 %141
  %145 = vset.pattern.permute.xlu0 0
  %146 = vperm.xlu0 %145, %v92
  %v147 = vpop.permute.xlu0 %146
  %150 = vset.pattern.permute.xlu0 0
  %151 = vperm.xlu0 %150, %v93
  %v152 = vpop.permute.xlu0 %151
  %155 = vset.pattern.permute.xlu0 0
  %156 = vperm.xlu0 %155, %v94
  %v157 = vpop.permute.xlu0 %156
  %160 = vset.pattern.permute.xlu0 0
  %161 = vperm.xlu0 %160, %v95
  %v162 = vpop.permute.xlu0 %161
  %165 = vset.pattern.permute.xlu0 0
  %166 = vperm.xlu0 %165, %v96
  %v167 = vpop.permute.xlu0 %166
  %170 = vset.pattern.permute.xlu0 0
  %171 = vperm.xlu0 %170, %v97
  %v172 = vpop.permute.xlu0 %171
  %175 = vset.pattern.permute.xlu0 0
  %176 = vperm.xlu0 %175, %v98
  %v177 = vpop.permute.xlu0 %176
  %v211 = vunpack.c.l.b16 %v15
  %v212 = vunpack.c.h.b16 %v15
  %v213 = vunpack.c.l.b16 %v16
  %v214 = vunpack.c.l.b16 %v17
  %v215 = vunpack.c.h.b16 %v17
  %v216 = vunpack.c.l.b16 %v18
  %v217 = vunpack.c.l.b16 %v19
  %v218 = vunpack.c.h.b16 %v19
  %v219 = vunpack.c.l.b16 %v20
  %v220 = vunpack.c.l.b16 %v21
  %v221 = vunpack.c.h.b16 %v21
  %v222 = vunpack.c.l.b16 %v22
  %v223 = vunpack.c.l.b16 %v23
  %v224 = vunpack.c.h.b16 %v23
  %v225 = vunpack.c.l.b16 %v24
  %v226 = vunpack.c.l.b16 %v25
  %v227 = vunpack.c.h.b16 %v25
  %v228 = vunpack.c.l.b16 %v26
  %v229 = vunpack.c.l.b16 %v27
  %v230 = vunpack.c.h.b16 %v27
  %v231 = vunpack.c.l.b16 %v28
  %v232 = vunpack.c.l.b16 %v29
  %v233 = vunpack.c.h.b16 %v29
  %v234 = vunpack.c.l.b16 %v30
  %v235 = vunpack.c.l.b16 %v31
  %v236 = vunpack.c.h.b16 %v31
  %v237 = vunpack.c.l.b16 %v32
  %v238 = vunpack.c.l.b16 %v33
  %v239 = vunpack.c.h.b16 %v33
  %v240 = vunpack.c.l.b16 %v34
  %v241 = vunpack.c.l.b16 %v35
  %v242 = vunpack.c.h.b16 %v35
  %v243 = vunpack.c.l.b16 %v36
  %v244 = vunpack.c.l.b16 %v37
  %v245 = vunpack.c.h.b16 %v37
  %v246 = vunpack.c.l.b16 %v38
  %v247 = vunpack.c.l.b16 %v39
  %v248 = vunpack.c.h.b16 %v39
  %v249 = vunpack.c.l.b16 %v40
  %v250 = vunpack.c.l.b16 %v41
  %v251 = vunpack.c.h.b16 %v41
  %v252 = vunpack.c.l.b16 %v42
  %v253 = vunpack.c.l.b16 %v43
  %v254 = vunpack.c.h.b16 %v43
  %v255 = vunpack.c.l.b16 %v44
  %v256 = vunpack.c.l.b16 %v45
  %v257 = vunpack.c.h.b16 %v45
  %v258 = vunpack.c.l.b16 %v46
  %v259 = vpack.c.b16 %v214, %v211
  %v260 = vpack.c.b16 %v215, %v212
  %v261 = vpack.c.b16 %v216, %v213
  %v262 = vpack.c.b16 %v220, %v217
  %v263 = vpack.c.b16 %v221, %v218
  %v264 = vpack.c.b16 %v222, %v219
  %v265 = vpack.c.b16 %v226, %v223
  %v266 = vpack.c.b16 %v227, %v224
  %v267 = vpack.c.b16 %v228, %v225
  %v268 = vpack.c.b16 %v232, %v229
  %v269 = vpack.c.b16 %v233, %v230
  %v270 = vpack.c.b16 %v234, %v231
  %v271 = vpack.c.b16 %v238, %v235
  %v272 = vpack.c.b16 %v239, %v236
  %v273 = vpack.c.b16 %v240, %v237
  %v274 = vpack.c.b16 %v244, %v241
  %v275 = vpack.c.b16 %v245, %v242
  %v276 = vpack.c.b16 %v246, %v243
  %v277 = vpack.c.b16 %v250, %v247
  %v278 = vpack.c.b16 %v251, %v248
  %v279 = vpack.c.b16 %v252, %v249
  %v280 = vpack.c.b16 %v256, %v253
  %v281 = vpack.c.b16 %v257, %v254
  %v282 = vpack.c.b16 %v258, %v255
  %v335 = vunpack.c.l.b16 %v47
  %v336 = vunpack.c.l.b16 %v48
  %v337 = vunpack.c.l.b16 %v49
  %v338 = vunpack.c.l.b16 %v50
  %v339 = vunpack.c.l.b16 %v51
  %v340 = vunpack.c.l.b16 %v52
  %v341 = vunpack.c.l.b16 %v53
  %v342 = vunpack.c.l.b16 %v54
  %v343 = vunpack.c.l.b16 %v55
  %v344 = vunpack.c.l.b16 %v56
  %v345 = vunpack.c.l.b16 %v57
  %v346 = vunpack.c.l.b16 %v58
  %v347 = vunpack.c.l.b16 %v59
  %v348 = vunpack.c.l.b16 %v60
  %v349 = vunpack.c.l.b16 %v61
  %v350 = vunpack.c.l.b16 %v62
  %v351 = vunpack.c.l.b16 %v63
  %v352 = vunpack.c.l.b16 %v64
  %v353 = vunpack.c.l.b16 %v65
  %v354 = vunpack.c.l.b16 %v66
  %v355 = vunpack.c.l.b16 %v67
  %v356 = vunpack.c.l.b16 %v68
  %v357 = vunpack.c.l.b16 %v69
  %v358 = vunpack.c.l.b16 %v70
  %v359 = vunpack.c.l.b16 %v71
  %v360 = vunpack.c.l.b16 %v72
  %v361 = vunpack.c.l.b16 %v73
  %v362 = vunpack.c.l.b16 %v74
  %v363 = vunpack.c.l.b16 %v75
  %v364 = vunpack.c.l.b16 %v76
  %v365 = vunpack.c.l.b16 %v77
  %v366 = vunpack.c.l.b16 %v78
  %v367 = vunpack.c.l.b16 %v79
  %v368 = vunpack.c.l.b16 %v80
  %v369 = vunpack.c.l.b16 %v81
  %v370 = vunpack.c.l.b16 %v82
  %v371 = vpack.c.b16 %v336, %v335
  %v372 = vpack.c.b16 %v338, %v337
  %v373 = vpack.c.b16 %v340, %v339
  %v374 = vpack.c.b16 %v342, %v341
  %v375 = vpack.c.b16 %v344, %v343
  %v376 = vpack.c.b16 %v346, %v345
  %v377 = vpack.c.b16 %v348, %v347
  %v378 = vpack.c.b16 %v350, %v349
  %v379 = vpack.c.b16 %v352, %v351
  %v380 = vpack.c.b16 %v354, %v353
  %v381 = vpack.c.b16 %v356, %v355
  %v382 = vpack.c.b16 %v358, %v357
  %v383 = vpack.c.b16 %v360, %v359
  %v384 = vpack.c.b16 %v362, %v361
  %v385 = vpack.c.b16 %v364, %v363
  %v386 = vpack.c.b16 %v366, %v365
  %v387 = vpack.c.b16 %v368, %v367
  %v388 = vpack.c.b16 %v370, %v369
  %vm407 = vcmask 261120
  %v409 = vsel %vm407, %v261, 0
  %v412 = vsel %vm407, %v264, 0
  %v415 = vsel %vm407, %v267, 0
  %v418 = vsel %vm407, %v270, 0
  %v421 = vsel %vm407, %v273, 0
  %v424 = vsel %vm407, %v276, 0
  %v427 = vsel %vm407, %v279, 0
  %v430 = vsel %vm407, %v282, 0
  %432 = vmatprep.subr.bf16.mxu0 0
  %433 = vmatpush1.bf16.msra.mxu0 %v371
  %434 = vmatprep.subr.bf16.mxu0 0
  %435 = vmatpush1.bf16.msra.mxu0 %v372
  %436 = vmatprep.subr.bf16.mxu0 0
  %437 = vmatpush1.bf16.msra.mxu0 %v373
  %438 = vmatprep.subr.bf16.mxu0 0
  %439 = vmatpush1.bf16.msra.mxu0 %v374
  %440 = vmatprep.subr.bf16.mxu0 0
  %441 = vmatpush1.bf16.msra.mxu0 %v375
  %442 = vmatprep.subr.bf16.mxu0 0
  %443 = vmatpush1.bf16.msra.mxu0 %v376
  %444 = vmatprep.subr.bf16.mxu0 0
  %445 = vmatpush1.bf16.msra.mxu0 %v377
  %446 = vmatprep.subr.bf16.mxu0 0
  %447 = vmatpush1.bf16.msra.mxu0 %v378
  %448 = vmatprep.subr.bf16.mxu0 0
  %449 = vmatpush1.bf16.msra.mxu0 %v379
  %450 = vmatprep.subr.bf16.mxu0 0
  %451 = vmatpush1.bf16.msra.mxu0 %v380
  %452 = vmatprep.subr.bf16.mxu0 0
  %453 = vmatpush1.bf16.msra.mxu0 %v381
  %454 = vmatprep.subr.bf16.mxu0 0
  %455 = vmatpush1.bf16.msra.mxu0 %v382
  %456 = vmatprep.subr.bf16.mxu0 0
  %457 = vmatpush1.bf16.msra.mxu0 %v383
  %458 = vmatprep.subr.bf16.mxu0 0
  %459 = vmatpush1.bf16.msra.mxu0 %v384
  %460 = vmatprep.subr.bf16.mxu0 0
  %461 = vmatpush1.bf16.msra.mxu0 %v385
  %462 = vmatprep.subr.bf16.mxu0 0
  %463 = vmatpush1.bf16.msra.mxu0 %v386
  %464 = vmatprep.mubr.bf16.mxu0 %v260
  %465 = vmatmul.mubr.bf16.gmra.mrb[0].mxu0 %v259
  %v466 = vpop.f32.mrb[0].mxu0
  %v467 = vadd.f32 %v102, %v466
  %v468 = vpop.f32.mrb[0].mxu0
  %v469 = vpop.f32.mrb[0].mxu0
  %v470 = vadd.f32 %v107, %v469
  %v471 = vpop.f32.mrb[0].mxu0
  %472 = vmatprep.mubr.bf16.mxu0 %v263
  %473 = vmatmul.mubr.bf16.gmra.mrb[0].mxu0 %v262
  %v474 = vpop.f32.mrb[0].mxu0
  %v475 = vadd.f32 %v112, %v474
  %v476 = vpop.f32.mrb[0].mxu0
  %v477 = vpop.f32.mrb[0].mxu0
  %v478 = vadd.f32 %v117, %v477
  %v479 = vpop.f32.mrb[0].mxu0
  %480 = vmatprep.mubr.bf16.mxu0 %v266
  %481 = vmatmul.mubr.bf16.gmra.mrb[0].mxu0 %v265
  %v482 = vpop.f32.mrb[0].mxu0
  %v483 = vadd.f32 %v122, %v482
  %v484 = vpop.f32.mrb[0].mxu0
  %v485 = vpop.f32.mrb[0].mxu0
  %v486 = vadd.f32 %v127, %v485
  %v487 = vpop.f32.mrb[0].mxu0
  %488 = vmatprep.mubr.bf16.mxu0 %v269
  %489 = vmatmul.mubr.bf16.gmra.mrb[0].mxu0 %v268
  %v490 = vpop.f32.mrb[0].mxu0
  %v491 = vadd.f32 %v132, %v490
  %v492 = vpop.f32.mrb[0].mxu0
  %v493 = vpop.f32.mrb[0].mxu0
  %v494 = vadd.f32 %v137, %v493
  %v495 = vpop.f32.mrb[0].mxu0
  %496 = vmatprep.mubr.bf16.mxu0 %v272
  %497 = vmatmul.mubr.bf16.gmra.mrb[0].mxu0 %v271
  %v498 = vpop.f32.mrb[0].mxu0
  %v499 = vadd.f32 %v142, %v498
  %v500 = vpop.f32.mrb[0].mxu0
  %v501 = vpop.f32.mrb[0].mxu0
  %v502 = vadd.f32 %v147, %v501
  %v503 = vpop.f32.mrb[0].mxu0
  %504 = vmatprep.mubr.bf16.mxu0 %v275
  %505 = vmatmul.mubr.bf16.gmra.mrb[0].mxu0 %v274
  %v506 = vpop.f32.mrb[0].mxu0
  %v507 = vadd.f32 %v152, %v506
  %v508 = vpop.f32.mrb[0].mxu0
  %v509 = vpop.f32.mrb[0].mxu0
  %v510 = vadd.f32 %v157, %v509
  %v511 = vpop.f32.mrb[0].mxu0
  %512 = vmatprep.mubr.bf16.mxu0 %v278
  %513 = vmatmul.mubr.bf16.gmra.mrb[0].mxu0 %v277
  %v514 = vpop.f32.mrb[0].mxu0
  %v515 = vadd.f32 %v162, %v514
  %v516 = vpop.f32.mrb[0].mxu0
  %v517 = vpop.f32.mrb[0].mxu0
  %v518 = vadd.f32 %v167, %v517
  %v519 = vpop.f32.mrb[0].mxu0
  %520 = vmatprep.mubr.bf16.mxu0 %v281
  %521 = vmatmul.mubr.bf16.gmra.mrb[0].mxu0 %v280
  %v522 = vpop.f32.mrb[0].mxu0
  %v523 = vadd.f32 %v172, %v522
  %v524 = vpop.f32.mrb[0].mxu0
  %v525 = vpop.f32.mrb[0].mxu0
  %v526 = vadd.f32 %v177, %v525
  %v527 = vpop.f32.mrb[0].mxu0
  %528 = vdwg.mxu0
  %529 = vmatprep.subr.bf16.mxu0 0
  %530 = vmatpush1.bf16.msra.mxu0 %v387
  %531 = vmatprep.subr.bf16.mxu0 0
  %532 = vmatpush1.bf16.msra.mxu0 %v388
  %533 = vmatprep.subr.bf16.mxu0 0
  %534 = vmatpush1.bf16.msra.mxu0 0
  %535 = vmatprep.subr.bf16.mxu0 0
  %536 = vmatpush1.bf16.msra.mxu0 0
  %537 = vmatprep.subr.bf16.mxu0 0
  %538 = vmatpush1.bf16.msra.mxu0 0
  %539 = vmatprep.subr.bf16.mxu0 0
  %540 = vmatpush1.bf16.msra.mxu0 0
  %541 = vmatprep.subr.bf16.mxu0 0
  %542 = vmatpush1.bf16.msra.mxu0 0
  %543 = vmatprep.subr.bf16.mxu0 0
  %544 = vmatpush1.bf16.msra.mxu0 0
  %545 = vmatprep.subr.bf16.mxu0 0
  %546 = vmatpush1.bf16.msra.mxu0 0
  %547 = vmatprep.subr.bf16.mxu0 0
  %548 = vmatpush1.bf16.msra.mxu0 0
  %549 = vmatprep.subr.bf16.mxu0 0
  %550 = vmatpush1.bf16.msra.mxu0 0
  %551 = vmatprep.subr.bf16.mxu0 0
  %552 = vmatpush1.bf16.msra.mxu0 0
  %553 = vmatprep.subr.bf16.mxu0 0
  %554 = vmatpush1.bf16.msra.mxu0 0
  %555 = vmatprep.subr.bf16.mxu0 0
  %556 = vmatpush1.bf16.msra.mxu0 0
  %557 = vmatprep.subr.bf16.mxu0 0
  %558 = vmatpush1.bf16.msra.mxu0 0
  %559 = vmatprep.subr.bf16.mxu0 0
  %560 = vmatpush1.bf16.msra.mxu0 0
  %561 = vmatprep.mubr.bf16.mxu0 0
  %562 = vmatmul.mubr.bf16.gmra.mrb[0].mxu0 %v409
  %v563 = vpop.f32.mrb[0].mxu0
  %v564 = vadd.f32 %v467, %v563
  %v565 = vpop.f32.mrb[0].mxu0
  %v566 = vpop.f32.mrb[0].mxu0
  %v567 = vadd.f32 %v470, %v566
  %v568 = vpop.f32.mrb[0].mxu0
  %569 = vmatprep.mubr.bf16.mxu0 0
  %570 = vmatmul.mubr.bf16.gmra.mrb[0].mxu0 %v412
  %v571 = vpop.f32.mrb[0].mxu0
  %v572 = vadd.f32 %v475, %v571
  %v573 = vpop.f32.mrb[0].mxu0
  %v574 = vpop.f32.mrb[0].mxu0
  %v575 = vadd.f32 %v478, %v574
  %v576 = vpop.f32.mrb[0].mxu0
  %577 = vmatprep.mubr.bf16.mxu0 0
  %578 = vmatmul.mubr.bf16.gmra.mrb[0].mxu0 %v415
  %v579 = vpop.f32.mrb[0].mxu0
  %v580 = vadd.f32 %v483, %v579
  %v581 = vpop.f32.mrb[0].mxu0
  %v582 = vpop.f32.mrb[0].mxu0
  %v583 = vadd.f32 %v486, %v582
  %v584 = vpop.f32.mrb[0].mxu0
  %585 = vmatprep.mubr.bf16.mxu0 0
  %586 = vmatmul.mubr.bf16.gmra.mrb[0].mxu0 %v418
  %v587 = vpop.f32.mrb[0].mxu0
  %v588 = vadd.f32 %v491, %v587
  %v589 = vpop.f32.mrb[0].mxu0
  %v590 = vpop.f32.mrb[0].mxu0
  %v591 = vadd.f32 %v494, %v590
  %v592 = vpop.f32.mrb[0].mxu0
  %593 = vmatprep.mubr.bf16.mxu0 0
  %594 = vmatmul.mubr.bf16.gmra.mrb[0].mxu0 %v421
  %v595 = vpop.f32.mrb[0].mxu0
  %v596 = vadd.f32 %v499, %v595
  %v597 = vpop.f32.mrb[0].mxu0
  %v598 = vpop.f32.mrb[0].mxu0
  %v599 = vadd.f32 %v502, %v598
  %v600 = vpop.f32.mrb[0].mxu0
  %601 = vmatprep.mubr.bf16.mxu0 0
  %602 = vmatmul.mubr.bf16.gmra.mrb[0].mxu0 %v424
  %v603 = vpop.f32.mrb[0].mxu0
  %v604 = vadd.f32 %v507, %v603
  %v605 = vpop.f32.mrb[0].mxu0
  %v606 = vpop.f32.mrb[0].mxu0
  %v607 = vadd.f32 %v510, %v606
  %v608 = vpop.f32.mrb[0].mxu0
  %609 = vmatprep.mubr.bf16.mxu0 0
  %610 = vmatmul.mubr.bf16.gmra.mrb[0].mxu0 %v427
  %v611 = vpop.f32.mrb[0].mxu0
  %v612 = vadd.f32 %v515, %v611
  %v613 = vpop.f32.mrb[0].mxu0
  %v614 = vpop.f32.mrb[0].mxu0
  %v615 = vadd.f32 %v518, %v614
  %v616 = vpop.f32.mrb[0].mxu0
  %617 = vmatprep.mubr.bf16.mxu0 0
  %618 = vmatmul.mubr.bf16.gmra.mrb[0].mxu0 %v430
  %v619 = vpop.f32.mrb[0].mxu0
  %v620 = vadd.f32 %v523, %v619
  %v621 = vpop.f32.mrb[0].mxu0
  %v622 = vpop.f32.mrb[0].mxu0
  %v623 = vadd.f32 %v526, %v622
  %v624 = vpop.f32.mrb[0].mxu0
  %625 = vdwg.mxu0
  %v626 = vxor.u32 %v596, 2147483648
  %v627 = vxor.u32 %v599, 2147483648
  %v628 = vxor.u32 %v604, 2147483648
  %v629 = vxor.u32 %v607, 2147483648
  %v630 = vxor.u32 %v612, 2147483648
  %v631 = vxor.u32 %v615, 2147483648
  %v632 = vxor.u32 %v620, 2147483648
  %v633 = vxor.u32 %v623, 2147483648
  %v634 = vmul.f32 %v626, 1.442695
  %v635 = vpow.pop %v634
  %v636 = vmul.f32 %v627, 1.442695
  %v637 = vpow.pop %v636
  %v638 = vmul.f32 %v628, 1.442695
  %v639 = vpow.pop %v638
  %v640 = vmul.f32 %v629, 1.442695
  %v641 = vpow.pop %v640
  %v642 = vmul.f32 %v630, 1.442695
  %v643 = vpow.pop %v642
  %v644 = vmul.f32 %v631, 1.442695
  %v645 = vpow.pop %v644
  %v646 = vmul.f32 %v632, 1.442695
  %v647 = vpow.pop %v646
  %v648 = vmul.f32 %v633, 1.442695
  %v649 = vpow.pop %v648
  %v650 = vadd.f32 %v635, 1.0
  %v651 = vadd.f32 %v637, 1.0
  %v652 = vadd.f32 %v639, 1.0
  %v653 = vadd.f32 %v641, 1.0
  %v654 = vadd.f32 %v643, 1.0
  %v655 = vadd.f32 %v645, 1.0
  %v656 = vadd.f32 %v647, 1.0
  %v657 = vadd.f32 %v649, 1.0
  %v658 = vrcp.pop %v650
  %v659 = vmul.f32 1.0, %v658
  %v660 = vrcp.pop %v651
  %v661 = vmul.f32 1.0, %v660
  %v662 = vrcp.pop %v652
  %v663 = vmul.f32 1.0, %v662
  %v664 = vrcp.pop %v653
  %v665 = vmul.f32 1.0, %v664
  %v666 = vrcp.pop %v654
  %v667 = vmul.f32 1.0, %v666
  %v668 = vrcp.pop %v655
  %v669 = vmul.f32 1.0, %v668
  %v670 = vrcp.pop %v656
  %v671 = vmul.f32 1.0, %v670
  %v672 = vrcp.pop %v657
  %v673 = vmul.f32 1.0, %v672
  %v674 = vmul.f32 %v564, %v659
  %v675 = vmul.f32 %v567, %v661
  %v676 = vmul.f32 %v572, %v663
  %v677 = vmul.f32 %v575, %v665
  %v678 = vmul.f32 %v580, %v667
  %v679 = vmul.f32 %v583, %v669
  %v680 = vmul.f32 %v588, %v671
  %v681 = vmul.f32 %v591, %v673
  %v682 = vpack.c.bf16 %v675, %v674
  %v683 = vpack.c.bf16 %v677, %v676
  %v684 = vpack.c.bf16 %v679, %v678
  %v685 = vpack.c.bf16 %v681, %v680
  %v690 = vunpack.c.l.b16 %v682
  %v691 = vunpack.c.h.b16 %v682
  %v692 = vunpack.c.l.b16 %v683
  %v693 = vunpack.c.h.b16 %v683
  %v694 = vunpack.c.l.b16 %v684
  %v695 = vunpack.c.h.b16 %v684
  %v696 = vunpack.c.l.b16 %v685
  %v697 = vunpack.c.h.b16 %v685
  %v698 = vpack.c.b16 %v690, %v690
  %v699 = vpack.c.b16 %v691, %v691
  %v700 = vpack.c.b16 %v692, %v692
  %v701 = vpack.c.b16 %v693, %v693
  %v702 = vpack.c.b16 %v694, %v694
  %v703 = vpack.c.b16 %v695, %v695
  %v704 = vpack.c.b16 %v696, %v696
  %v705 = vpack.c.b16 %v697, %v697
  %714 = vst [vmem:[%s3] sm:$0xf] %v698
  %715 = vst [vmem:[%s3 + $0x4] sm:$0xf] %v699
  %716 = vst [vmem:[%s3 + $0x8] sm:$0xf] %v700
  %717 = vst [vmem:[%s3 + $0xc] sm:$0xf] %v701
  %718 = vst [vmem:[%s3 + $0x10] sm:$0xf] %v702
  %719 = vst [vmem:[%s3 + $0x14] sm:$0xf] %v703
  %720 = vst [vmem:[%s3 + $0x18] sm:$0xf] %v704
  %721 = vst [vmem:[%s3 + $0x1c] sm:$0xf] %v705
  // Predicated region
  $region14: #{init_stage_g.7} parent=0 // pred_check
    _
  $region15: #{init_stage_g.7} parent=0 // pred_check_branch
    %723 = sbr.rel (0) target = $region17
  $region16: #{init_stage_g.7} parent=0 // pred_region
    _
  $region17: #{init_stage_g.7} parent=0 // pred_fallthru
    _
  // Predicated region
  $region18: #{init_stage_g.7} parent=0 // pred_check
    _
  $region19: #{init_stage_g.7} parent=0 // pred_check_branch
    %725 = sbr.rel (0) target = $region21
  $region20: #{init_stage_g.7} parent=0 // pred_region
    _
  $region21: #{init_stage_g.7} parent=0 // pred_fallthru
    _

// kernel: init_stage_g.8
$region0: #{init_stage_g.8}
  #allocation0 [shape = 'u32[]', space=smem, size = 0x4, offset = 0x4, fixed_abs, tag = 'smem constant byte address 0x4 - core index']
  #allocation1 [shape = 'u32[144,128]{1,0:T(1,128)}', space=vmem, size = 0x12000, scoped, tag = 'internal scratch']
  %s0 = inlined_call_operand.vmem [shape: bf16[144,512], index: 0, kind: input, shape index: {}]
  %s1 = inlined_call_operand.vmem [shape: bf16[64,144], index: 1, kind: input, shape index: {}]
  %s2 = inlined_call_operand.vmem [shape: f32[64,1], index: 2, kind: input, shape index: {}]
  %s3 = inlined_call_operand.vmem [shape: bf16[32,512], index: 3, kind: output, shape index: {}]
  %s4 = sld [smem:[#allocation0]]
  $region117: #{init_stage_g.8} parent=0
    _
  %s6 = ssub.s32 1, %s4
  %s7 = scalar_select 0, %s6, %s4
  $region1: #{init_stage_g.8} parent=0
    #allocation2 [shape = 'u8[147456]{0}', space=vmem, size = 0x24000, scoped, tag = 'input window, operand 0']
    #allocation3 [shape = 'u8[32768]{0}', space=vmem, size = 0x8000, scoped, tag = 'output window, operand 0']
    loop: start=0, step=1, limit=4
    $region2: #{init_stage_g.8} parent=1 // loop_pre_header
      _
    $region3: #{init_stage_g.8} parent=1 // loop_header
      %s9 = sphi 0, %s13
      %p10 = scmp.ge.s32.totalorder %s9, 4
      %s19 = sphi 0, %s21
      %s22 = sphi 0, %s19
      %s23 = sphi 0, %s22
      %s39 = sphi 0, %s23
      %s43 = sphi 0, %s43
      %s45 = sphi 0, %s43
      %s46 = sphi 0, %s45
      %s60 = sphi 0, %s46
      %s64 = sphi 0, %s64
      %s66 = sphi 0, %s64
      %s67 = sphi 0, %s66
      %s81 = sphi 0, %s67
      %s87 = sphi 0, %s89
      %s90 = sphi 0, %s87
      %s91 = sphi 0, %s90
      %s107 = sphi 0, %s91
    $region4: #{init_stage_g.8} parent=1 // loop_header_branch
      %12 = sbr.rel (%p10) target = $region8
    $region5: #{init_stage_g.8} parent=1 // loop_body
      %s14 = ssub.s32 %s9, 1
      %s15 = ssub.s32 %s9, 2
      %s16 = sadd.s32 %s9, 1
      %s17 = ssub.s32 %s9, %s16
      %p18 = scmp.eq.s32.totalorder %s17, 0
      %s20 = sadd.s32 %s19, 1
      %s21 = scalar_select %p18, %s19, %s20
      %p24 = pneg %p18
      %p25 = scmp.eq.s32.totalorder %s9, 1
      %p26 = por %p24, %p25
      %p27 = scmp.ne.s32.totalorder %s19, %s22
      %p28 = scmp.eq.s32.totalorder %s9, 0
      %p29 = por %p27, %p28
      %p30 = scmp.ne.s32.totalorder %s19, %s22
      %p31 = scmp.eq.s32.totalorder %s14, 1
      %p32 = por %p30, %p31
      %p33 = scmp.ne.s32.totalorder %s22, %s23
      %p34 = scmp.eq.s32.totalorder %s14, 0
      %p35 = por %p33, %p34
      %p36 = scmp.ne.s32.totalorder %s22, %s23
      %p37 = scmp.eq.s32.totalorder %s15, 1
      %p38 = por %p36, %p37
      %p40 = scmp.ne.s32.totalorder %s23, %s39
      %p41 = scmp.eq.s32.totalorder %s15, 0
      %p42 = por %p40, %p41
      %s44 = sadd.s32 %s43, 1
      %p47 = scmp.eq.s32.totalorder %s9, 1
      %p48 = scmp.ne.s32.totalorder %s43, %s45
      %p49 = scmp.eq.s32.totalorder %s9, 0
      %p50 = por %p48, %p49
      %p51 = scmp.ne.s32.totalorder %s43, %s45
      %p52 = scmp.eq.s32.totalorder %s14, 1
      %p53 = por %p51, %p52
      %p54 = scmp.ne.s32.totalorder %s45, %s46
      %p55 = scmp.eq.s32.totalorder %s14, 0
      %p56 = por %p54, %p55
      %p57 = scmp.ne.s32.totalorder %s45, %s46
      %p58 = scmp.eq.s32.totalorder %s15, 1
      %p59 = por %p57, %p58
      %p61 = scmp.ne.s32.totalorder %s46, %s60
      %p62 = scmp.eq.s32.totalorder %s15, 0
      %p63 = por %p61, %p62
      %s65 = sadd.s32 %s64, 1
      %p68 = scmp.eq.s32.totalorder %s9, 1
      %p69 = scmp.ne.s32.totalorder %s64, %s66
      %p70 = scmp.eq.s32.totalorder %s9, 0
      %p71 = por %p69, %p70
      %p72 = scmp.ne.s32.totalorder %s64, %s66
      %p73 = scmp.eq.s32.totalorder %s14, 1
      %p74 = por %p72, %p73
      %p75 = scmp.ne.s32.totalorder %s66, %s67
      %p76 = scmp.eq.s32.totalorder %s14, 0
      %p77 = por %p75, %p76
      %p78 = scmp.ne.s32.totalorder %s66, %s67
      %p79 = scmp.eq.s32.totalorder %s15, 1
      %p80 = por %p78, %p79
      %p82 = scmp.ne.s32.totalorder %s67, %s81
      %p83 = scmp.eq.s32.totalorder %s15, 0
      %p84 = por %p82, %p83
      %s85 = ssub.s32 %s9, %s16
      %p86 = scmp.eq.s32.totalorder %s85, 0
      %s88 = sadd.s32 %s87, 1
      %s89 = scalar_select %p86, %s87, %s88
      %p92 = pneg %p86
      %p93 = scmp.eq.s32.totalorder %s9, 1
      %p94 = por %p92, %p93
      %p95 = scmp.ne.s32.totalorder %s87, %s90
      %p96 = scmp.eq.s32.totalorder %s9, 0
      %p97 = por %p95, %p96
      %p98 = scmp.ne.s32.totalorder %s87, %s90
      %p99 = scmp.eq.s32.totalorder %s14, 1
      %p100 = por %p98, %p99
      %p101 = scmp.ne.s32.totalorder %s90, %s91
      %p102 = scmp.eq.s32.totalorder %s14, 0
      %p103 = por %p101, %p102
      %p104 = scmp.ne.s32.totalorder %s90, %s91
      %p105 = scmp.eq.s32.totalorder %s15, 1
      %p106 = por %p104, %p105
      %p108 = scmp.ne.s32.totalorder %s91, %s107
      %p109 = scmp.eq.s32.totalorder %s15, 0
      %p110 = por %p108, %p109
      %p111 = scmp.le.s32.totalorder 1, %s9
      %p112 = scmp.lt.s32.totalorder %s9, 3
      %p113 = pnand %p111, %p112
      %p114 = pneg %p113
      // Predicated region
      $region9: #{init_stage_g.8} parent=5 // pred_check
        _
      $region10: #{init_stage_g.8} parent=5 // pred_check_branch
        %116 = sbr.rel (%p113) target = $region12
      $region11: #{init_stage_g.8} parent=5 // pred_region
        %s117 = ssub.s32 %s9, 1
        // Predicated region
        $region13: #{init_stage_g.8} parent=11 // pred_check
          %p118 = pneg %p56
        $region14: #{init_stage_g.8} parent=11 // pred_check_branch
          %120 = sbr.rel (%p118) target = $region16
        $region15: #{init_stage_g.8} parent=11 // pred_region
          _
        $region16: #{init_stage_g.8} parent=11 // pred_fallthru
          _
        // Predicated region
        $region17: #{init_stage_g.8} parent=11 // pred_check
          %p121 = pneg %p77
        $region18: #{init_stage_g.8} parent=11 // pred_check_branch
          %123 = sbr.rel (%p121) target = $region20
        $region19: #{init_stage_g.8} parent=11 // pred_region
          _
        $region20: #{init_stage_g.8} parent=11 // pred_fallthru
          _
      $region12: #{init_stage_g.8} parent=5 // pred_fallthru
        _
      %p124 = scmp.lt.s32.totalorder %s9, 2
      // Predicated region
      $region21: #{init_stage_g.8} parent=5 // pred_check
        %p125 = pneg %p124
      $region22: #{init_stage_g.8} parent=5 // pred_check_branch
        %127 = sbr.rel (%p125) target = $region24
      $region23: #{init_stage_g.8} parent=5 // pred_region
        // Predicated region
        $region25: #{init_stage_g.8} parent=23 // pred_check
          %p128 = pneg %p29
        $region26: #{init_stage_g.8} parent=23 // pred_check_branch
          %130 = sbr.rel (%p128) target = $region28
        $region27: #{init_stage_g.8} parent=23 // pred_region
          %s131 = sand.u32 %s19, 1
          %s132 = sand.u32 %s19, 1
          %s133 = smul.addr %s132, 144
          %s134 = scalar_lea.vmem [#allocation2], %s133
          %s135 = smul.u32 2, %s9
          %s136 = smul.addr %s135, 4
          %s137 = scalar_lea.vmem %s0, %s136
          // Predicated region
          $region29: #{init_stage_g.8} parent=27 // pred_check
            _
          $region30: #{init_stage_g.8} parent=27 // pred_check_branch
            %139 = sbr.rel (0) target = $region32
          $region31: #{init_stage_g.8} parent=27 // pred_region
            // Predicated region
            $region33: #{init_stage_g.8} parent=31 // pred_check
              _
            $region34: #{init_stage_g.8} parent=31 // pred_check_branch
              %141 = sbr.rel (0) target = $region36
            $region35: #{init_stage_g.8} parent=31 // pred_region
              // Predicated region
              $region48: #{init_stage_g.8} parent=35 // pred_check
                _
              $region49: #{init_stage_g.8} parent=35 // pred_check_branch
                %190 = sbr.rel (0) target = $region51
              $region50: #{init_stage_g.8} parent=35 // pred_region
                loop: start=0, step=1, limit=1
                $region52: #{init_stage_g.8} parent=50 // loop_pre_header
                  _
                $region53: #{init_stage_g.8} parent=50 // loop_header
                  %s192 = sphi 0, %s196
                  %p193 = scmp.ge.s32.totalorder %s192, 1
                  %s197 = sphi %s137, %s137
                  %s198 = sphi %s134, %s134
                $region54: #{init_stage_g.8} parent=50 // loop_header_branch
                  %195 = sbr.rel (%p193) target = $region58
                $region55: #{init_stage_g.8} parent=50 // loop_body
                  %v199 = vld [vmem:[%s197] sm:$0xff]
                  %200 = vst [vmem:[%s198] sm:$0xff] %v199
                  %v201 = vld [vmem:[%s197 + $0x10] sm:$0xff]
                  %202 = vst [vmem:[%s198 + $0x8] sm:$0xff] %v201
                  %v203 = vld [vmem:[%s197 + $0x20] sm:$0xff]
                  %204 = vst [vmem:[%s198 + $0x10] sm:$0xff] %v203
                  %v205 = vld [vmem:[%s197 + $0x30] sm:$0xff]
                  %206 = vst [vmem:[%s198 + $0x18] sm:$0xff] %v205
                  %v207 = vld [vmem:[%s197 + $0x40] sm:$0xff]
                  %208 = vst [vmem:[%s198 + $0x20] sm:$0xff] %v207
                  %v209 = vld [vmem:[%s197 + $0x50] sm:$0xff]
                  %210 = vst [vmem:[%s198 + $0x28] sm:$0xff] %v209
                  %v211 = vld [vmem:[%s197 + $0x60] sm:$0xff]
                  %212 = vst [vmem:[%s198 + $0x30] sm:$0xff] %v211
                  %v213 = vld [vmem:[%s197 + $0x70] sm:$0xff]
                  %214 = vst [vmem:[%s198 + $0x38] sm:$0xff] %v213
                  %v215 = vld [vmem:[%s197 + $0x80] sm:$0xff]
                  %216 = vst [vmem:[%s198 + $0x40] sm:$0xff] %v215
                  %v217 = vld [vmem:[%s197 + $0x90] sm:$0xff]
                  %218 = vst [vmem:[%s198 + $0x48] sm:$0xff] %v217
                  %v219 = vld [vmem:[%s197 + $0xa0] sm:$0xff]
                  %220 = vst [vmem:[%s198 + $0x50] sm:$0xff] %v219
                  %v221 = vld [vmem:[%s197 + $0xb0] sm:$0xff]
                  %222 = vst [vmem:[%s198 + $0x58] sm:$0xff] %v221
                  %v223 = vld [vmem:[%s197 + $0xc0] sm:$0xff]
                  %224 = vst [vmem:[%s198 + $0x60] sm:$0xff] %v223
                  %v225 = vld [vmem:[%s197 + $0xd0] sm:$0xff]
                  %226 = vst [vmem:[%s198 + $0x68] sm:$0xff] %v225
                  %v227 = vld [vmem:[%s197 + $0xe0] sm:$0xff]
                  %228 = vst [vmem:[%s198 + $0x70] sm:$0xff] %v227
                  %v229 = vld [vmem:[%s197 + $0xf0] sm:$0xff]
                  %230 = vst [vmem:[%s198 + $0x78] sm:$0xff] %v229
                  %v231 = vld [vmem:[%s197 + $0x100] sm:$0xff]
                  %232 = vst [vmem:[%s198 + $0x80] sm:$0xff] %v231
                  %v233 = vld [vmem:[%s197 + $0x110] sm:$0xff]
                  %234 = vst [vmem:[%s198 + $0x88] sm:$0xff] %v233
                $region56: #{init_stage_g.8} parent=50 // loop_footer
                  %s196 = sadd.s32 1, %s192
                $region57: #{init_stage_g.8} parent=50 // loop_footer_branch
                  %191 = sbr.rel target = $region53
                $region58: #{init_stage_g.8} parent=50 // loop_exit
                  _
              $region51: #{init_stage_g.8} parent=35 // pred_fallthru
                _
              // Predicated region
              $region59: #{init_stage_g.8} parent=35 // pred_check
                _
              $region60: #{init_stage_g.8} parent=35 // pred_check_branch
                %236 = sbr.rel target = $region62
              $region61: #{init_stage_g.8} parent=35 // pred_region
                _
              $region62: #{init_stage_g.8} parent=35 // pred_fallthru
                _
            $region36: #{init_stage_g.8} parent=31 // pred_fallthru
              _
            // Predicated region
            $region37: #{init_stage_g.8} parent=31 // pred_check
              _
            $region38: #{init_stage_g.8} parent=31 // pred_check_branch
              %143 = sbr.rel target = $region40
            $region39: #{init_stage_g.8} parent=31 // pred_region
              loop: start=0, step=1, limit=1
              $region41: #{init_stage_g.8} parent=39 // loop_pre_header
                _
              $region42: #{init_stage_g.8} parent=39 // loop_header
                %s146 = sphi 0, %s150
                %p147 = scmp.ge.s32.totalorder %s146, 1
                %s151 = sphi %s137, %s137
                %s152 = sphi %s134, %s134
              $region43: #{init_stage_g.8} parent=39 // loop_header_branch
                %149 = sbr.rel (%p147) target = $region47
              $region44: #{init_stage_g.8} parent=39 // loop_body
                %v153 = vld [vmem:[%s151] sm:$0xff]
                %154 = vst [vmem:[%s152] sm:$0xff] %v153
                %v155 = vld [vmem:[%s151 + $0x10] sm:$0xff]
                %156 = vst [vmem:[%s152 + $0x8] sm:$0xff] %v155
                %v157 = vld [vmem:[%s151 + $0x20] sm:$0xff]
                %158 = vst [vmem:[%s152 + $0x10] sm:$0xff] %v157
                %v159 = vld [vmem:[%s151 + $0x30] sm:$0xff]
                %160 = vst [vmem:[%s152 + $0x18] sm:$0xff] %v159
                %v161 = vld [vmem:[%s151 + $0x40] sm:$0xff]
                %162 = vst [vmem:[%s152 + $0x20] sm:$0xff] %v161
                %v163 = vld [vmem:[%s151 + $0x50] sm:$0xff]
                %164 = vst [vmem:[%s152 + $0x28] sm:$0xff] %v163
                %v165 = vld [vmem:[%s151 + $0x60] sm:$0xff]
                %166 = vst [vmem:[%s152 + $0x30] sm:$0xff] %v165
                %v167 = vld [vmem:[%s151 + $0x70] sm:$0xff]
                %168 = vst [vmem:[%s152 + $0x38] sm:$0xff] %v167
                %v169 = vld [vmem:[%s151 + $0x80] sm:$0xff]
                %170 = vst [vmem:[%s152 + $0x40] sm:$0xff] %v169
                %v171 = vld [vmem:[%s151 + $0x90] sm:$0xff]
                %172 = vst [vmem:[%s152 + $0x48] sm:$0xff] %v171
                %v173 = vld [vmem:[%s151 + $0xa0] sm:$0xff]
                %174 = vst [vmem:[%s152 + $0x50] sm:$0xff] %v173
                %v175 = vld [vmem:[%s151 + $0xb0] sm:$0xff]
                %176 = vst [vmem:[%s152 + $0x58] sm:$0xff] %v175
                %v177 = vld [vmem:[%s151 + $0xc0] sm:$0xff]
                %178 = vst [vmem:[%s152 + $0x60] sm:$0xff] %v177
                %v179 = vld [vmem:[%s151 + $0xd0] sm:$0xff]
                %180 = vst [vmem:[%s152 + $0x68] sm:$0xff] %v179
                %v181 = vld [vmem:[%s151 + $0xe0] sm:$0xff]
                %182 = vst [vmem:[%s152 + $0x70] sm:$0xff] %v181
                %v183 = vld [vmem:[%s151 + $0xf0] sm:$0xff]
                %184 = vst [vmem:[%s152 + $0x78] sm:$0xff] %v183
                %v185 = vld [vmem:[%s151 + $0x100] sm:$0xff]
                %186 = vst [vmem:[%s152 + $0x80] sm:$0xff] %v185
                %v187 = vld [vmem:[%s151 + $0x110] sm:$0xff]
                %188 = vst [vmem:[%s152 + $0x88] sm:$0xff] %v187
              $region45: #{init_stage_g.8} parent=39 // loop_footer
                %s150 = sadd.s32 1, %s146
              $region46: #{init_stage_g.8} parent=39 // loop_footer_branch
                %145 = sbr.rel target = $region42
              $region47: #{init_stage_g.8} parent=39 // loop_exit
                _
            $region40: #{init_stage_g.8} parent=31 // pred_fallthru
              _
          $region32: #{init_stage_g.8} parent=27 // pred_fallthru
            _
          %237 = vnop
        $region28: #{init_stage_g.8} parent=23 // pred_fallthru
          _
      $region24: #{init_stage_g.8} parent=5 // pred_fallthru
        _
      %p238 = scmp.le.s32.totalorder 1, %s9
      %p239 = scmp.lt.s32.totalorder %s9, 3
      %p240 = pnand %p238, %p239
      %p241 = pneg %p240
      // Predicated region
      $region63: #{init_stage_g.8} parent=5 // pred_check
        _
      $region64: #{init_stage_g.8} parent=5 // pred_check_branch
        %243 = sbr.rel (%p240) target = $region66
      $region65: #{init_stage_g.8} parent=5 // pred_region
        %s244 = ssub.s32 %s9, 1
        %s245 = sand.u32 %s22, 1
        %s246 = sand.u32 %s22, 1
        %s247 = smul.addr %s246, 144
        %s248 = scalar_lea.vmem [#allocation2], %s247
        // Predicated region
        $region67: #{init_stage_g.8} parent=65 // pred_check
          %p249 = pneg %p35
        $region68: #{init_stage_g.8} parent=65 // pred_check_branch
          %251 = sbr.rel (%p249) target = $region70
        $region69: #{init_stage_g.8} parent=65 // pred_region
          _
        $region70: #{init_stage_g.8} parent=65 // pred_fallthru
          _
        %s252 = sand.u32 %s22, 1
        %s253 = sand.u32 %s22, 1
        %s254 = smul.addr %s253, 144
        %s255 = scalar_lea.vmem [#allocation2], %s254
        %p256 = pneg %p35
        %p257 = pneg %p32
        %p258 = pneg %p56
        %p259 = pneg %p53
        %p260 = pneg %p77
        %p261 = pneg %p74
        %p262 = pneg %p103
        %p263 = pneg %p100
        %s264 = sand.u32 %s90, 1
        %s265 = sand.u32 %s90, 1
        %s266 = smul.addr %s265, 32
        %s267 = scalar_lea.vmem [#allocation3], %s266
        %s268 = smul.u32 2, %s14
        %s269 = smul.u32 2, %s14
        %v271 = vld [vmem:[%s1] sm:$0xff]
        %v272 = vld [vmem:[%s1 + $0x8] sm:$0xff]
        %v273 = vld [vmem:[%s1 + $0x10] sm:$0xff]
        %v274 = vld [vmem:[%s1 + $0x18] sm:$0xff]
        %v275 = vld [vmem:[%s1 + $0x20] sm:$0xff]
        %v276 = vld [vmem:[%s1 + $0x28] sm:$0xff]
        %v277 = vld [vmem:[%s1 + $0x30] sm:$0xff]
        %v278 = vld [vmem:[%s1 + $0x38] sm:$0xff]
        %v279 = vld [vmem:[%s248] sm:$0xff]
        %v280 = vld [vmem:[%s248 + $0x8] sm:$0xff]
        %v281 = vld [vmem:[%s248 + $0x10] sm:$0xff]
        %v282 = vld [vmem:[%s248 + $0x18] sm:$0xff]
        %v283 = vld [vmem:[%s248 + $0x20] sm:$0xff]
        %v284 = vld [vmem:[%s248 + $0x28] sm:$0xff]
        %v285 = vld [vmem:[%s248 + $0x30] sm:$0xff]
        %v286 = vld [vmem:[%s248 + $0x38] sm:$0xff]
        %v287 = vld [vmem:[%s248 + $0x40] sm:$0xff]
        %v288 = vld [vmem:[%s248 + $0x48] sm:$0xff]
        %v289 = vld [vmem:[%s248 + $0x50] sm:$0xff]
        %v290 = vld [vmem:[%s248 + $0x58] sm:$0xff]
        %v291 = vld [vmem:[%s248 + $0x60] sm:$0xff]
        %v292 = vld [vmem:[%s248 + $0x68] sm:$0xff]
        %v293 = vld [vmem:[%s248 + $0x70] sm:$0xff]
        %v294 = vld [vmem:[%s248 + $0x78] sm:$0xff]
        %v295 = vld [vmem:[%s248 + $0x80] sm:$0xff]
        %v296 = vld [vmem:[%s248 + $0x88] sm:$0xff]
        %v297 = vld [vmem:[%s2] sm:$0xff]
        %v298 = vld [vmem:[%s2 + $0x8] sm:$0xff]
        %v299 = vld [vmem:[%s2 + $0x10] sm:$0xff]
        %v300 = vld [vmem:[%s2 + $0x18] sm:$0xff]
        %v301 = vld [vmem:[%s2 + $0x20] sm:$0xff]
        %v302 = vld [vmem:[%s2 + $0x28] sm:$0xff]
        %v303 = vld [vmem:[%s2 + $0x30] sm:$0xff]
        %v304 = vld [vmem:[%s2 + $0x38] sm:$0xff]
        %306 = vset.pattern.permute.xlu0 0
        %307 = vperm.xlu0 %306, %v297
        %v308 = vpop.permute.xlu0 %307
        %311 = vset.pattern.permute.xlu0 0
        %312 = vperm.xlu0 %311, %v298
        %v313 = vpop.permute.xlu0 %312
        %316 = vset.pattern.permute.xlu0 0
        %317 = vperm.xlu0 %316, %v299
        %v318 = vpop.permute.xlu0 %317
        %321 = vset.pattern.permute.xlu0 0
        %322 = vperm.xlu0 %321, %v300
        %v323 = vpop.permute.xlu0 %322
        %326 = vset.pattern.permute.xlu0 0
        %327 = vperm.xlu0 %326, %v301
        %v328 = vpop.permute.xlu0 %327
        %331 = vset.pattern.permute.xlu0 0
        %332 = vperm.xlu0 %331, %v302
        %v333 = vpop.permute.xlu0 %332
        %336 = vset.pattern.permute.xlu0 0
        %337 = vperm.xlu0 %336, %v303
        %v338 = vpop.permute.xlu0 %337
        %341 = vset.pattern.permute.xlu0 0
        %342 = vperm.xlu0 %341, %v304
        %v343 = vpop.permute.xlu0 %342
        %v353 = vunpack.c.l.b16 %v271
        %v354 = vunpack.c.h.b16 %v271
        %v355 = vunpack.c.l.b16 %v272
        %v356 = vunpack.c.h.b16 %v272
        %v357 = vunpack.c.l.b16 %v273
        %v358 = vunpack.c.h.b16 %v273
        %v359 = vunpack.c.l.b16 %v274
        %v360 = vunpack.c.h.b16 %v274
        %v361 = vunpack.c.l.b16 %v275
        %v362 = vunpack.c.h.b16 %v275
        %v363 = vunpack.c.l.b16 %v276
        %v364 = vunpack.c.h.b16 %v276
        %v365 = vunpack.c.l.b16 %v277
        %v366 = vunpack.c.h.b16 %v277
        %v367 = vunpack.c.l.b16 %v278
        %v368 = vunpack.c.h.b16 %v278
        %v369 = vpack.c.b16 %v355, %v353
        %v370 = vpack.c.b16 %v356, %v354
        %v371 = vpack.c.b16 %v359, %v357
        %v372 = vpack.c.b16 %v360, %v358
        %v373 = vpack.c.b16 %v363, %v361
        %v374 = vpack.c.b16 %v364, %v362
        %v375 = vpack.c.b16 %v367, %v365
        %v376 = vpack.c.b16 %v368, %v366
        %v399 = vunpack.c.l.b16 %v279
        %v400 = vunpack.c.h.b16 %v279
        %v401 = vunpack.c.l.b16 %v280
        %v402 = vunpack.c.h.b16 %v280
        %v403 = vunpack.c.l.b16 %v281
        %v404 = vunpack.c.h.b16 %v281
        %v405 = vunpack.c.l.b16 %v282
        %v406 = vunpack.c.h.b16 %v282
        %v407 = vunpack.c.l.b16 %v283
        %v408 = vunpack.c.h.b16 %v283
        %v409 = vunpack.c.l.b16 %v284
        %v410 = vunpack.c.h.b16 %v284
        %v411 = vunpack.c.l.b16 %v285
        %v412 = vunpack.c.h.b16 %v285
        %v413 = vunpack.c.l.b16 %v286
        %v414 = vunpack.c.h.b16 %v286
        %v415 = vunpack.c.l.b16 %v287
        %v416 = vunpack.c.h.b16 %v287
        %v417 = vunpack.c.l.b16 %v288
        %v418 = vunpack.c.h.b16 %v288
        %v419 = vunpack.c.l.b16 %v289
        %v420 = vunpack.c.h.b16 %v289
        %v421 = vunpack.c.l.b16 %v290
        %v422 = vunpack.c.h.b16 %v290
        %v423 = vunpack.c.l.b16 %v291
        %v424 = vunpack.c.h.b16 %v291
        %v425 = vunpack.c.l.b16 %v292
        %v426 = vunpack.c.h.b16 %v292
        %v427 = vunpack.c.l.b16 %v293
        %v428 = vunpack.c.h.b16 %v293
        %v429 = vunpack.c.l.b16 %v294
        %v430 = vunpack.c.h.b16 %v294
        %v431 = vunpack.c.l.b16 %v295
        %v432 = vunpack.c.h.b16 %v295
        %v433 = vunpack.c.l.b16 %v296
        %v434 = vunpack.c.h.b16 %v296
        %v435 = vpack.c.b16 %v401, %v399
        %v436 = vpack.c.b16 %v402, %v400
        %v437 = vpack.c.b16 %v405, %v403
        %v438 = vpack.c.b16 %v406, %v404
        %v439 = vpack.c.b16 %v409, %v407
        %v440 = vpack.c.b16 %v410, %v408
        %v441 = vpack.c.b16 %v413, %v411
        %v442 = vpack.c.b16 %v414, %v412
        %v443 = vpack.c.b16 %v417, %v415
        %v444 = vpack.c.b16 %v418, %v416
        %v445 = vpack.c.b16 %v421, %v419
        %v446 = vpack.c.b16 %v422, %v420
        %v447 = vpack.c.b16 %v425, %v423
        %v448 = vpack.c.b16 %v426, %v424
        %v449 = vpack.c.b16 %v429, %v427
        %v450 = vpack.c.b16 %v430, %v428
        %v451 = vpack.c.b16 %v433, %v431
        %v452 = vpack.c.b16 %v434, %v432
        %vm471 = vcmask 130048
        %v473 = vsel %vm471, %v370, 0
        %v476 = vsel %vm471, %v372, 0
        %v479 = vsel %vm471, %v374, 0
        %v482 = vsel %vm471, %v376, 0
        %484 = vmatprep.subr.bf16.mxu0 %v436
        %485 = vmatpush1.bf16.msra.mxu0 %v435
        %486 = vmatprep.subr.bf16.mxu0 %v438
        %487 = vmatpush1.bf16.msra.mxu0 %v437
        %488 = vmatprep.subr.bf16.mxu0 %v440
        %489 = vmatpush1.bf16.msra.mxu0 %v439
        %490 = vmatprep.subr.bf16.mxu0 %v442
        %491 = vmatpush1.bf16.msra.mxu0 %v441
        %492 = vmatprep.subr.bf16.mxu0 %v444
        %493 = vmatpush1.bf16.msra.mxu0 %v443
        %494 = vmatprep.subr.bf16.mxu0 %v446
        %495 = vmatpush1.bf16.msra.mxu0 %v445
        %496 = vmatprep.subr.bf16.mxu0 %v448
        %497 = vmatpush1.bf16.msra.mxu0 %v447
        %498 = vmatprep.subr.bf16.mxu0 %v450
        %499 = vmatpush1.bf16.msra.mxu0 %v449
        %500 = vmatprep.subr.bf16.mxu0 %v452
        %501 = vmatpush1.bf16.msra.mxu0 %v451
        %502 = vmatprep.subr.bf16.mxu0 0
        %503 = vmatpush1.bf16.msra.mxu0 0
        %504 = vmatprep.subr.bf16.mxu0 0
        %505 = vmatpush1.bf16.msra.mxu0 0
        %506 = vmatprep.subr.bf16.mxu0 0
        %507 = vmatpush1.bf16.msra.mxu0 0
        %508 = vmatprep.subr.bf16.mxu0 0
        %509 = vmatpush1.bf16.msra.mxu0 0
        %510 = vmatprep.subr.bf16.mxu0 0
        %511 = vmatpush1.bf16.msra.mxu0 0
        %512 = vmatprep.subr.bf16.mxu0 0
        %513 = vmatpush1.bf16.msra.mxu0 0
        %514 = vmatprep.subr.bf16.mxu0 0
        %515 = vmatpush1.bf16.msra.mxu0 0
        %516 = vmatprep.mubr.bf16.mxu0 %v473
        %517 = vmatmul.mubr.bf16.gmra.mrb[0].mxu0 %v369
        %v518 = vpop.f32.mrb[0].mxu0
        %v519 = vadd.f32 %v308, %v518
        %v520 = vpop.f32.mrb[0].mxu0
        %v521 = vadd.f32 %v308, %v520
        %v522 = vpop.f32.mrb[0].mxu0
        %v523 = vadd.f32 %v313, %v522
        %v524 = vpop.f32.mrb[0].mxu0
        %v525 = vadd.f32 %v313, %v524
        %526 = vmatprep.mubr.bf16.mxu0 %v476
        %527 = vmatmul.mubr.bf16.gmra.mrb[0].mxu0 %v371
        %v528 = vpop.f32.mrb[0].mxu0
        %v529 = vadd.f32 %v318, %v528
        %v530 = vpop.f32.mrb[0].mxu0
        %v531 = vadd.f32 %v318, %v530
        %v532 = vpop.f32.mrb[0].mxu0
        %v533 = vadd.f32 %v323, %v532
        %v534 = vpop.f32.mrb[0].mxu0
        %v535 = vadd.f32 %v323, %v534
        %536 = vmatprep.mubr.bf16.mxu0 %v479
        %537 = vmatmul.mubr.bf16.gmra.mrb[0].mxu0 %v373
        %v538 = vpop.f32.mrb[0].mxu0
        %v539 = vadd.f32 %v328, %v538
        %v540 = vpop.f32.mrb[0].mxu0
        %v541 = vadd.f32 %v328, %v540
        %v542 = vpop.f32.mrb[0].mxu0
        %v543 = vadd.f32 %v333, %v542
        %v544 = vpop.f32.mrb[0].mxu0
        %v545 = vadd.f32 %v333, %v544
        %546 = vmatprep.mubr.bf16.mxu0 %v482
        %547 = vmatmul.mubr.bf16.gmra.mrb[0].mxu0 %v375
        %v548 = vpop.f32.mrb[0].mxu0
        %v549 = vadd.f32 %v338, %v548
        %v550 = vpop.f32.mrb[0].mxu0
        %v551 = vadd.f32 %v338, %v550
        %v552 = vpop.f32.mrb[0].mxu0
        %v553 = vadd.f32 %v343, %v552
        %v554 = vpop.f32.mrb[0].mxu0
        %v555 = vadd.f32 %v343, %v554
        %556 = vdwg.mxu0
        %v557 = vxor.u32 %v539, 2147483648
        %v558 = vxor.u32 %v541, 2147483648
        %v559 = vxor.u32 %v543, 2147483648
        %v560 = vxor.u32 %v545, 2147483648
        %v561 = vxor.u32 %v549, 2147483648
        %v562 = vxor.u32 %v551, 2147483648
        %v563 = vxor.u32 %v553, 2147483648
        %v564 = vxor.u32 %v555, 2147483648
        %v565 = vmul.f32 %v557, 1.442695
        %v566 = vpow.pop %v565
        %v567 = vmul.f32 %v558, 1.442695
        %v568 = vpow.pop %v567
        %v569 = vmul.f32 %v559, 1.442695
        %v570 = vpow.pop %v569
        %v571 = vmul.f32 %v560, 1.442695
        %v572 = vpow.pop %v571
        %v573 = vmul.f32 %v561, 1.442695
        %v574 = vpow.pop %v573
        %v575 = vmul.f32 %v562, 1.442695
        %v576 = vpow.pop %v575
        %v577 = vmul.f32 %v563, 1.442695
        %v578 = vpow.pop %v577
        %v579 = vmul.f32 %v564, 1.442695
        %v580 = vpow.pop %v579
        %v581 = vadd.f32 %v566, 1.0
        %v582 = vadd.f32 %v568, 1.0
        %v583 = vadd.f32 %v570, 1.0
        %v584 = vadd.f32 %v572, 1.0
        %v585 = vadd.f32 %v574, 1.0
        %v586 = vadd.f32 %v576, 1.0
        %v587 = vadd.f32 %v578, 1.0
        %v588 = vadd.f32 %v580, 1.0
        %v589 = vrcp.pop %v581
        %v590 = vmul.f32 1.0, %v589
        %v591 = vrcp.pop %v582
        %v592 = vmul.f32 1.0, %v591
        %v593 = vrcp.pop %v583
        %v594 = vmul.f32 1.0, %v593
        %v595 = vrcp.pop %v584
        %v596 = vmul.f32 1.0, %v595
        %v597 = vrcp.pop %v585
        %v598 = vmul.f32 1.0, %v597
        %v599 = vrcp.pop %v586
        %v600 = vmul.f32 1.0, %v599
        %v601 = vrcp.pop %v587
        %v602 = vmul.f32 1.0, %v601
        %v603 = vrcp.pop %v588
        %v604 = vmul.f32 1.0, %v603
        %v605 = vmul.f32 %v519, %v590
        %v606 = vmul.f32 %v521, %v592
        %v607 = vmul.f32 %v523, %v594
        %v608 = vmul.f32 %v525, %v596
        %v609 = vmul.f32 %v529, %v598
        %v610 = vmul.f32 %v531, %v600
        %v611 = vmul.f32 %v533, %v602
        %v612 = vmul.f32 %v535, %v604
        %v613 = vpack.c.bf16 %v607, %v605
        %v614 = vpack.c.bf16 %v608, %v606
        %v615 = vpack.c.bf16 %v611, %v609
        %v616 = vpack.c.bf16 %v612, %v610
        %v621 = vunpack.c.l.b16 %v613
        %v622 = vunpack.c.l.b16 %v614
        %v623 = vunpack.c.h.b16 %v613
        %v624 = vunpack.c.h.b16 %v614
        %v625 = vunpack.c.l.b16 %v615
        %v626 = vunpack.c.l.b16 %v616
        %v627 = vunpack.c.h.b16 %v615
        %v628 = vunpack.c.h.b16 %v616
        %v629 = vpack.c.b16 %v622, %v621
        %v630 = vpack.c.b16 %v624, %v623
        %v631 = vpack.c.b16 %v626, %v625
        %v632 = vpack.c.b16 %v628, %v627
        %637 = vst [vmem:[%s267] sm:$0xff] %v629
        %638 = vst [vmem:[%s267 + $0x8] sm:$0xff] %v630
        %639 = vst [vmem:[%s267 + $0x10] sm:$0xff] %v631
        %640 = vst [vmem:[%s267 + $0x18] sm:$0xff] %v632
        %s641 = sand.u32 %s90, 1
        %s642 = sand.u32 %s90, 1
        %s643 = smul.addr %s642, 32
        %s644 = scalar_lea.vmem [#allocation3], %s643
        // Predicated region
        $region71: #{init_stage_g.8} parent=65 // pred_check
          %p645 = pneg %p100
        $region72: #{init_stage_g.8} parent=65 // pred_check_branch
          %647 = sbr.rel (%p645) target = $region74
        $region73: #{init_stage_g.8} parent=65 // pred_region
          %s648 = smul.u32 2, %s14
          %s649 = smul.addr %s648, 4
          %s650 = scalar_lea.vmem %s3, %s649
          // Predicated region
          $region75: #{init_stage_g.8} parent=73 // pred_check
            _
          $region76: #{init_stage_g.8} parent=73 // pred_check_branch
            %652 = sbr.rel (0) target = $region78
          $region77: #{init_stage_g.8} parent=73 // pred_region
            // Predicated region
            $region79: #{init_stage_g.8} parent=77 // pred_check
              _
            $region80: #{init_stage_g.8} parent=77 // pred_check_branch
              %654 = sbr.rel (0) target = $region82
            $region81: #{init_stage_g.8} parent=77 // pred_region
              // Predicated region
              $region94: #{init_stage_g.8} parent=81 // pred_check
                _
              $region95: #{init_stage_g.8} parent=81 // pred_check_branch
                %675 = sbr.rel (0) target = $region97
              $region96: #{init_stage_g.8} parent=81 // pred_region
                loop: start=0, step=1, limit=1
                $region98: #{init_stage_g.8} parent=96 // loop_pre_header
                  _
                $region99: #{init_stage_g.8} parent=96 // loop_header
                  %s677 = sphi 0, %s681
                  %p678 = scmp.ge.s32.totalorder %s677, 1
                  %s682 = sphi %s644, %s644
                  %s683 = sphi %s650, %s650
                $region100: #{init_stage_g.8} parent=96 // loop_header_branch
                  %680 = sbr.rel (%p678) target = $region104
                $region101: #{init_stage_g.8} parent=96 // loop_body
                  %v684 = vld [vmem:[%s682] sm:$0xff]
                  %685 = vst [vmem:[%s683] sm:$0xff] %v684
                  %v686 = vld [vmem:[%s682 + $0x8] sm:$0xff]
                  %687 = vst [vmem:[%s683 + $0x10] sm:$0xff] %v686
                  %v688 = vld [vmem:[%s682 + $0x10] sm:$0xff]
                  %689 = vst [vmem:[%s683 + $0x20] sm:$0xff] %v688
                  %v690 = vld [vmem:[%s682 + $0x18] sm:$0xff]
                  %691 = vst [vmem:[%s683 + $0x30] sm:$0xff] %v690
                $region102: #{init_stage_g.8} parent=96 // loop_footer
                  %s681 = sadd.s32 1, %s677
                $region103: #{init_stage_g.8} parent=96 // loop_footer_branch
                  %676 = sbr.rel target = $region99
                $region104: #{init_stage_g.8} parent=96 // loop_exit
                  _
              $region97: #{init_stage_g.8} parent=81 // pred_fallthru
                _
              // Predicated region
              $region105: #{init_stage_g.8} parent=81 // pred_check
                _
              $region106: #{init_stage_g.8} parent=81 // pred_check_branch
                %693 = sbr.rel target = $region108
              $region107: #{init_stage_g.8} parent=81 // pred_region
                _
              $region108: #{init_stage_g.8} parent=81 // pred_fallthru
                _
            $region82: #{init_stage_g.8} parent=77 // pred_fallthru
              _
            // Predicated region
            $region83: #{init_stage_g.8} parent=77 // pred_check
              _
            $region84: #{init_stage_g.8} parent=77 // pred_check_branch
              %656 = sbr.rel target = $region86
            $region85: #{init_stage_g.8} parent=77 // pred_region
              loop: start=0, step=1, limit=1
              $region87: #{init_stage_g.8} parent=85 // loop_pre_header
                _
              $region88: #{init_stage_g.8} parent=85 // loop_header
                %s659 = sphi 0, %s663
                %p660 = scmp.ge.s32.totalorder %s659, 1
                %s664 = sphi %s644, %s644
                %s665 = sphi %s650, %s650
              $region89: #{init_stage_g.8} parent=85 // loop_header_branch
                %662 = sbr.rel (%p660) target = $region93
              $region90: #{init_stage_g.8} parent=85 // loop_body
                %v666 = vld [vmem:[%s664] sm:$0xff]
                %667 = vst [vmem:[%s665] sm:$0xff] %v666
                %v668 = vld [vmem:[%s664 + $0x8] sm:$0xff]
                %669 = vst [vmem:[%s665 + $0x10] sm:$0xff] %v668
                %v670 = vld [vmem:[%s664 + $0x10] sm:$0xff]
                %671 = vst [vmem:[%s665 + $0x20] sm:$0xff] %v670
                %v672 = vld [vmem:[%s664 + $0x18] sm:$0xff]
                %673 = vst [vmem:[%s665 + $0x30] sm:$0xff] %v672
              $region91: #{init_stage_g.8} parent=85 // loop_footer
                %s663 = sadd.s32 1, %s659
              $region92: #{init_stage_g.8} parent=85 // loop_footer_branch
                %658 = sbr.rel target = $region88
              $region93: #{init_stage_g.8} parent=85 // loop_exit
                _
            $region86: #{init_stage_g.8} parent=77 // pred_fallthru
              _
          $region78: #{init_stage_g.8} parent=73 // pred_fallthru
            _
          %694 = vnop
        $region74: #{init_stage_g.8} parent=65 // pred_fallthru
          _
      $region66: #{init_stage_g.8} parent=5 // pred_fallthru
        _
      %p695 = scmp.le.s32.totalorder 2, %s9
      // Predicated region
      $region109: #{init_stage_g.8} parent=5 // pred_check
        %p696 = pneg %p695
      $region110: #{init_stage_g.8} parent=5 // pred_check_branch
        %698 = sbr.rel (%p696) target = $region112
      $region111: #{init_stage_g.8} parent=5 // pred_region
        %s699 = ssub.s32 %s9, 2
        // Predicated region
        $region113: #{init_stage_g.8} parent=111 // pred_check
          %p700 = pneg %p106
        $region114: #{init_stage_g.8} parent=111 // pred_check_branch
          %702 = sbr.rel (%p700) target = $region116
        $region115: #{init_stage_g.8} parent=111 // pred_region
          %s703 = sand.u32 %s91, 1
          %s704 = sand.u32 %s91, 1
          %s705 = smul.addr %s704, 32
          %s706 = scalar_lea.vmem [#allocation3], %s705
        $region116: #{init_stage_g.8} parent=111 // pred_fallthru
          _
      $region112: #{init_stage_g.8} parent=5 // pred_fallthru
        _
    $region6: #{init_stage_g.8} parent=1 // loop_footer
      %s13 = sadd.s32 1, %s9
    $region7: #{init_stage_g.8} parent=1 // loop_footer_branch
      %8 = sbr.rel target = $region3
    $region8: #{init_stage_g.8} parent=1 // loop_exit
      _

// kernel: init_stage_g.9
$region0: #{init_stage_g.9}
  #allocation0 [shape = 'u32[]', space=smem, size = 0x4, offset = 0x4, fixed_abs, tag = 'smem constant byte address 0x4 - core index']
  #allocation1 [shape = 'u32[144,128]{1,0:T(1,128)}', space=vmem, size = 0x12000, scoped, tag = 'internal scratch']
  %s0 = inlined_call_operand.vmem [shape: bf16[72,2048], index: 0, kind: input, shape index: {}]
  %s1 = inlined_call_operand.vmem [shape: bf16[32,72], index: 1, kind: input, shape index: {}]
  %s2 = inlined_call_operand.vmem [shape: f32[32,1], index: 2, kind: input, shape index: {}]
  %s3 = inlined_call_operand.vmem [shape: f32[16,2048], index: 3, kind: output, shape index: {}]
  %s4 = sld [smem:[#allocation0]]
  $region87: #{init_stage_g.9} parent=0
    _
  %s6 = ssub.s32 1, %s4
  %s7 = scalar_select 0, %s6, %s4
  $region1: #{init_stage_g.9} parent=0
    #allocation2 [shape = 'u8[294912]{0}', space=vmem, size = 0x48000, scoped, tag = 'input window, operand 0']
    #allocation3 [shape = 'u8[131072]{0}', space=vmem, size = 0x20000, scoped, tag = 'output window, operand 0']
    loop: start=0, step=1, limit=4
    $region2: #{init_stage_g.9} parent=1 // loop_pre_header
      _
    $region3: #{init_stage_g.9} parent=1 // loop_header
      %s9 = sphi 0, %s13
      %p10 = scmp.ge.s32.totalorder %s9, 4
      %s19 = sphi 0, %s21
      %s22 = sphi 0, %s19
      %s23 = sphi 0, %s22
      %s39 = sphi 0, %s23
      %s43 = sphi 0, %s43
      %s45 = sphi 0, %s43
      %s46 = sphi 0, %s45
      %s60 = sphi 0, %s46
      %s64 = sphi 0, %s64
      %s66 = sphi 0, %s64
      %s67 = sphi 0, %s66
      %s81 = sphi 0, %s67
      %s87 = sphi 0, %s89
      %s90 = sphi 0, %s87
      %s91 = sphi 0, %s90
      %s107 = sphi 0, %s91
    $region4: #{init_stage_g.9} parent=1 // loop_header_branch
      %12 = sbr.rel (%p10) target = $region8
    $region5: #{init_stage_g.9} parent=1 // loop_body
      %s14 = ssub.s32 %s9, 1
      %s15 = ssub.s32 %s9, 2
      %s16 = sadd.s32 %s9, 1
      %s17 = ssub.s32 %s9, %s16
      %p18 = scmp.eq.s32.totalorder %s17, 0
      %s20 = sadd.s32 %s19, 1
      %s21 = scalar_select %p18, %s19, %s20
      %p24 = pneg %p18
      %p25 = scmp.eq.s32.totalorder %s9, 1
      %p26 = por %p24, %p25
      %p27 = scmp.ne.s32.totalorder %s19, %s22
      %p28 = scmp.eq.s32.totalorder %s9, 0
      %p29 = por %p27, %p28
      %p30 = scmp.ne.s32.totalorder %s19, %s22
      %p31 = scmp.eq.s32.totalorder %s14, 1
      %p32 = por %p30, %p31
      %p33 = scmp.ne.s32.totalorder %s22, %s23
      %p34 = scmp.eq.s32.totalorder %s14, 0
      %p35 = por %p33, %p34
      %p36 = scmp.ne.s32.totalorder %s22, %s23
      %p37 = scmp.eq.s32.totalorder %s15, 1
      %p38 = por %p36, %p37
      %p40 = scmp.ne.s32.totalorder %s23, %s39
      %p41 = scmp.eq.s32.totalorder %s15, 0
      %p42 = por %p40, %p41
      %s44 = sadd.s32 %s43, 1
      %p47 = scmp.eq.s32.totalorder %s9, 1
      %p48 = scmp.ne.s32.totalorder %s43, %s45
      %p49 = scmp.eq.s32.totalorder %s9, 0
      %p50 = por %p48, %p49
      %p51 = scmp.ne.s32.totalorder %s43, %s45
      %p52 = scmp.eq.s32.totalorder %s14, 1
      %p53 = por %p51, %p52
      %p54 = scmp.ne.s32.totalorder %s45, %s46
      %p55 = scmp.eq.s32.totalorder %s14, 0
      %p56 = por %p54, %p55
      %p57 = scmp.ne.s32.totalorder %s45, %s46
      %p58 = scmp.eq.s32.totalorder %s15, 1
      %p59 = por %p57, %p58
      %p61 = scmp.ne.s32.totalorder %s46, %s60
      %p62 = scmp.eq.s32.totalorder %s15, 0
      %p63 = por %p61, %p62
      %s65 = sadd.s32 %s64, 1
      %p68 = scmp.eq.s32.totalorder %s9, 1
      %p69 = scmp.ne.s32.totalorder %s64, %s66
      %p70 = scmp.eq.s32.totalorder %s9, 0
      %p71 = por %p69, %p70
      %p72 = scmp.ne.s32.totalorder %s64, %s66
      %p73 = scmp.eq.s32.totalorder %s14, 1
      %p74 = por %p72, %p73
      %p75 = scmp.ne.s32.totalorder %s66, %s67
      %p76 = scmp.eq.s32.totalorder %s14, 0
      %p77 = por %p75, %p76
      %p78 = scmp.ne.s32.totalorder %s66, %s67
      %p79 = scmp.eq.s32.totalorder %s15, 1
      %p80 = por %p78, %p79
      %p82 = scmp.ne.s32.totalorder %s67, %s81
      %p83 = scmp.eq.s32.totalorder %s15, 0
      %p84 = por %p82, %p83
      %s85 = ssub.s32 %s9, %s16
      %p86 = scmp.eq.s32.totalorder %s85, 0
      %s88 = sadd.s32 %s87, 1
      %s89 = scalar_select %p86, %s87, %s88
      %p92 = pneg %p86
      %p93 = scmp.eq.s32.totalorder %s9, 1
      %p94 = por %p92, %p93
      %p95 = scmp.ne.s32.totalorder %s87, %s90
      %p96 = scmp.eq.s32.totalorder %s9, 0
      %p97 = por %p95, %p96
      %p98 = scmp.ne.s32.totalorder %s87, %s90
      %p99 = scmp.eq.s32.totalorder %s14, 1
      %p100 = por %p98, %p99
      %p101 = scmp.ne.s32.totalorder %s90, %s91
      %p102 = scmp.eq.s32.totalorder %s14, 0
      %p103 = por %p101, %p102
      %p104 = scmp.ne.s32.totalorder %s90, %s91
      %p105 = scmp.eq.s32.totalorder %s15, 1
      %p106 = por %p104, %p105
      %p108 = scmp.ne.s32.totalorder %s91, %s107
      %p109 = scmp.eq.s32.totalorder %s15, 0
      %p110 = por %p108, %p109
      %p111 = scmp.le.s32.totalorder 1, %s9
      %p112 = scmp.lt.s32.totalorder %s9, 3
      %p113 = pnand %p111, %p112
      %p114 = pneg %p113
      // Predicated region
      $region9: #{init_stage_g.9} parent=5 // pred_check
        _
      $region10: #{init_stage_g.9} parent=5 // pred_check_branch
        %116 = sbr.rel (%p113) target = $region12
      $region11: #{init_stage_g.9} parent=5 // pred_region
        %s117 = ssub.s32 %s9, 1
        // Predicated region
        $region13: #{init_stage_g.9} parent=11 // pred_check
          %p118 = pneg %p56
        $region14: #{init_stage_g.9} parent=11 // pred_check_branch
          %120 = sbr.rel (%p118) target = $region16
        $region15: #{init_stage_g.9} parent=11 // pred_region
          _
        $region16: #{init_stage_g.9} parent=11 // pred_fallthru
          _
        // Predicated region
        $region17: #{init_stage_g.9} parent=11 // pred_check
          %p121 = pneg %p77
        $region18: #{init_stage_g.9} parent=11 // pred_check_branch
          %123 = sbr.rel (%p121) target = $region20
        $region19: #{init_stage_g.9} parent=11 // pred_region
          _
        $region20: #{init_stage_g.9} parent=11 // pred_fallthru
          _
      $region12: #{init_stage_g.9} parent=5 // pred_fallthru
        _
      %p124 = scmp.lt.s32.totalorder %s9, 2
      // Predicated region
      $region21: #{init_stage_g.9} parent=5 // pred_check
        %p125 = pneg %p124
      $region22: #{init_stage_g.9} parent=5 // pred_check_branch
        %127 = sbr.rel (%p125) target = $region24
      $region23: #{init_stage_g.9} parent=5 // pred_region
        // Predicated region
        $region25: #{init_stage_g.9} parent=23 // pred_check
          %p128 = pneg %p29
        $region26: #{init_stage_g.9} parent=23 // pred_check_branch
          %130 = sbr.rel (%p128) target = $region28
        $region27: #{init_stage_g.9} parent=23 // pred_region
          %s131 = sand.u32 %s19, 1
          %s132 = sand.u32 %s19, 1
          %s133 = smul.addr %s132, 288
          %s134 = scalar_lea.vmem [#allocation2], %s133
          %s135 = smul.u32 8, %s9
          %s136 = smul.addr %s135, 4
          %s137 = scalar_lea.vmem %s0, %s136
          // Predicated region
          $region29: #{init_stage_g.9} parent=27 // pred_check
            _
          $region30: #{init_stage_g.9} parent=27 // pred_check_branch
            %139 = sbr.rel (0) target = $region32
          $region31: #{init_stage_g.9} parent=27 // pred_region
            // Predicated region
            $region33: #{init_stage_g.9} parent=31 // pred_check
              _
            $region34: #{init_stage_g.9} parent=31 // pred_check_branch
              %141 = sbr.rel (0) target = $region36
            $region35: #{init_stage_g.9} parent=31 // pred_region
              loop: start=0, step=1, limit=1
              $region37: #{init_stage_g.9} parent=35 // loop_pre_header
                _
              $region38: #{init_stage_g.9} parent=35 // loop_header
                %s143 = sphi 0, %s147
                %p144 = scmp.ge.s32.totalorder %s143, 1
                %s148 = sphi %s137, %s137
                %s149 = sphi %s134, %s134
              $region39: #{init_stage_g.9} parent=35 // loop_header_branch
                %146 = sbr.rel (%p144) target = $region43
              $region40: #{init_stage_g.9} parent=35 // loop_body
                %v150 = vld [vmem:[%s148] sm:$0xff]
                %151 = vst [vmem:[%s149] sm:$0xff] %v150
                %v152 = vld [vmem:[%s148 + $0x8] sm:$0xff]
                %153 = vst [vmem:[%s149 + $0x8] sm:$0xff] %v152
                %v154 = vld [vmem:[%s148 + $0x10] sm:$0xff]
                %155 = vst [vmem:[%s149 + $0x10] sm:$0xff] %v154
                %v156 = vld [vmem:[%s148 + $0x18] sm:$0xff]
                %157 = vst [vmem:[%s149 + $0x18] sm:$0xff] %v156
                %v158 = vld [vmem:[%s148 + $0x40] sm:$0xff]
                %159 = vst [vmem:[%s149 + $0x20] sm:$0xff] %v158
                %v160 = vld [vmem:[%s148 + $0x48] sm:$0xff]
                %161 = vst [vmem:[%s149 + $0x28] sm:$0xff] %v160
                %v162 = vld [vmem:[%s148 + $0x50] sm:$0xff]
                %163 = vst [vmem:[%s149 + $0x30] sm:$0xff] %v162
                %v164 = vld [vmem:[%s148 + $0x58] sm:$0xff]
                %165 = vst [vmem:[%s149 + $0x38] sm:$0xff] %v164
                %v166 = vld [vmem:[%s148 + $0x80] sm:$0xff]
                %167 = vst [vmem:[%s149 + $0x40] sm:$0xff] %v166
                %v168 = vld [vmem:[%s148 + $0x88] sm:$0xff]
                %169 = vst [vmem:[%s149 + $0x48] sm:$0xff] %v168
                %v170 = vld [vmem:[%s148 + $0x90] sm:$0xff]
                %171 = vst [vmem:[%s149 + $0x50] sm:$0xff] %v170
                %v172 = vld [vmem:[%s148 + $0x98] sm:$0xff]
                %173 = vst [vmem:[%s149 + $0x58] sm:$0xff] %v172
                %v174 = vld [vmem:[%s148 + $0xc0] sm:$0xff]
                %175 = vst [vmem:[%s149 + $0x60] sm:$0xff] %v174
                %v176 = vld [vmem:[%s148 + $0xc8] sm:$0xff]
                %177 = vst [vmem:[%s149 + $0x68] sm:$0xff] %v176
                %v178 = vld [vmem:[%s148 + $0xd0] sm:$0xff]
                %179 = vst [vmem:[%s149 + $0x70] sm:$0xff] %v178
                %v180 = vld [vmem:[%s148 + $0xd8] sm:$0xff]
                %181 = vst [vmem:[%s149 + $0x78] sm:$0xff] %v180
                %v182 = vld [vmem:[%s148 + $0x100] sm:$0xff]
                %183 = vst [vmem:[%s149 + $0x80] sm:$0xff] %v182
                %v184 = vld [vmem:[%s148 + $0x108] sm:$0xff]
                %185 = vst [vmem:[%s149 + $0x88] sm:$0xff] %v184
                %v186 = vld [vmem:[%s148 + $0x110] sm:$0xff]
                %187 = vst [vmem:[%s149 + $0x90] sm:$0xff] %v186
                %v188 = vld [vmem:[%s148 + $0x118] sm:$0xff]
                %189 = vst [vmem:[%s149 + $0x98] sm:$0xff] %v188
                %v190 = vld [vmem:[%s148 + $0x140] sm:$0xff]
                %191 = vst [vmem:[%s149 + $0xa0] sm:$0xff] %v190
                %v192 = vld [vmem:[%s148 + $0x148] sm:$0xff]
                %193 = vst [vmem:[%s149 + $0xa8] sm:$0xff] %v192
                %v194 = vld [vmem:[%s148 + $0x150] sm:$0xff]
                %195 = vst [vmem:[%s149 + $0xb0] sm:$0xff] %v194
                %v196 = vld [vmem:[%s148 + $0x158] sm:$0xff]
                %197 = vst [vmem:[%s149 + $0xb8] sm:$0xff] %v196
                %v198 = vld [vmem:[%s148 + $0x180] sm:$0xff]
                %199 = vst [vmem:[%s149 + $0xc0] sm:$0xff] %v198
                %v200 = vld [vmem:[%s148 + $0x188] sm:$0xff]
                %201 = vst [vmem:[%s149 + $0xc8] sm:$0xff] %v200
                %v202 = vld [vmem:[%s148 + $0x190] sm:$0xff]
                %203 = vst [vmem:[%s149 + $0xd0] sm:$0xff] %v202
                %v204 = vld [vmem:[%s148 + $0x198] sm:$0xff]
                %205 = vst [vmem:[%s149 + $0xd8] sm:$0xff] %v204
                %v206 = vld [vmem:[%s148 + $0x1c0] sm:$0xff]
                %207 = vst [vmem:[%s149 + $0xe0] sm:$0xff] %v206
                %v208 = vld [vmem:[%s148 + $0x1c8] sm:$0xff]
                %209 = vst [vmem:[%s149 + $0xe8] sm:$0xff] %v208
                %v210 = vld [vmem:[%s148 + $0x1d0] sm:$0xff]
                %211 = vst [vmem:[%s149 + $0xf0] sm:$0xff] %v210
                %v212 = vld [vmem:[%s148 + $0x1d8] sm:$0xff]
                %213 = vst [vmem:[%s149 + $0xf8] sm:$0xff] %v212
                %v214 = vld [vmem:[%s148 + $0x200] sm:$0xff]
                %215 = vst [vmem:[%s149 + $0x100] sm:$0xff] %v214
                %v216 = vld [vmem:[%s148 + $0x208] sm:$0xff]
                %217 = vst [vmem:[%s149 + $0x108] sm:$0xff] %v216
                %v218 = vld [vmem:[%s148 + $0x210] sm:$0xff]
                %219 = vst [vmem:[%s149 + $0x110] sm:$0xff] %v218
                %v220 = vld [vmem:[%s148 + $0x218] sm:$0xff]
                %221 = vst [vmem:[%s149 + $0x118] sm:$0xff] %v220
              $region41: #{init_stage_g.9} parent=35 // loop_footer
                %s147 = sadd.s32 1, %s143
              $region42: #{init_stage_g.9} parent=35 // loop_footer_branch
                %142 = sbr.rel target = $region38
              $region43: #{init_stage_g.9} parent=35 // loop_exit
                _
            $region36: #{init_stage_g.9} parent=31 // pred_fallthru
              _
            // Predicated region
            $region44: #{init_stage_g.9} parent=31 // pred_check
              _
            $region45: #{init_stage_g.9} parent=31 // pred_check_branch
              %223 = sbr.rel target = $region47
            $region46: #{init_stage_g.9} parent=31 // pred_region
              _
            $region47: #{init_stage_g.9} parent=31 // pred_fallthru
              _
          $region32: #{init_stage_g.9} parent=27 // pred_fallthru
            _
          %224 = vnop
        $region28: #{init_stage_g.9} parent=23 // pred_fallthru
          _
      $region24: #{init_stage_g.9} parent=5 // pred_fallthru
        _
      %p225 = scmp.le.s32.totalorder 1, %s9
      %p226 = scmp.lt.s32.totalorder %s9, 3
      %p227 = pnand %p225, %p226
      %p228 = pneg %p227
      // Predicated region
      $region48: #{init_stage_g.9} parent=5 // pred_check
        _
      $region49: #{init_stage_g.9} parent=5 // pred_check_branch
        %230 = sbr.rel (%p227) target = $region51
      $region50: #{init_stage_g.9} parent=5 // pred_region
        %s231 = ssub.s32 %s9, 1
        %s232 = sand.u32 %s22, 1
        %s233 = sand.u32 %s22, 1
        %s234 = smul.addr %s233, 288
        %s235 = scalar_lea.vmem [#allocation2], %s234
        // Predicated region
        $region52: #{init_stage_g.9} parent=50 // pred_check
          %p236 = pneg %p35
        $region53: #{init_stage_g.9} parent=50 // pred_check_branch
          %238 = sbr.rel (%p236) target = $region55
        $region54: #{init_stage_g.9} parent=50 // pred_region
          _
        $region55: #{init_stage_g.9} parent=50 // pred_fallthru
          _
        %s239 = sand.u32 %s22, 1
        %s240 = sand.u32 %s22, 1
        %s241 = smul.addr %s240, 288
        %s242 = scalar_lea.vmem [#allocation2], %s241
        %p243 = pneg %p35
        %p244 = pneg %p32
        %p245 = pneg %p56
        %p246 = pneg %p53
        %p247 = pneg %p77
        %p248 = pneg %p74
        %p249 = pneg %p103
        %p250 = pneg %p100
        %s251 = sand.u32 %s90, 1
        %s252 = sand.u32 %s90, 1
        %s253 = smul.addr %s252, 128
        %s254 = scalar_lea.vmem [#allocation3], %s253
        %s255 = smul.u32 8, %s14
        %s256 = smul.u32 8, %s14
        %v258 = vld [vmem:[%s1] sm:$0xf]
        %v259 = vld [vmem:[%s1 + $0x4] sm:$0xf]
        %v260 = vld [vmem:[%s1 + $0x8] sm:$0xf]
        %v261 = vld [vmem:[%s1 + $0xc] sm:$0xf]
        %v262 = vld [vmem:[%s235] sm:$0xff]
        %v263 = vld [vmem:[%s235 + $0x8] sm:$0xff]
        %v264 = vld [vmem:[%s235 + $0x10] sm:$0xff]
        %v265 = vld [vmem:[%s235 + $0x18] sm:$0xff]
        %v266 = vld [vmem:[%s235 + $0x20] sm:$0xff]
        %v267 = vld [vmem:[%s235 + $0x28] sm:$0xff]
        %v268 = vld [vmem:[%s235 + $0x30] sm:$0xff]
        %v269 = vld [vmem:[%s235 + $0x38] sm:$0xff]
        %v270 = vld [vmem:[%s235 + $0x40] sm:$0xff]
        %v271 = vld [vmem:[%s235 + $0x48] sm:$0xff]
        %v272 = vld [vmem:[%s235 + $0x50] sm:$0xff]
        %v273 = vld [vmem:[%s235 + $0x58] sm:$0xff]
        %v274 = vld [vmem:[%s235 + $0x60] sm:$0xff]
        %v275 = vld [vmem:[%s235 + $0x68] sm:$0xff]
        %v276 = vld [vmem:[%s235 + $0x70] sm:$0xff]
        %v277 = vld [vmem:[%s235 + $0x78] sm:$0xff]
        %v278 = vld [vmem:[%s235 + $0x80] sm:$0xff]
        %v279 = vld [vmem:[%s235 + $0x88] sm:$0xff]
        %v280 = vld [vmem:[%s235 + $0x90] sm:$0xff]
        %v281 = vld [vmem:[%s235 + $0x98] sm:$0xff]
        %v282 = vld [vmem:[%s235 + $0xa0] sm:$0xff]
        %v283 = vld [vmem:[%s235 + $0xa8] sm:$0xff]
        %v284 = vld [vmem:[%s235 + $0xb0] sm:$0xff]
        %v285 = vld [vmem:[%s235 + $0xb8] sm:$0xff]
        %v286 = vld [vmem:[%s235 + $0xc0] sm:$0xff]
        %v287 = vld [vmem:[%s235 + $0xc8] sm:$0xff]
        %v288 = vld [vmem:[%s235 + $0xd0] sm:$0xff]
        %v289 = vld [vmem:[%s235 + $0xd8] sm:$0xff]
        %v290 = vld [vmem:[%s235 + $0xe0] sm:$0xff]
        %v291 = vld [vmem:[%s235 + $0xe8] sm:$0xff]
        %v292 = vld [vmem:[%s235 + $0xf0] sm:$0xff]
        %v293 = vld [vmem:[%s235 + $0xf8] sm:$0xff]
        %v294 = vld [vmem:[%s235 + $0x100] sm:$0xff]
        %v295 = vld [vmem:[%s235 + $0x108] sm:$0xff]
        %v296 = vld [vmem:[%s235 + $0x110] sm:$0xff]
        %v297 = vld [vmem:[%s235 + $0x118] sm:$0xff]
        %v298 = vld [vmem:[%s2] sm:$0xff]
        %v299 = vld [vmem:[%s2 + $0x8] sm:$0xff]
        %v300 = vld [vmem:[%s2 + $0x10] sm:$0xff]
        %v301 = vld [vmem:[%s2 + $0x18] sm:$0xff]
        %303 = vset.pattern.permute.xlu0 0
        %304 = vperm.xlu0 %303, %v298
        %v305 = vpop.permute.xlu0 %304
        %308 = vset.pattern.permute.xlu0 0
        %309 = vperm.xlu0 %308, %v299
        %v310 = vpop.permute.xlu0 %309
        %313 = vset.pattern.permute.xlu0 0
        %314 = vperm.xlu0 %313, %v300
        %v315 = vpop.permute.xlu0 %314
        %318 = vset.pattern.permute.xlu0 0
        %319 = vperm.xlu0 %318, %v301
        %v320 = vpop.permute.xlu0 %319
        %v326 = vunpack.c.l.b16 %v258
        %v327 = vunpack.c.l.b16 %v259
        %v328 = vunpack.c.l.b16 %v260
        %v329 = vunpack.c.l.b16 %v261
        %v330 = vpack.c.b16 %v327, %v326
        %v331 = vpack.c.b16 %v329, %v328
        %v368 = vunpack.c.l.b16 %v262
        %v369 = vunpack.c.h.b16 %v262
        %v370 = vunpack.c.l.b16 %v263
        %v371 = vunpack.c.h.b16 %v263
        %v372 = vunpack.c.l.b16 %v264
        %v373 = vunpack.c.h.b16 %v264
        %v374 = vunpack.c.l.b16 %v265
        %v375 = vunpack.c.h.b16 %v265
        %v376 = vunpack.c.l.b16 %v266
        %v377 = vunpack.c.h.b16 %v266
        %v378 = vunpack.c.l.b16 %v267
        %v379 = vunpack.c.h.b16 %v267
        %v380 = vunpack.c.l.b16 %v268
        %v381 = vunpack.c.h.b16 %v268
        %v382 = vunpack.c.l.b16 %v269
        %v383 = vunpack.c.h.b16 %v269
        %v384 = vunpack.c.l.b16 %v270
        %v385 = vunpack.c.h.b16 %v270
        %v386 = vunpack.c.l.b16 %v271
        %v387 = vunpack.c.h.b16 %v271
        %v388 = vunpack.c.l.b16 %v272
        %v389 = vunpack.c.h.b16 %v272
        %v390 = vunpack.c.l.b16 %v273
        %v391 = vunpack.c.h.b16 %v273
        %v392 = vunpack.c.l.b16 %v274
        %v393 = vunpack.c.h.b16 %v274
        %v394 = vunpack.c.l.b16 %v275
        %v395 = vunpack.c.h.b16 %v275
        %v396 = vunpack.c.l.b16 %v276
        %v397 = vunpack.c.h.b16 %v276
        %v398 = vunpack.c.l.b16 %v277
        %v399 = vunpack.c.h.b16 %v277
        %v400 = vunpack.c.l.b16 %v278
        %v401 = vunpack.c.h.b16 %v278
        %v402 = vunpack.c.l.b16 %v279
        %v403 = vunpack.c.h.b16 %v279
        %v404 = vunpack.c.l.b16 %v280
        %v405 = vunpack.c.h.b16 %v280
        %v406 = vunpack.c.l.b16 %v281
        %v407 = vunpack.c.h.b16 %v281
        %v408 = vunpack.c.l.b16 %v282
        %v409 = vunpack.c.h.b16 %v282
        %v410 = vunpack.c.l.b16 %v283
        %v411 = vunpack.c.h.b16 %v283
        %v412 = vunpack.c.l.b16 %v284
        %v413 = vunpack.c.h.b16 %v284
        %v414 = vunpack.c.l.b16 %v285
        %v415 = vunpack.c.h.b16 %v285
        %v416 = vunpack.c.l.b16 %v286
        %v417 = vunpack.c.h.b16 %v286
        %v418 = vunpack.c.l.b16 %v287
        %v419 = vunpack.c.h.b16 %v287
        %v420 = vunpack.c.l.b16 %v288
        %v421 = vunpack.c.h.b16 %v288
        %v422 = vunpack.c.l.b16 %v289
        %v423 = vunpack.c.h.b16 %v289
        %v424 = vunpack.c.l.b16 %v290
        %v425 = vunpack.c.h.b16 %v290
        %v426 = vunpack.c.l.b16 %v291
        %v427 = vunpack.c.h.b16 %v291
        %v428 = vunpack.c.l.b16 %v292
        %v429 = vunpack.c.h.b16 %v292
        %v430 = vunpack.c.l.b16 %v293
        %v431 = vunpack.c.h.b16 %v293
        %v432 = vunpack.c.l.b16 %v294
        %v433 = vunpack.c.h.b16 %v294
        %v434 = vunpack.c.l.b16 %v295
        %v435 = vunpack.c.h.b16 %v295
        %v436 = vunpack.c.l.b16 %v296
        %v437 = vunpack.c.h.b16 %v296
        %v438 = vunpack.c.l.b16 %v297
        %v439 = vunpack.c.h.b16 %v297
        %v440 = vpack.c.b16 %v376, %v368
        %v441 = vpack.c.b16 %v377, %v369
        %v442 = vpack.c.b16 %v378, %v370
        %v443 = vpack.c.b16 %v379, %v371
        %v444 = vpack.c.b16 %v380, %v372
        %v445 = vpack.c.b16 %v381, %v373
        %v446 = vpack.c.b16 %v382, %v374
        %v447 = vpack.c.b16 %v383, %v375
        %v448 = vpack.c.b16 %v392, %v384
        %v449 = vpack.c.b16 %v393, %v385
        %v450 = vpack.c.b16 %v394, %v386
        %v451 = vpack.c.b16 %v395, %v387
        %v452 = vpack.c.b16 %v396, %v388
        %v453 = vpack.c.b16 %v397, %v389
        %v454 = vpack.c.b16 %v398, %v390
        %v455 = vpack.c.b16 %v399, %v391
        %v456 = vpack.c.b16 %v408, %v400
        %v457 = vpack.c.b16 %v409, %v401
        %v458 = vpack.c.b16 %v410, %v402
        %v459 = vpack.c.b16 %v411, %v403
        %v460 = vpack.c.b16 %v412, %v404
        %v461 = vpack.c.b16 %v413, %v405
        %v462 = vpack.c.b16 %v414, %v406
        %v463 = vpack.c.b16 %v415, %v407
        %v464 = vpack.c.b16 %v424, %v416
        %v465 = vpack.c.b16 %v425, %v417
        %v466 = vpack.c.b16 %v426, %v418
        %v467 = vpack.c.b16 %v427, %v419
        %v468 = vpack.c.b16 %v428, %v420
        %v469 = vpack.c.b16 %v429, %v421
        %v470 = vpack.c.b16 %v430, %v422
        %v471 = vpack.c.b16 %v431, %v423
        %v472 = vpack.c.b16 %v432, %v432
        %v473 = vpack.c.b16 %v433, %v433
        %v474 = vpack.c.b16 %v434, %v434
        %v475 = vpack.c.b16 %v435, %v435
        %v476 = vpack.c.b16 %v436, %v436
        %v477 = vpack.c.b16 %v437, %v437
        %v478 = vpack.c.b16 %v438, %v438
        %v479 = vpack.c.b16 %v439, %v439
        %vm512 = vcmask 588800
        %v514 = vsel %vm512, %v330, 0
        %v517 = vsel %vm512, %v331, 0
        %vm519 = vcmask 1043456
        %v521 = vsel %vm519, %v472, 0
        %v524 = vsel %vm519, %v473, 0
        %v527 = vsel %vm519, %v474, 0
        %v530 = vsel %vm519, %v475, 0
        %v533 = vsel %vm519, %v476, 0
        %v536 = vsel %vm519, %v477, 0
        %v539 = vsel %vm519, %v478, 0
        %v542 = vsel %vm519, %v479, 0
        %544 = vmatprep.subr.bf16.mxu0 %v441
        %545 = vmatpush1.bf16.msra.mxu0 %v440
        %546 = vmatprep.subr.bf16.mxu0 %v449
        %547 = vmatpush1.bf16.msra.mxu0 %v448
        %548 = vmatprep.subr.bf16.mxu0 %v457
        %549 = vmatpush1.bf16.msra.mxu0 %v456
        %550 = vmatprep.subr.bf16.mxu0 %v465
        %551 = vmatpush1.bf16.msra.mxu0 %v464
        %552 = vmatprep.subr.bf16.mxu0 %v524
        %553 = vmatpush1.bf16.msra.mxu0 %v521
        %554 = vmatprep.subr.bf16.mxu0 0
        %555 = vmatpush1.bf16.msra.mxu0 0
        %556 = vmatprep.subr.bf16.mxu0 0
        %557 = vmatpush1.bf16.msra.mxu0 0
        %558 = vmatprep.subr.bf16.mxu0 0
        %559 = vmatpush1.bf16.msra.mxu0 0
        %560 = vmatprep.subr.bf16.mxu0 0
        %561 = vmatpush1.bf16.msra.mxu0 0
        %562 = vmatprep.subr.bf16.mxu0 0
        %563 = vmatpush1.bf16.msra.mxu0 0
        %564 = vmatprep.subr.bf16.mxu0 0
        %565 = vmatpush1.bf16.msra.mxu0 0
        %566 = vmatprep.subr.bf16.mxu0 0
        %567 = vmatpush1.bf16.msra.mxu0 0
        %568 = vmatprep.subr.bf16.mxu0 0
        %569 = vmatpush1.bf16.msra.mxu0 0
        %570 = vmatprep.subr.bf16.mxu0 0
        %571 = vmatpush1.bf16.msra.mxu0 0
        %572 = vmatprep.subr.bf16.mxu0 0
        %573 = vmatpush1.bf16.msra.mxu0 0
        %574 = vmatprep.subr.bf16.mxu0 0
        %575 = vmatpush1.bf16.msra.mxu0 0
        %576 = vmatprep.mubr.bf16.mxu0 0
        %577 = vmatmul.mubr.bf16.gmra.mrb[0].mxu0 %v514
        %v578 = vpop.f32.mrb[0].mxu0
        %v579 = vadd.f32 %v305, %v578
        %v580 = vpop.f32.mrb[0].mxu0
        %v581 = vadd.f32 %v305, %v580
        %v582 = vpop.f32.mrb[0].mxu0
        %v583 = vadd.f32 %v310, %v582
        %v584 = vpop.f32.mrb[0].mxu0
        %v585 = vadd.f32 %v310, %v584
        %586 = vmatprep.mubr.bf16.mxu0 0
        %587 = vmatmul.mubr.bf16.gmra.mrb[0].mxu0 %v517
        %v588 = vpop.f32.mrb[0].mxu0
        %v589 = vadd.f32 %v315, %v588
        %v590 = vpop.f32.mrb[0].mxu0
        %v591 = vadd.f32 %v315, %v590
        %v592 = vpop.f32.mrb[0].mxu0
        %v593 = vadd.f32 %v320, %v592
        %v594 = vpop.f32.mrb[0].mxu0
        %v595 = vadd.f32 %v320, %v594
        %596 = vdwg.mxu0
        %597 = vmatprep.subr.bf16.mxu0 %v443
        %598 = vmatpush1.bf16.msra.mxu0 %v442
        %599 = vmatprep.subr.bf16.mxu0 %v451
        %600 = vmatpush1.bf16.msra.mxu0 %v450
        %601 = vmatprep.subr.bf16.mxu0 %v459
        %602 = vmatpush1.bf16.msra.mxu0 %v458
        %603 = vmatprep.subr.bf16.mxu0 %v467
        %604 = vmatpush1.bf16.msra.mxu0 %v466
        %605 = vmatprep.subr.bf16.mxu0 %v530
        %606 = vmatpush1.bf16.msra.mxu0 %v527
        %607 = vmatprep.subr.bf16.mxu0 0
        %608 = vmatpush1.bf16.msra.mxu0 0
        %609 = vmatprep.subr.bf16.mxu0 0
        %610 = vmatpush1.bf16.msra.mxu0 0
        %611 = vmatprep.subr.bf16.mxu0 0
        %612 = vmatpush1.bf16.msra.mxu0 0
        %613 = vmatprep.subr.bf16.mxu0 0
        %614 = vmatpush1.bf16.msra.mxu0 0
        %615 = vmatprep.subr.bf16.mxu0 0
        %616 = vmatpush1.bf16.msra.mxu0 0
        %617 = vmatprep.subr.bf16.mxu0 0
        %618 = vmatpush1.bf16.msra.mxu0 0
        %619 = vmatprep.subr.bf16.mxu0 0
        %620 = vmatpush1.bf16.msra.mxu0 0
        %621 = vmatprep.subr.bf16.mxu0 0
        %622 = vmatpush1.bf16.msra.mxu0 0
        %623 = vmatprep.subr.bf16.mxu0 0
        %624 = vmatpush1.bf16.msra.mxu0 0
        %625 = vmatprep.subr.bf16.mxu0 0
        %626 = vmatpush1.bf16.msra.mxu0 0
        %627 = vmatprep.subr.bf16.mxu0 0
        %628 = vmatpush1.bf16.msra.mxu0 0
        %629 = vmatprep.mubr.bf16.mxu0 0
        %630 = vmatmul.mubr.bf16.gmra.mrb[0].mxu0 %v514
        %v631 = vpop.f32.mrb[0].mxu0
        %v632 = vadd.f32 %v305, %v631
        %v633 = vpop.f32.mrb[0].mxu0
        %v634 = vadd.f32 %v305, %v633
        %v635 = vpop.f32.mrb[0].mxu0
        %v636 = vadd.f32 %v310, %v635
        %v637 = vpop.f32.mrb[0].mxu0
        %v638 = vadd.f32 %v310, %v637
        %639 = vmatprep.mubr.bf16.mxu0 0
        %640 = vmatmul.mubr.bf16.gmra.mrb[0].mxu0 %v517
        %v641 = vpop.f32.mrb[0].mxu0
        %v642 = vadd.f32 %v315, %v641
        %v643 = vpop.f32.mrb[0].mxu0
        %v644 = vadd.f32 %v315, %v643
        %v645 = vpop.f32.mrb[0].mxu0
        %v646 = vadd.f32 %v320, %v645
        %v647 = vpop.f32.mrb[0].mxu0
        %v648 = vadd.f32 %v320, %v647
        %649 = vdwg.mxu0
        %650 = vmatprep.subr.bf16.mxu0 %v445
        %651 = vmatpush1.bf16.msra.mxu0 %v444
        %652 = vmatprep.subr.bf16.mxu0 %v453
        %653 = vmatpush1.bf16.msra.mxu0 %v452
        %654 = vmatprep.subr.bf16.mxu0 %v461
        %655 = vmatpush1.bf16.msra.mxu0 %v460
        %656 = vmatprep.subr.bf16.mxu0 %v469
        %657 = vmatpush1.bf16.msra.mxu0 %v468
        %658 = vmatprep.subr.bf16.mxu0 %v536
        %659 = vmatpush1.bf16.msra.mxu0 %v533
        %660 = vmatprep.subr.bf16.mxu0 0
        %661 = vmatpush1.bf16.msra.mxu0 0
        %662 = vmatprep.subr.bf16.mxu0 0
        %663 = vmatpush1.bf16.msra.mxu0 0
        %664 = vmatprep.subr.bf16.mxu0 0
        %665 = vmatpush1.bf16.msra.mxu0 0
        %666 = vmatprep.subr.bf16.mxu0 0
        %667 = vmatpush1.bf16.msra.mxu0 0
        %668 = vmatprep.subr.bf16.mxu0 0
        %669 = vmatpush1.bf16.msra.mxu0 0
        %670 = vmatprep.subr.bf16.mxu0 0
        %671 = vmatpush1.bf16.msra.mxu0 0
        %672 = vmatprep.subr.bf16.mxu0 0
        %673 = vmatpush1.bf16.msra.mxu0 0
        %674 = vmatprep.subr.bf16.mxu0 0
        %675 = vmatpush1.bf16.msra.mxu0 0
        %676 = vmatprep.subr.bf16.mxu0 0
        %677 = vmatpush1.bf16.msra.mxu0 0
        %678 = vmatprep.subr.bf16.mxu0 0
        %679 = vmatpush1.bf16.msra.mxu0 0
        %680 = vmatprep.subr.bf16.mxu0 0
        %681 = vmatpush1.bf16.msra.mxu0 0
        %682 = vmatprep.mubr.bf16.mxu0 0
        %683 = vmatmul.mubr.bf16.gmra.mrb[0].mxu0 %v514
        %v684 = vpop.f32.mrb[0].mxu0
        %v685 = vadd.f32 %v305, %v684
        %v686 = vpop.f32.mrb[0].mxu0
        %v687 = vadd.f32 %v305, %v686
        %v688 = vpop.f32.mrb[0].mxu0
        %v689 = vadd.f32 %v310, %v688
        %v690 = vpop.f32.mrb[0].mxu0
        %v691 = vadd.f32 %v310, %v690
        %692 = vmatprep.mubr.bf16.mxu0 0
        %693 = vmatmul.mubr.bf16.gmra.mrb[0].mxu0 %v517
        %v694 = vpop.f32.mrb[0].mxu0
        %v695 = vadd.f32 %v315, %v694
        %v696 = vpop.f32.mrb[0].mxu0
        %v697 = vadd.f32 %v315, %v696
        %v698 = vpop.f32.mrb[0].mxu0
        %v699 = vadd.f32 %v320, %v698
        %v700 = vpop.f32.mrb[0].mxu0
        %v701 = vadd.f32 %v320, %v700
        %702 = vdwg.mxu0
        %703 = vmatprep.subr.bf16.mxu0 %v447
        %704 = vmatpush1.bf16.msra.mxu0 %v446
        %705 = vmatprep.subr.bf16.mxu0 %v455
        %706 = vmatpush1.bf16.msra.mxu0 %v454
        %707 = vmatprep.subr.bf16.mxu0 %v463
        %708 = vmatpush1.bf16.msra.mxu0 %v462
        %709 = vmatprep.subr.bf16.mxu0 %v471
        %710 = vmatpush1.bf16.msra.mxu0 %v470
        %711 = vmatprep.subr.bf16.mxu0 %v542
        %712 = vmatpush1.bf16.msra.mxu0 %v539
        %713 = vmatprep.subr.bf16.mxu0 0
        %714 = vmatpush1.bf16.msra.mxu0 0
        %715 = vmatprep.subr.bf16.mxu0 0
        %716 = vmatpush1.bf16.msra.mxu0 0
        %717 = vmatprep.subr.bf16.mxu0 0
        %718 = vmatpush1.bf16.msra.mxu0 0
        %719 = vmatprep.subr.bf16.mxu0 0
        %720 = vmatpush1.bf16.msra.mxu0 0
        %721 = vmatprep.subr.bf16.mxu0 0
        %722 = vmatpush1.bf16.msra.mxu0 0
        %723 = vmatprep.subr.bf16.mxu0 0
        %724 = vmatpush1.bf16.msra.mxu0 0
        %725 = vmatprep.subr.bf16.mxu0 0
        %726 = vmatpush1.bf16.msra.mxu0 0
        %727 = vmatprep.subr.bf16.mxu0 0
        %728 = vmatpush1.bf16.msra.mxu0 0
        %729 = vmatprep.subr.bf16.mxu0 0
        %730 = vmatpush1.bf16.msra.mxu0 0
        %731 = vmatprep.subr.bf16.mxu0 0
        %732 = vmatpush1.bf16.msra.mxu0 0
        %733 = vmatprep.subr.bf16.mxu0 0
        %734 = vmatpush1.bf16.msra.mxu0 0
        %735 = vmatprep.mubr.bf16.mxu0 0
        %736 = vmatmul.mubr.bf16.gmra.mrb[0].mxu0 %v514
        %v737 = vpop.f32.mrb[0].mxu0
        %v738 = vadd.f32 %v305, %v737
        %v739 = vpop.f32.mrb[0].mxu0
        %v740 = vadd.f32 %v305, %v739
        %v741 = vpop.f32.mrb[0].mxu0
        %v742 = vadd.f32 %v310, %v741
        %v743 = vpop.f32.mrb[0].mxu0
        %v744 = vadd.f32 %v310, %v743
        %745 = vmatprep.mubr.bf16.mxu0 0
        %746 = vmatmul.mubr.bf16.gmra.mrb[0].mxu0 %v517
        %v747 = vpop.f32.mrb[0].mxu0
        %v748 = vadd.f32 %v315, %v747
        %v749 = vpop.f32.mrb[0].mxu0
        %v750 = vadd.f32 %v315, %v749
        %v751 = vpop.f32.mrb[0].mxu0
        %v752 = vadd.f32 %v320, %v751
        %v753 = vpop.f32.mrb[0].mxu0
        %v754 = vadd.f32 %v320, %v753
        %755 = vdwg.mxu0
        %v756 = vxor.u32 %v589, 2147483648
        %v757 = vxor.u32 %v591, 2147483648
        %v758 = vxor.u32 %v642, 2147483648
        %v759 = vxor.u32 %v644, 2147483648
        %v760 = vxor.u32 %v695, 2147483648
        %v761 = vxor.u32 %v697, 2147483648
        %v762 = vxor.u32 %v748, 2147483648
        %v763 = vxor.u32 %v750, 2147483648
        %v764 = vxor.u32 %v593, 2147483648
        %v765 = vxor.u32 %v595, 2147483648
        %v766 = vxor.u32 %v646, 2147483648
        %v767 = vxor.u32 %v648, 2147483648
        %v768 = vxor.u32 %v699, 2147483648
        %v769 = vxor.u32 %v701, 2147483648
        %v770 = vxor.u32 %v752, 2147483648
        %v771 = vxor.u32 %v754, 2147483648
        %v772 = vmul.f32 %v756, 1.442695
        %v773 = vpow.pop %v772
        %v774 = vmul.f32 %v757, 1.442695
        %v775 = vpow.pop %v774
        %v776 = vmul.f32 %v758, 1.442695
        %v777 = vpow.pop %v776
        %v778 = vmul.f32 %v759, 1.442695
        %v779 = vpow.pop %v778
        %v780 = vmul.f32 %v760, 1.442695
        %v781 = vpow.pop %v780
        %v782 = vmul.f32 %v761, 1.442695
        %v783 = vpow.pop %v782
        %v784 = vmul.f32 %v762, 1.442695
        %v785 = vpow.pop %v784
        %v786 = vmul.f32 %v763, 1.442695
        %v787 = vpow.pop %v786
        %v788 = vmul.f32 %v764, 1.442695
        %v789 = vpow.pop %v788
        %v790 = vmul.f32 %v765, 1.442695
        %v791 = vpow.pop %v790
        %v792 = vmul.f32 %v766, 1.442695
        %v793 = vpow.pop %v792
        %v794 = vmul.f32 %v767, 1.442695
        %v795 = vpow.pop %v794
        %v796 = vmul.f32 %v768, 1.442695
        %v797 = vpow.pop %v796
        %v798 = vmul.f32 %v769, 1.442695
        %v799 = vpow.pop %v798
        %v800 = vmul.f32 %v770, 1.442695
        %v801 = vpow.pop %v800
        %v802 = vmul.f32 %v771, 1.442695
        %v803 = vpow.pop %v802
        %v804 = vadd.f32 %v773, 1.0
        %v805 = vadd.f32 %v775, 1.0
        %v806 = vadd.f32 %v777, 1.0
        %v807 = vadd.f32 %v779, 1.0
        %v808 = vadd.f32 %v781, 1.0
        %v809 = vadd.f32 %v783, 1.0
        %v810 = vadd.f32 %v785, 1.0
        %v811 = vadd.f32 %v787, 1.0
        %v812 = vadd.f32 %v789, 1.0
        %v813 = vadd.f32 %v791, 1.0
        %v814 = vadd.f32 %v793, 1.0
        %v815 = vadd.f32 %v795, 1.0
        %v816 = vadd.f32 %v797, 1.0
        %v817 = vadd.f32 %v799, 1.0
        %v818 = vadd.f32 %v801, 1.0
        %v819 = vadd.f32 %v803, 1.0
        %v820 = vrcp.pop %v804
        %v821 = vmul.f32 1.0, %v820
        %v822 = vrcp.pop %v805
        %v823 = vmul.f32 1.0, %v822
        %v824 = vrcp.pop %v806
        %v825 = vmul.f32 1.0, %v824
        %v826 = vrcp.pop %v807
        %v827 = vmul.f32 1.0, %v826
        %v828 = vrcp.pop %v808
        %v829 = vmul.f32 1.0, %v828
        %v830 = vrcp.pop %v809
        %v831 = vmul.f32 1.0, %v830
        %v832 = vrcp.pop %v810
        %v833 = vmul.f32 1.0, %v832
        %v834 = vrcp.pop %v811
        %v835 = vmul.f32 1.0, %v834
        %v836 = vrcp.pop %v812
        %v837 = vmul.f32 1.0, %v836
        %v838 = vrcp.pop %v813
        %v839 = vmul.f32 1.0, %v838
        %v840 = vrcp.pop %v814
        %v841 = vmul.f32 1.0, %v840
        %v842 = vrcp.pop %v815
        %v843 = vmul.f32 1.0, %v842
        %v844 = vrcp.pop %v816
        %v845 = vmul.f32 1.0, %v844
        %v846 = vrcp.pop %v817
        %v847 = vmul.f32 1.0, %v846
        %v848 = vrcp.pop %v818
        %v849 = vmul.f32 1.0, %v848
        %v850 = vrcp.pop %v819
        %v851 = vmul.f32 1.0, %v850
        %v852 = vmul.f32 %v579, %v821
        %v853 = vmul.f32 %v581, %v823
        %v854 = vmul.f32 %v632, %v825
        %v855 = vmul.f32 %v634, %v827
        %v856 = vmul.f32 %v685, %v829
        %v857 = vmul.f32 %v687, %v831
        %v858 = vmul.f32 %v738, %v833
        %v859 = vmul.f32 %v740, %v835
        %v860 = vmul.f32 %v583, %v837
        %v861 = vmul.f32 %v585, %v839
        %v862 = vmul.f32 %v636, %v841
        %v863 = vmul.f32 %v638, %v843
        %v864 = vmul.f32 %v689, %v845
        %v865 = vmul.f32 %v691, %v847
        %v866 = vmul.f32 %v742, %v849
        %v867 = vmul.f32 %v744, %v851
        %868 = vst [vmem:[%s254] sm:$0xff] %v852
        %869 = vst [vmem:[%s254 + $0x8] sm:$0xff] %v853
        %870 = vst [vmem:[%s254 + $0x10] sm:$0xff] %v854
        %871 = vst [vmem:[%s254 + $0x18] sm:$0xff] %v855
        %872 = vst [vmem:[%s254 + $0x20] sm:$0xff] %v856
        %873 = vst [vmem:[%s254 + $0x28] sm:$0xff] %v857
        %874 = vst [vmem:[%s254 + $0x30] sm:$0xff] %v858
        %875 = vst [vmem:[%s254 + $0x38] sm:$0xff] %v859
        %876 = vst [vmem:[%s254 + $0x40] sm:$0xff] %v860
        %877 = vst [vmem:[%s254 + $0x48] sm:$0xff] %v861
        %878 = vst [vmem:[%s254 + $0x50] sm:$0xff] %v862
        %879 = vst [vmem:[%s254 + $0x58] sm:$0xff] %v863
        %880 = vst [vmem:[%s254 + $0x60] sm:$0xff] %v864
        %881 = vst [vmem:[%s254 + $0x68] sm:$0xff] %v865
        %882 = vst [vmem:[%s254 + $0x70] sm:$0xff] %v866
        %883 = vst [vmem:[%s254 + $0x78] sm:$0xff] %v867
        %s884 = sand.u32 %s90, 1
        %s885 = sand.u32 %s90, 1
        %s886 = smul.addr %s885, 128
        %s887 = scalar_lea.vmem [#allocation3], %s886
        // Predicated region
        $region56: #{init_stage_g.9} parent=50 // pred_check
          %p888 = pneg %p100
        $region57: #{init_stage_g.9} parent=50 // pred_check_branch
          %890 = sbr.rel (%p888) target = $region59
        $region58: #{init_stage_g.9} parent=50 // pred_region
          %s891 = smul.u32 8, %s14
          %s892 = smul.addr %s891, 8
          %s893 = scalar_lea.vmem %s3, %s892
          // Predicated region
          $region60: #{init_stage_g.9} parent=58 // pred_check
            _
          $region61: #{init_stage_g.9} parent=58 // pred_check_branch
            %895 = sbr.rel (0) target = $region63
          $region62: #{init_stage_g.9} parent=58 // pred_region
            // Predicated region
            $region64: #{init_stage_g.9} parent=62 // pred_check
              _
            $region65: #{init_stage_g.9} parent=62 // pred_check_branch
              %897 = sbr.rel (0) target = $region67
            $region66: #{init_stage_g.9} parent=62 // pred_region
              loop: start=0, step=1, limit=1
              $region68: #{init_stage_g.9} parent=66 // loop_pre_header
                _
              $region69: #{init_stage_g.9} parent=66 // loop_header
                %s899 = sphi 0, %s903
                %p900 = scmp.ge.s32.totalorder %s899, 1
                %s904 = sphi %s887, %s887
                %s905 = sphi %s893, %s893
              $region70: #{init_stage_g.9} parent=66 // loop_header_branch
                %902 = sbr.rel (%p900) target = $region74
              $region71: #{init_stage_g.9} parent=66 // loop_body
                %v906 = vld [vmem:[%s904] sm:$0xff]
                %907 = vst [vmem:[%s905] sm:$0xff] %v906
                %v908 = vld [vmem:[%s904 + $0x8] sm:$0xff]
                %909 = vst [vmem:[%s905 + $0x8] sm:$0xff] %v908
                %v910 = vld [vmem:[%s904 + $0x10] sm:$0xff]
                %911 = vst [vmem:[%s905 + $0x10] sm:$0xff] %v910
                %v912 = vld [vmem:[%s904 + $0x18] sm:$0xff]
                %913 = vst [vmem:[%s905 + $0x18] sm:$0xff] %v912
                %v914 = vld [vmem:[%s904 + $0x20] sm:$0xff]
                %915 = vst [vmem:[%s905 + $0x20] sm:$0xff] %v914
                %v916 = vld [vmem:[%s904 + $0x28] sm:$0xff]
                %917 = vst [vmem:[%s905 + $0x28] sm:$0xff] %v916
                %v918 = vld [vmem:[%s904 + $0x30] sm:$0xff]
                %919 = vst [vmem:[%s905 + $0x30] sm:$0xff] %v918
                %v920 = vld [vmem:[%s904 + $0x38] sm:$0xff]
                %921 = vst [vmem:[%s905 + $0x38] sm:$0xff] %v920
                %v922 = vld [vmem:[%s904 + $0x40] sm:$0xff]
                %923 = vst [vmem:[%s905 + $0x80] sm:$0xff] %v922
                %v924 = vld [vmem:[%s904 + $0x48] sm:$0xff]
                %925 = vst [vmem:[%s905 + $0x88] sm:$0xff] %v924
                %v926 = vld [vmem:[%s904 + $0x50] sm:$0xff]
                %927 = vst [vmem:[%s905 + $0x90] sm:$0xff] %v926
                %v928 = vld [vmem:[%s904 + $0x58] sm:$0xff]
                %929 = vst [vmem:[%s905 + $0x98] sm:$0xff] %v928
                %v930 = vld [vmem:[%s904 + $0x60] sm:$0xff]
                %931 = vst [vmem:[%s905 + $0xa0] sm:$0xff] %v930
                %v932 = vld [vmem:[%s904 + $0x68] sm:$0xff]
                %933 = vst [vmem:[%s905 + $0xa8] sm:$0xff] %v932
                %v934 = vld [vmem:[%s904 + $0x70] sm:$0xff]
                %935 = vst [vmem:[%s905 + $0xb0] sm:$0xff] %v934
                %v936 = vld [vmem:[%s904 + $0x78] sm:$0xff]
                %937 = vst [vmem:[%s905 + $0xb8] sm:$0xff] %v936
              $region72: #{init_stage_g.9} parent=66 // loop_footer
                %s903 = sadd.s32 1, %s899
              $region73: #{init_stage_g.9} parent=66 // loop_footer_branch
                %898 = sbr.rel target = $region69
              $region74: #{init_stage_g.9} parent=66 // loop_exit
                _
            $region67: #{init_stage_g.9} parent=62 // pred_fallthru
              _
            // Predicated region
            $region75: #{init_stage_g.9} parent=62 // pred_check
              _
            $region76: #{init_stage_g.9} parent=62 // pred_check_branch
              %939 = sbr.rel target = $region78
            $region77: #{init_stage_g.9} parent=62 // pred_region
              _
            $region78: #{init_stage_g.9} parent=62 // pred_fallthru
              _
          $region63: #{init_stage_g.9} parent=58 // pred_fallthru
            _
          %940 = vnop
        $region59: #{init_stage_g.9} parent=50 // pred_fallthru
          _
      $region51: #{init_stage_g.9} parent=5 // pred_fallthru
        _
      %p941 = scmp.le.s32.totalorder 2, %s9
      // Predicated region
      $region79: #{init_stage_g.9} parent=5 // pred_check
        %p942 = pneg %p941
      $region80: #{init_stage_g.9} parent=5 // pred_check_branch
        %944 = sbr.rel (%p942) target = $region82
      $region81: #{init_stage_g.9} parent=5 // pred_region
        %s945 = ssub.s32 %s9, 2
        // Predicated region
        $region83: #{init_stage_g.9} parent=81 // pred_check
          %p946 = pneg %p106
        $region84: #{init_stage_g.9} parent=81 // pred_check_branch
          %948 = sbr.rel (%p946) target = $region86
        $region85: #{init_stage_g.9} parent=81 // pred_region
          %s949 = sand.u32 %s91, 1
          %s950 = sand.u32 %s91, 1
          %s951 = smul.addr %s950, 128
          %s952 = scalar_lea.vmem [#allocation3], %s951
        $region86: #{init_stage_g.9} parent=81 // pred_fallthru
          _
      $region82: #{init_stage_g.9} parent=5 // pred_fallthru
        _
    $region6: #{init_stage_g.9} parent=1 // loop_footer
      %s13 = sadd.s32 1, %s9
    $region7: #{init_stage_g.9} parent=1 // loop_footer_branch
      %8 = sbr.rel target = $region3
    $region8: #{init_stage_g.9} parent=1 // loop_exit
      _

</llo_original>
